<compile_context>
chip_gen: v5e
topology: v5e:2x2
jax: 0.10.0
libtpu: 0.0.40
codegen_flags: <defaults>
</compile_context>

<pallas_src>
import jax
import jax.numpy as jnp
from jax.experimental import pallas as pl
from jax.experimental.pallas import tpu as pltpu

IN_DIM = 1200
HID_DIM = 400
LAT_DIM = 20


def _cdiv(a, b):
    return -(-a // b)


def _round_up(n, m):
    return ((n + m - 1) // m) * m


def _choose_tiling(B, tb):
    """Balanced batch tiling.

    Returns (TB, Bp, n_tiles) with Bp = n_tiles * TB >= B and TB a multiple
    of 8 (16 when blocks are partial, to match bf16 sublane packing).
    Splits into >= 2 tiles when that costs (almost) no padding so that v7x's
    second TensorCore gets work; single-TC chips (v5e/v6e) only pay one extra
    ~0.35us grid step for it.
    """
    n_tiles = max(1, _cdiv(B, tb))
    if n_tiles == 1 and B >= 64:
        two_way = 2 * _round_up(_cdiv(B, 2), 16)
        # only split if padding overhead stays <= ~12.5% (protects v5e/v6e)
        if two_way <= (_round_up(B, 8) * 9) // 8:
            n_tiles = 2
    per = _cdiv(B, n_tiles)
    align = 8 if n_tiles == 1 else 16
    TB = _round_up(per, align)
    Bp = n_tiles * TB
    return TB, Bp, n_tiles


def vae_kernel(x_ref, eps_ref,
               w1_ref, b1_ref,
               wlat_ref, blat_ref,
               w3_ref, b3_ref,
               w4_ref, b4_ref,
               recon_ref, mulv_ref):
    # encode -------------------------------------------------------------
    x_bf = x_ref[...].astype(jnp.bfloat16)                       # (TB, 1200)
    h1 = jnp.dot(x_bf, w1_ref[...],
                 preferred_element_type=jnp.float32) + b1_ref[...]
    h1 = jnp.maximum(h1, 0.0)                                    # (TB, 400) f32

    # fused fc21|fc22 -> (TB, 40): [:, :20] = mu, [:, 20:] = logvar
    mulv = jnp.dot(h1.astype(jnp.bfloat16), wlat_ref[...],
                   preferred_element_type=jnp.float32) + blat_ref[...]
    mu = mulv[:, :LAT_DIM]
    logvar = mulv[:, LAT_DIM:]

    # reparameterize: z = mu + eps * exp(0.5 * logvar)
    z = mu + eps_ref[...] * jnp.exp(0.5 * logvar)                # (TB, 20) f32

    # decode -------------------------------------------------------------
    h3 = jnp.dot(z.astype(jnp.bfloat16), w3_ref[...],
                 preferred_element_type=jnp.float32) + b3_ref[...]
    h3 = jnp.maximum(h3, 0.0)                                    # (TB, 400)

    logits = jnp.dot(h3.astype(jnp.bfloat16), w4_ref[...],
                     preferred_element_type=jnp.float32) + b4_ref[...]

    # sigmoid = 1 / (1 + exp(-x)); exp + approx reciprocal both go to the EUP
    recon = pl.reciprocal(1.0 + jnp.exp(-logits), approx=True)   # (TB, 1200) f32
    recon_ref[...] = recon.astype(jnp.bfloat16)                  # bf16 writeback
    mulv_ref[...] = mulv                                         # (TB, 40) f32


def vae_forward(x, eps, params, *, tb=512):
    """x: (B, 1200) f32, eps: (B, 20) f32.

    Returns (recon_bf16, mu_f32, logvar_f32). recon is bfloat16 to halve the
    dominant HBM output stream; cast outside only if a consumer truly needs f32.
    """
    w1, b1, w21, b21, w22, b22, w3, b3, w4, b4 = params

    # --- pack / quantize params for the kernel ---------------------------
    w1k = w1.astype(jnp.bfloat16)
    w3k = w3.astype(jnp.bfloat16)
    w4k = w4.astype(jnp.bfloat16)
    wlat = jnp.concatenate([w21, w22], axis=1).astype(jnp.bfloat16)   # (400, 40)
    blat = jnp.concatenate([b21, b22], axis=1)                        # (1, 40) f32

    # --- balanced batch tiling -------------------------------------------
    B = x.shape[0]
    TB, Bp, n_tiles = _choose_tiling(B, tb)
    if Bp != B:
        x = jnp.pad(x, ((0, Bp - B), (0, 0)))
        eps = jnp.pad(eps, ((0, Bp - B), (0, 0)))
    grid = (n_tiles,)

    batch_spec = lambda f: pl.BlockSpec((TB, f), lambda i: (i, 0))
    resident = lambda shape: pl.BlockSpec(shape, lambda i: (0, 0))

    # --- advisory cost estimate for XLA's scheduler -----------------------
    mac = IN_DIM * HID_DIM + HID_DIM * 2 * LAT_DIM + LAT_DIM * HID_DIM + HID_DIM * IN_DIM
    weight_bytes = 2 * mac + 4 * (HID_DIM + 2 * LAT_DIM + HID_DIM + IN_DIM)
    cost = pl.CostEstimate(
        flops=2 * Bp * mac,
        transcendentals=Bp * (LAT_DIM + 2 * IN_DIM),
        bytes_accessed=(Bp * IN_DIM * 4           # x in (f32)
                        + Bp * LAT_DIM * 4        # eps in (f32)
                        + Bp * IN_DIM * 2         # recon out (bf16)
                        + Bp * 2 * LAT_DIM * 4    # mu|logvar out (f32)
                        + weight_bytes))

    recon, mulv = pl.pallas_call(
        vae_kernel,
        grid=grid,
        out_shape=(
            jax.ShapeDtypeStruct((Bp, IN_DIM), jnp.bfloat16),      # recon (bf16)
            jax.ShapeDtypeStruct((Bp, 2 * LAT_DIM), jnp.float32),  # mu|logvar slab
        ),
        in_specs=[
            batch_spec(IN_DIM),                    # x
            batch_spec(LAT_DIM),                   # eps
            resident((IN_DIM, HID_DIM)),           # w1 (bf16)
            resident((1, HID_DIM)),                # b1
            resident((HID_DIM, 2 * LAT_DIM)),      # w21|w22 (bf16)
            resident((1, 2 * LAT_DIM)),            # b21|b22
            resident((LAT_DIM, HID_DIM)),          # w3 (bf16)
            resident((1, HID_DIM)),                # b3
            resident((HID_DIM, IN_DIM)),           # w4 (bf16)
            resident((1, IN_DIM)),                 # b4
        ],
        out_specs=(
            batch_spec(IN_DIM),
            batch_spec(2 * LAT_DIM),
        ),
        compiler_params=pltpu.CompilerParams(
            dimension_semantics=("parallel",),
            vmem_limit_bytes=40 * 1024 * 1024),    # safe on v5e/v6e/v7x
        cost_estimate=cost,
    )(x, eps, w1k, b1, wlat, blat, w3k, b3, w4k, b4)

    if Bp != B:
        recon = recon[:B]
        mulv = mulv[:B]
    mu = mulv[:, :LAT_DIM]
    logvar = mulv[:, LAT_DIM:]
    return recon, mu, logvar


def init_params(key):
    """PyTorch nn.Linear-style init: U(-1/sqrt(fan_in), 1/sqrt(fan_in)).
    Weights stored (in, out); biases (1, out). All f32 (master copy)."""
    def linear(k, fan_in, fan_out):
        kw, kb = jax.random.split(k)
        bound = 1.0 / (fan_in ** 0.5)
        w = jax.random.uniform(kw, (fan_in, fan_out), jnp.float32, -bound, bound)
        b = jax.random.uniform(kb, (1, fan_out), jnp.float32, -bound, bound)
        return w, b

    k1, k21, k22, k3, k4 = jax.random.split(key, 5)
    w1, b1 = linear(k1, IN_DIM, HID_DIM)      # fc1
    w21, b21 = linear(k21, HID_DIM, LAT_DIM)  # fc21
    w22, b22 = linear(k22, HID_DIM, LAT_DIM)  # fc22
    w3, b3 = linear(k3, LAT_DIM, HID_DIM)     # fc3
    w4, b4 = linear(k4, HID_DIM, IN_DIM)      # fc4
    return (w1, b1, w21, b21, w22, b22, w3, b3, w4, b4)


def reference_forward(x, eps, params, *, bf16_matmuls=False):
    """Pure-JAX reference. With bf16_matmuls=True, mimics the kernel's
    quantization (bf16 matmul inputs, f32 accumulate / elementwise)."""
    w1, b1, w21, b21, w22, b22, w3, b3, w4, b4 = params

    def mm(a, w):
        if bf16_matmuls:
            a = a.astype(jnp.bfloat16)
            w = w.astype(jnp.bfloat16)
        return jnp.dot(a, w, preferred_element_type=jnp.float32)

    h1 = jnp.maximum(mm(x, w1) + b1, 0.0)
    mu = mm(h1, w21) + b21
    logvar = mm(h1, w22) + b22
    z = mu + eps * jnp.exp(0.5 * logvar)
    h3 = jnp.maximum(mm(z, w3) + b3, 0.0)
    recon = jax.nn.sigmoid(mm(h3, w4) + b4)
    return recon, mu, logvar


if __name__ == "__main__":
    key = jax.random.PRNGKey(0)
    kx, keps, kparams = jax.random.split(key, 3)

    B = 8
    # emulate the PyTorch input that gets `.view(-1, 1200)`-ed
    x_img = jax.random.uniform(kx, (B, 1, 30, 40), jnp.float32)
    x = x_img.reshape(-1, IN_DIM)                              # x.view(-1, 1200)
    eps = jax.random.normal(keps, (B, LAT_DIM), jnp.float32)   # randn_like(std)

    params = init_params(kparams)

    recon, mu, logvar = vae_forward(x, eps, params)
    jax.block_until_ready((recon, mu, logvar))

    assert recon.shape == (B, IN_DIM) and recon.dtype == jnp.bfloat16
    assert mu.shape == (B, LAT_DIM) and logvar.shape == (B, LAT_DIM)

    recon_f32 = recon.astype(jnp.float32)

    # check against a reference with matching bf16 matmul quantization
    # (recon tolerance loosened for bf16 output + approx-reciprocal sigmoid)
    r_q, mu_q, lv_q = reference_forward(x, eps, params, bf16_matmuls=True)
    assert jnp.allclose(recon_f32, r_q, atol=1e-2, rtol=1e-2)
    assert jnp.allclose(mu, mu_q, atol=2e-4, rtol=2e-4)
    assert jnp.allclose(logvar, lv_q, atol=2e-4, rtol=2e-4)

    # loose check against the full-f32 reference (bf16 weight quantization error)
    r_f, mu_f, lv_f = reference_forward(x, eps, params, bf16_matmuls=False)
    assert jnp.allclose(recon_f32, r_f, atol=5e-2, rtol=5e-2)
    assert jnp.allclose(mu, mu_f, atol=5e-2, rtol=5e-2)
    assert jnp.allclose(logvar, lv_f, atol=5e-2, rtol=5e-2)

    print("KERNEL_OK")
</pallas_src>

<mosaic_0001>
module attributes {stable_mosaic.version = 11 : i64} {
  func.func @vae_kernel(%arg0: i32, %arg1: memref<8x1200xf32, #tpu.memory_space<vmem>>, %arg2: memref<8x20xf32, #tpu.memory_space<vmem>>, %arg3: memref<1200x400xbf16, #tpu.memory_space<vmem>>, %arg4: memref<1x400xf32, #tpu.memory_space<vmem>>, %arg5: memref<400x40xbf16, #tpu.memory_space<vmem>>, %arg6: memref<1x40xf32, #tpu.memory_space<vmem>>, %arg7: memref<20x400xbf16, #tpu.memory_space<vmem>>, %arg8: memref<1x400xf32, #tpu.memory_space<vmem>>, %arg9: memref<400x1200xbf16, #tpu.memory_space<vmem>>, %arg10: memref<1x1200xf32, #tpu.memory_space<vmem>>, %arg11: memref<8x1200xbf16, #tpu.memory_space<vmem>>, %arg12: memref<8x40xf32, #tpu.memory_space<vmem>>) attributes {dimension_semantics = [#tpu.dimension_semantics<parallel>], iteration_bounds = array<i64: 1>, scalar_prefetch = 0 : i64, scratch_operands = 0 : i64, tpu.core_type = #tpu.core_type<tc>, window_params = [{transform_indices = @transform_0, window_bounds = array<i64: 8, 1200>}, {transform_indices = @transform_1, window_bounds = array<i64: 8, 20>}, {pipeline_mode = #tpu.pipeline_mode<synchronous>, transform_indices = @transform_2, window_bounds = array<i64: 1200, 400>}, {pipeline_mode = #tpu.pipeline_mode<synchronous>, transform_indices = @transform_3, window_bounds = array<i64: 1, 400>}, {pipeline_mode = #tpu.pipeline_mode<synchronous>, transform_indices = @transform_4, window_bounds = array<i64: 400, 40>}, {pipeline_mode = #tpu.pipeline_mode<synchronous>, transform_indices = @transform_5, window_bounds = array<i64: 1, 40>}, {pipeline_mode = #tpu.pipeline_mode<synchronous>, transform_indices = @transform_6, window_bounds = array<i64: 20, 400>}, {pipeline_mode = #tpu.pipeline_mode<synchronous>, transform_indices = @transform_7, window_bounds = array<i64: 1, 400>}, {pipeline_mode = #tpu.pipeline_mode<synchronous>, transform_indices = @transform_8, window_bounds = array<i64: 400, 1200>}, {pipeline_mode = #tpu.pipeline_mode<synchronous>, transform_indices = @transform_9, window_bounds = array<i64: 1, 1200>}, {transform_indices = @transform_10, window_bounds = array<i64: 8, 1200>}, {transform_indices = @transform_11, window_bounds = array<i64: 8, 40>}]} {
    %c0 = arith.constant 0 : index
    %c0_0 = arith.constant 0 : index
    %0 = vector.load %arg1[%c0, %c0_0] : memref<8x1200xf32, #tpu.memory_space<vmem>>, vector<8x1200xf32>
    %1 = arith.truncf %0 : vector<8x1200xf32> to vector<8x1200xbf16>
    %c0_1 = arith.constant 0 : index
    %c0_2 = arith.constant 0 : index
    %2 = vector.load %arg3[%c0_1, %c0_2] : memref<1200x400xbf16, #tpu.memory_space<vmem>>, vector<1200x400xbf16>
    %cst = arith.constant dense<0.000000e+00> : vector<8x400xf32>
    %3 = tpu.matmul %1, %2, %cst {dimension_numbers = #tpu.dot_dimension_numbers<[1], [0], [0], [1], [0, 0, 1, 1], [], []>} : vector<8x1200xbf16>, vector<1200x400xbf16>, vector<8x400xf32> -> vector<8x400xf32>
    %c0_3 = arith.constant 0 : index
    %c0_4 = arith.constant 0 : index
    %4 = vector.load %arg4[%c0_3, %c0_4] : memref<1x400xf32, #tpu.memory_space<vmem>>, vector<1x400xf32>
    %5 = vector.broadcast %4 : vector<1x400xf32> to vector<8x400xf32>
    %6 = arith.addf %3, %5 : vector<8x400xf32>
    %cst_5 = arith.constant 0.000000e+00 : f32
    %7 = vector.broadcast %cst_5 : f32 to vector<8x400xf32>
    %8 = arith.maximumf %6, %7 : vector<8x400xf32>
    %9 = arith.truncf %8 : vector<8x400xf32> to vector<8x400xbf16>
    %c0_6 = arith.constant 0 : index
    %c0_7 = arith.constant 0 : index
    %10 = vector.load %arg5[%c0_6, %c0_7] : memref<400x40xbf16, #tpu.memory_space<vmem>>, vector<400x40xbf16>
    %cst_8 = arith.constant dense<0.000000e+00> : vector<8x40xf32>
    %11 = tpu.matmul %9, %10, %cst_8 {dimension_numbers = #tpu.dot_dimension_numbers<[1], [0], [0], [1], [0, 0, 1, 1], [], []>} : vector<8x400xbf16>, vector<400x40xbf16>, vector<8x40xf32> -> vector<8x40xf32>
    %c0_9 = arith.constant 0 : index
    %c0_10 = arith.constant 0 : index
    %12 = vector.load %arg6[%c0_9, %c0_10] : memref<1x40xf32, #tpu.memory_space<vmem>>, vector<1x40xf32>
    %13 = vector.broadcast %12 : vector<1x40xf32> to vector<8x40xf32>
    %14 = arith.addf %11, %13 : vector<8x40xf32>
    %15 = vector.extract_strided_slice %14 {offsets = [0, 0], sizes = [8, 20], strides = [1, 1]} : vector<8x40xf32> to vector<8x20xf32>
    %16 = vector.extract_strided_slice %14 {offsets = [0, 20], sizes = [8, 20], strides = [1, 1]} : vector<8x40xf32> to vector<8x20xf32>
    %c0_11 = arith.constant 0 : index
    %c0_12 = arith.constant 0 : index
    %17 = vector.load %arg2[%c0_11, %c0_12] : memref<8x20xf32, #tpu.memory_space<vmem>>, vector<8x20xf32>
    %cst_13 = arith.constant 5.000000e-01 : f32
    %18 = vector.broadcast %cst_13 : f32 to vector<8x20xf32>
    %19 = arith.mulf %18, %16 : vector<8x20xf32>
    %20 = math.exp %19 : vector<8x20xf32>
    %21 = arith.mulf %17, %20 : vector<8x20xf32>
    %22 = arith.addf %15, %21 : vector<8x20xf32>
    %23 = arith.truncf %22 : vector<8x20xf32> to vector<8x20xbf16>
    %c0_14 = arith.constant 0 : index
    %c0_15 = arith.constant 0 : index
    %24 = vector.load %arg7[%c0_14, %c0_15] : memref<20x400xbf16, #tpu.memory_space<vmem>>, vector<20x400xbf16>
    %cst_16 = arith.constant dense<0.000000e+00> : vector<8x400xf32>
    %25 = tpu.matmul %23, %24, %cst_16 {dimension_numbers = #tpu.dot_dimension_numbers<[1], [0], [0], [1], [0, 0, 1, 1], [], []>} : vector<8x20xbf16>, vector<20x400xbf16>, vector<8x400xf32> -> vector<8x400xf32>
    %c0_17 = arith.constant 0 : index
    %c0_18 = arith.constant 0 : index
    %26 = vector.load %arg8[%c0_17, %c0_18] : memref<1x400xf32, #tpu.memory_space<vmem>>, vector<1x400xf32>
    %27 = vector.broadcast %26 : vector<1x400xf32> to vector<8x400xf32>
    %28 = arith.addf %25, %27 : vector<8x400xf32>
    %cst_19 = arith.constant 0.000000e+00 : f32
    %29 = vector.broadcast %cst_19 : f32 to vector<8x400xf32>
    %30 = arith.maximumf %28, %29 : vector<8x400xf32>
    %31 = arith.truncf %30 : vector<8x400xf32> to vector<8x400xbf16>
    %c0_20 = arith.constant 0 : index
    %c0_21 = arith.constant 0 : index
    %32 = vector.load %arg9[%c0_20, %c0_21] : memref<400x1200xbf16, #tpu.memory_space<vmem>>, vector<400x1200xbf16>
    %cst_22 = arith.constant dense<0.000000e+00> : vector<8x1200xf32>
    %33 = tpu.matmul %31, %32, %cst_22 {dimension_numbers = #tpu.dot_dimension_numbers<[1], [0], [0], [1], [0, 0, 1, 1], [], []>} : vector<8x400xbf16>, vector<400x1200xbf16>, vector<8x1200xf32> -> vector<8x1200xf32>
    %c0_23 = arith.constant 0 : index
    %c0_24 = arith.constant 0 : index
    %34 = vector.load %arg10[%c0_23, %c0_24] : memref<1x1200xf32, #tpu.memory_space<vmem>>, vector<1x1200xf32>
    %35 = vector.broadcast %34 : vector<1x1200xf32> to vector<8x1200xf32>
    %36 = arith.addf %33, %35 : vector<8x1200xf32>
    %cst_25 = arith.constant 0.000000e+00 : f32
    %37 = vector.broadcast %cst_25 : f32 to vector<8x1200xf32>
    %38 = arith.subf %37, %36 : vector<8x1200xf32>
    %39 = math.exp %38 : vector<8x1200xf32>
    %cst_26 = arith.constant 1.000000e+00 : f32
    %40 = vector.broadcast %cst_26 : f32 to vector<8x1200xf32>
    %41 = arith.addf %40, %39 : vector<8x1200xf32>
    %42 = tpu.reciprocal %41 {approx = true} : vector<8x1200xf32> -> vector<8x1200xf32>
    %43 = arith.truncf %42 : vector<8x1200xf32> to vector<8x1200xbf16>
    %c0_27 = arith.constant 0 : index
    %c0_28 = arith.constant 0 : index
    %44 = vector.load %arg11[%c0_27, %c0_28] : memref<8x1200xbf16, #tpu.memory_space<vmem>>, vector<8x1200xbf16>
    tpu.vector_store %arg11[%c0_27, %c0_28], %43 {strides = array<i32>} : memref<8x1200xbf16, #tpu.memory_space<vmem>>, vector<8x1200xbf16>,
    %c0_29 = arith.constant 0 : index
    %c0_30 = arith.constant 0 : index
    %45 = vector.load %arg12[%c0_29, %c0_30] : memref<8x40xf32, #tpu.memory_space<vmem>>, vector<8x40xf32>
    tpu.vector_store %arg12[%c0_29, %c0_30], %14 {strides = array<i32>} : memref<8x40xf32, #tpu.memory_space<vmem>>, vector<8x40xf32>,
    return
  }
  func.func @transform_0(%arg0: i32) -> (i32, i32) {
    %c0_i32 = arith.constant 0 : i32
    %c0_i32_0 = arith.constant 0 : i32
    return %arg0, %c0_i32 : i32, i32
  }
  func.func @transform_1(%arg0: i32) -> (i32, i32) {
    %c0_i32 = arith.constant 0 : i32
    %c0_i32_0 = arith.constant 0 : i32
    return %arg0, %c0_i32 : i32, i32
  }
  func.func @transform_2(%arg0: i32) -> (i32, i32) {
    %c0_i32 = arith.constant 0 : i32
    %c0_i32_0 = arith.constant 0 : i32
    %c0_i32_1 = arith.constant 0 : i32
    return %c0_i32, %c0_i32_0 : i32, i32
  }
  func.func @transform_3(%arg0: i32) -> (i32, i32) {
    %c0_i32 = arith.constant 0 : i32
    %c0_i32_0 = arith.constant 0 : i32
    %c0_i32_1 = arith.constant 0 : i32
    return %c0_i32, %c0_i32_0 : i32, i32
  }
  func.func @transform_4(%arg0: i32) -> (i32, i32) {
    %c0_i32 = arith.constant 0 : i32
    %c0_i32_0 = arith.constant 0 : i32
    %c0_i32_1 = arith.constant 0 : i32
    return %c0_i32, %c0_i32_0 : i32, i32
  }
  func.func @transform_5(%arg0: i32) -> (i32, i32) {
    %c0_i32 = arith.constant 0 : i32
    %c0_i32_0 = arith.constant 0 : i32
    %c0_i32_1 = arith.constant 0 : i32
    return %c0_i32, %c0_i32_0 : i32, i32
  }
  func.func @transform_6(%arg0: i32) -> (i32, i32) {
    %c0_i32 = arith.constant 0 : i32
    %c0_i32_0 = arith.constant 0 : i32
    %c0_i32_1 = arith.constant 0 : i32
    return %c0_i32, %c0_i32_0 : i32, i32
  }
  func.func @transform_7(%arg0: i32) -> (i32, i32) {
    %c0_i32 = arith.constant 0 : i32
    %c0_i32_0 = arith.constant 0 : i32
    %c0_i32_1 = arith.constant 0 : i32
    return %c0_i32, %c0_i32_0 : i32, i32
  }
  func.func @transform_8(%arg0: i32) -> (i32, i32) {
    %c0_i32 = arith.constant 0 : i32
    %c0_i32_0 = arith.constant 0 : i32
    %c0_i32_1 = arith.constant 0 : i32
    return %c0_i32, %c0_i32_0 : i32, i32
  }
  func.func @transform_9(%arg0: i32) -> (i32, i32) {
    %c0_i32 = arith.constant 0 : i32
    %c0_i32_0 = arith.constant 0 : i32
    %c0_i32_1 = arith.constant 0 : i32
    return %c0_i32, %c0_i32_0 : i32, i32
  }
  func.func @transform_10(%arg0: i32) -> (i32, i32) {
    %c0_i32 = arith.constant 0 : i32
    %c0_i32_0 = arith.constant 0 : i32
    return %arg0, %c0_i32 : i32, i32
  }
  func.func @transform_11(%arg0: i32) -> (i32, i32) {
    %c0_i32 = arith.constant 0 : i32
    %c0_i32_0 = arith.constant 0 : i32
    return %arg0, %c0_i32 : i32, i32
  }
}

</mosaic_0001>

<llo_original>
// kernel: tpu_custom_call.1
$region0: #{tpu_custom_call.1}
  #allocation0 [shape = 'u32[]', space=smem, size = 0x4, offset = 0x4, fixed_abs, tag = 'smem constant byte address 0x4 - core index']
  #allocation1 [shape = 'u32[72,128]{1,0:T(1,128)}', space=vmem, size = 0x9000, scoped, tag = 'internal scratch']
  %s0 = inlined_call_operand.vmem [shape: f32[8,1200], index: 0, kind: input, shape index: {}]
  %s1 = inlined_call_operand.vmem [shape: f32[8,20], index: 1, kind: input, shape index: {}]
  %s2 = inlined_call_operand.vmem [shape: bf16[1200,400], index: 2, kind: input, shape index: {}]
  %s3 = inlined_call_operand.vmem [shape: f32[1,400], index: 3, kind: input, shape index: {}]
  %s4 = inlined_call_operand.vmem [shape: bf16[400,40], index: 4, kind: input, shape index: {}]
  %s5 = inlined_call_operand.vmem [shape: f32[1,40], index: 5, kind: input, shape index: {}]
  %s6 = inlined_call_operand.vmem [shape: bf16[20,400], index: 6, kind: input, shape index: {}]
  %s7 = inlined_call_operand.vmem [shape: f32[1,400], index: 7, kind: input, shape index: {}]
  %s8 = inlined_call_operand.vmem [shape: bf16[400,1200], index: 8, kind: input, shape index: {}]
  %s9 = inlined_call_operand.vmem [shape: f32[1,1200], index: 9, kind: input, shape index: {}]
  %s10 = inlined_call_operand.hbm [shape: bf16[8,1200], index: 10, kind: output, shape index: {0}]
  %s11 = inlined_call_operand.hbm [shape: f32[8,40], index: 11, kind: output, shape index: {1}]
  %12 = xla_tuple %s10, %s11
  %s13 = sld [smem:[#allocation0]]
  $region58: #{tpu_custom_call.1} parent=0
    _
  %s15 = ssub.s32 1, %s13
  %s16 = scalar_select 0, %s15, %s13
  $region1: #{tpu_custom_call.1} parent=0
    #allocation2 [shape = 'u8[20480]{0}', space=vmem, size = 0x5000, scoped, tag = 'output window, operand 0, single buffered']
    #allocation3 [shape = 's32[1]{0}', space=sflag, size = 0x4, scoped, tag = 'scoped memory for tpu_custom_call.1']
    #allocation4 [shape = 'u8[4096]{0}', space=vmem, size = 0x1000, scoped, tag = 'output window, operand 1, single buffered']
    #allocation5 [shape = 's32[1]{0}', space=sflag, size = 0x4, scoped, tag = 'scoped memory for tpu_custom_call.1']
    %17 = vsyncpa [#allocation3], 0
    %18 = vsyncpa [#allocation5], 0
    // Predicated region
    $region2: #{tpu_custom_call.1} parent=1 // pred_check
      _
    $region3: #{tpu_custom_call.1} parent=1 // pred_check_branch
      %20 = sbr.rel (0) target = $region5
    $region4: #{tpu_custom_call.1} parent=1 // pred_region
      _
    $region5: #{tpu_custom_call.1} parent=1 // pred_fallthru
      _
    // Predicated region
    $region6: #{tpu_custom_call.1} parent=1 // pred_check
      _
    $region7: #{tpu_custom_call.1} parent=1 // pred_check_branch
      %22 = sbr.rel (0) target = $region9
    $region8: #{tpu_custom_call.1} parent=1 // pred_region
      _
    $region9: #{tpu_custom_call.1} parent=1 // pred_fallthru
      _
    // Predicated region
    $region10: #{tpu_custom_call.1} parent=1 // pred_check
      _
    $region11: #{tpu_custom_call.1} parent=1 // pred_check_branch
      %24 = sbr.rel (0) target = $region13
    $region12: #{tpu_custom_call.1} parent=1 // pred_region
      _
    $region13: #{tpu_custom_call.1} parent=1 // pred_fallthru
      _
    // Predicated region
    $region14: #{tpu_custom_call.1} parent=1 // pred_check
      _
    $region15: #{tpu_custom_call.1} parent=1 // pred_check_branch
      %26 = sbr.rel (0) target = $region17
    $region16: #{tpu_custom_call.1} parent=1 // pred_region
      _
    $region17: #{tpu_custom_call.1} parent=1 // pred_fallthru
      _
    // Predicated region
    $region18: #{tpu_custom_call.1} parent=1 // pred_check
      _
    $region19: #{tpu_custom_call.1} parent=1 // pred_check_branch
      %28 = sbr.rel (0) target = $region21
    $region20: #{tpu_custom_call.1} parent=1 // pred_region
      _
    $region21: #{tpu_custom_call.1} parent=1 // pred_fallthru
      _
    // Predicated region
    $region22: #{tpu_custom_call.1} parent=1 // pred_check
      _
    $region23: #{tpu_custom_call.1} parent=1 // pred_check_branch
      %30 = sbr.rel (0) target = $region25
    $region24: #{tpu_custom_call.1} parent=1 // pred_region
      _
    $region25: #{tpu_custom_call.1} parent=1 // pred_fallthru
      _
    // Predicated region
    $region26: #{tpu_custom_call.1} parent=1 // pred_check
      _
    $region27: #{tpu_custom_call.1} parent=1 // pred_check_branch
      %32 = sbr.rel (0) target = $region29
    $region28: #{tpu_custom_call.1} parent=1 // pred_region
      _
    $region29: #{tpu_custom_call.1} parent=1 // pred_fallthru
      _
    // Predicated region
    $region30: #{tpu_custom_call.1} parent=1 // pred_check
      _
    $region31: #{tpu_custom_call.1} parent=1 // pred_check_branch
      %34 = sbr.rel (0) target = $region33
    $region32: #{tpu_custom_call.1} parent=1 // pred_region
      _
    $region33: #{tpu_custom_call.1} parent=1 // pred_fallthru
      _
    // Predicated region
    $region34: #{tpu_custom_call.1} parent=1 // pred_check
      _
    $region35: #{tpu_custom_call.1} parent=1 // pred_check_branch
      %36 = sbr.rel (0) target = $region37
    $region36: #{tpu_custom_call.1} parent=1 // pred_region
      _
    $region37: #{tpu_custom_call.1} parent=1 // pred_fallthru
      _
    // Predicated region
    $region38: #{tpu_custom_call.1} parent=1 // pred_check
      _
    $region39: #{tpu_custom_call.1} parent=1 // pred_check_branch
      %38 = sbr.rel (0) target = $region41
    $region40: #{tpu_custom_call.1} parent=1 // pred_region
      _
    $region41: #{tpu_custom_call.1} parent=1 // pred_fallthru
      _
    %v40 = vld [vmem:[%s0] sm:$0xff]
    %v41 = vld [vmem:[%s0 + $0x8] sm:$0xff]
    %v42 = vld [vmem:[%s0 + $0x10] sm:$0xff]
    %v43 = vld [vmem:[%s0 + $0x18] sm:$0xff]
    %v44 = vld [vmem:[%s0 + $0x20] sm:$0xff]
    %v45 = vld [vmem:[%s0 + $0x28] sm:$0xff]
    %v46 = vld [vmem:[%s0 + $0x30] sm:$0xff]
    %v47 = vld [vmem:[%s0 + $0x38] sm:$0xff]
    %v48 = vld [vmem:[%s0 + $0x40] sm:$0xff]
    %v49 = vld [vmem:[%s0 + $0x48] sm:$0xff]
    %v50 = vpack.c.bf16 %v40, %v40
    %v51 = vpack.c.bf16 %v41, %v41
    %v52 = vpack.c.bf16 %v42, %v42
    %v53 = vpack.c.bf16 %v43, %v43
    %v54 = vpack.c.bf16 %v44, %v44
    %v55 = vpack.c.bf16 %v45, %v45
    %v56 = vpack.c.bf16 %v46, %v46
    %v57 = vpack.c.bf16 %v47, %v47
    %v58 = vpack.c.bf16 %v48, %v48
    %v59 = vpack.c.bf16 %v49, %v49
    %v60 = vld [vmem:[%s2] sm:$0xff]
    %v61 = vld [vmem:[%s2 + $0x8] sm:$0xff]
    %v62 = vld [vmem:[%s2 + $0x10] sm:$0xff]
    %v63 = vld [vmem:[%s2 + $0x18] sm:$0xff]
    %v64 = vld [vmem:[%s2 + $0x20] sm:$0xff]
    %v65 = vld [vmem:[%s2 + $0x28] sm:$0xff]
    %v66 = vld [vmem:[%s2 + $0x30] sm:$0xff]
    %v67 = vld [vmem:[%s2 + $0x38] sm:$0xff]
    %v68 = vld [vmem:[%s2 + $0x40] sm:$0xff]
    %v69 = vld [vmem:[%s2 + $0x48] sm:$0xff]
    %v70 = vld [vmem:[%s2 + $0x50] sm:$0xff]
    %v71 = vld [vmem:[%s2 + $0x58] sm:$0xff]
    %v72 = vld [vmem:[%s2 + $0x60] sm:$0xff]
    %v73 = vld [vmem:[%s2 + $0x68] sm:$0xff]
    %v74 = vld [vmem:[%s2 + $0x70] sm:$0xff]
    %v75 = vld [vmem:[%s2 + $0x78] sm:$0xff]
    %v76 = vld [vmem:[%s2 + $0x80] sm:$0xff]
    %v77 = vld [vmem:[%s2 + $0x88] sm:$0xff]
    %v78 = vld [vmem:[%s2 + $0x90] sm:$0xff]
    %v79 = vld [vmem:[%s2 + $0x98] sm:$0xff]
    %v80 = vld [vmem:[%s2 + $0xa0] sm:$0xff]
    %v81 = vld [vmem:[%s2 + $0xa8] sm:$0xff]
    %v82 = vld [vmem:[%s2 + $0xb0] sm:$0xff]
    %v83 = vld [vmem:[%s2 + $0xb8] sm:$0xff]
    %v84 = vld [vmem:[%s2 + $0xc0] sm:$0xff]
    %v85 = vld [vmem:[%s2 + $0xc8] sm:$0xff]
    %v86 = vld [vmem:[%s2 + $0xd0] sm:$0xff]
    %v87 = vld [vmem:[%s2 + $0xd8] sm:$0xff]
    %v88 = vld [vmem:[%s2 + $0xe0] sm:$0xff]
    %v89 = vld [vmem:[%s2 + $0xe8] sm:$0xff]
    %v90 = vld [vmem:[%s2 + $0xf0] sm:$0xff]
    %v91 = vld [vmem:[%s2 + $0xf8] sm:$0xff]
    %v92 = vld [vmem:[%s2 + $0x100] sm:$0xff]
    %v93 = vld [vmem:[%s2 + $0x108] sm:$0xff]
    %v94 = vld [vmem:[%s2 + $0x110] sm:$0xff]
    %v95 = vld [vmem:[%s2 + $0x118] sm:$0xff]
    %v96 = vld [vmem:[%s2 + $0x120] sm:$0xff]
    %v97 = vld [vmem:[%s2 + $0x128] sm:$0xff]
    %v98 = vld [vmem:[%s2 + $0x130] sm:$0xff]
    %v99 = vld [vmem:[%s2 + $0x138] sm:$0xff]
    %v100 = vld [vmem:[%s2 + $0x140] sm:$0xff]
    %v101 = vld [vmem:[%s2 + $0x148] sm:$0xff]
    %v102 = vld [vmem:[%s2 + $0x150] sm:$0xff]
    %v103 = vld [vmem:[%s2 + $0x158] sm:$0xff]
    %v104 = vld [vmem:[%s2 + $0x160] sm:$0xff]
    %v105 = vld [vmem:[%s2 + $0x168] sm:$0xff]
    %v106 = vld [vmem:[%s2 + $0x170] sm:$0xff]
    %v107 = vld [vmem:[%s2 + $0x178] sm:$0xff]
    %v108 = vld [vmem:[%s2 + $0x180] sm:$0xff]
    %v109 = vld [vmem:[%s2 + $0x188] sm:$0xff]
    %v110 = vld [vmem:[%s2 + $0x190] sm:$0xff]
    %v111 = vld [vmem:[%s2 + $0x198] sm:$0xff]
    %v112 = vld [vmem:[%s2 + $0x1a0] sm:$0xff]
    %v113 = vld [vmem:[%s2 + $0x1a8] sm:$0xff]
    %v114 = vld [vmem:[%s2 + $0x1b0] sm:$0xff]
    %v115 = vld [vmem:[%s2 + $0x1b8] sm:$0xff]
    %v116 = vld [vmem:[%s2 + $0x1c0] sm:$0xff]
    %v117 = vld [vmem:[%s2 + $0x1c8] sm:$0xff]
    %v118 = vld [vmem:[%s2 + $0x1d0] sm:$0xff]
    %v119 = vld [vmem:[%s2 + $0x1d8] sm:$0xff]
    %v120 = vld [vmem:[%s2 + $0x1e0] sm:$0xff]
    %v121 = vld [vmem:[%s2 + $0x1e8] sm:$0xff]
    %v122 = vld [vmem:[%s2 + $0x1f0] sm:$0xff]
    %v123 = vld [vmem:[%s2 + $0x1f8] sm:$0xff]
    %v124 = vld [vmem:[%s2 + $0x200] sm:$0xff]
    %v125 = vld [vmem:[%s2 + $0x208] sm:$0xff]
    %v126 = vld [vmem:[%s2 + $0x210] sm:$0xff]
    %v127 = vld [vmem:[%s2 + $0x218] sm:$0xff]
    %v128 = vld [vmem:[%s2 + $0x220] sm:$0xff]
    %v129 = vld [vmem:[%s2 + $0x228] sm:$0xff]
    %v130 = vld [vmem:[%s2 + $0x230] sm:$0xff]
    %v131 = vld [vmem:[%s2 + $0x238] sm:$0xff]
    %v132 = vld [vmem:[%s2 + $0x240] sm:$0xff]
    %v133 = vld [vmem:[%s2 + $0x248] sm:$0xff]
    %v134 = vld [vmem:[%s2 + $0x250] sm:$0xff]
    %v135 = vld [vmem:[%s2 + $0x258] sm:$0xff]
    %v136 = vld [vmem:[%s2 + $0x260] sm:$0xff]
    %v137 = vld [vmem:[%s2 + $0x268] sm:$0xff]
    %v138 = vld [vmem:[%s2 + $0x270] sm:$0xff]
    %v139 = vld [vmem:[%s2 + $0x278] sm:$0xff]
    %v140 = vld [vmem:[%s2 + $0x280] sm:$0xff]
    %v141 = vld [vmem:[%s2 + $0x288] sm:$0xff]
    %v142 = vld [vmem:[%s2 + $0x290] sm:$0xff]
    %v143 = vld [vmem:[%s2 + $0x298] sm:$0xff]
    %v144 = vld [vmem:[%s2 + $0x2a0] sm:$0xff]
    %v145 = vld [vmem:[%s2 + $0x2a8] sm:$0xff]
    %v146 = vld [vmem:[%s2 + $0x2b0] sm:$0xff]
    %v147 = vld [vmem:[%s2 + $0x2b8] sm:$0xff]
    %v148 = vld [vmem:[%s2 + $0x2c0] sm:$0xff]
    %v149 = vld [vmem:[%s2 + $0x2c8] sm:$0xff]
    %v150 = vld [vmem:[%s2 + $0x2d0] sm:$0xff]
    %v151 = vld [vmem:[%s2 + $0x2d8] sm:$0xff]
    %v152 = vld [vmem:[%s2 + $0x2e0] sm:$0xff]
    %v153 = vld [vmem:[%s2 + $0x2e8] sm:$0xff]
    %v154 = vld [vmem:[%s2 + $0x2f0] sm:$0xff]
    %v155 = vld [vmem:[%s2 + $0x2f8] sm:$0xff]
    %v156 = vld [vmem:[%s2 + $0x300] sm:$0xff]
    %v157 = vld [vmem:[%s2 + $0x308] sm:$0xff]
    %v158 = vld [vmem:[%s2 + $0x310] sm:$0xff]
    %v159 = vld [vmem:[%s2 + $0x318] sm:$0xff]
    %v160 = vld [vmem:[%s2 + $0x320] sm:$0xff]
    %v161 = vld [vmem:[%s2 + $0x328] sm:$0xff]
    %v162 = vld [vmem:[%s2 + $0x330] sm:$0xff]
    %v163 = vld [vmem:[%s2 + $0x338] sm:$0xff]
    %v164 = vld [vmem:[%s2 + $0x340] sm:$0xff]
    %v165 = vld [vmem:[%s2 + $0x348] sm:$0xff]
    %v166 = vld [vmem:[%s2 + $0x350] sm:$0xff]
    %v167 = vld [vmem:[%s2 + $0x358] sm:$0xff]
    %v168 = vld [vmem:[%s2 + $0x360] sm:$0xff]
    %v169 = vld [vmem:[%s2 + $0x368] sm:$0xff]
    %v170 = vld [vmem:[%s2 + $0x370] sm:$0xff]
    %v171 = vld [vmem:[%s2 + $0x378] sm:$0xff]
    %v172 = vld [vmem:[%s2 + $0x380] sm:$0xff]
    %v173 = vld [vmem:[%s2 + $0x388] sm:$0xff]
    %v174 = vld [vmem:[%s2 + $0x390] sm:$0xff]
    %v175 = vld [vmem:[%s2 + $0x398] sm:$0xff]
    %v176 = vld [vmem:[%s2 + $0x3a0] sm:$0xff]
    %v177 = vld [vmem:[%s2 + $0x3a8] sm:$0xff]
    %v178 = vld [vmem:[%s2 + $0x3b0] sm:$0xff]
    %v179 = vld [vmem:[%s2 + $0x3b8] sm:$0xff]
    %v180 = vld [vmem:[%s2 + $0x3c0] sm:$0xff]
    %v181 = vld [vmem:[%s2 + $0x3c8] sm:$0xff]
    %v182 = vld [vmem:[%s2 + $0x3d0] sm:$0xff]
    %v183 = vld [vmem:[%s2 + $0x3d8] sm:$0xff]
    %v184 = vld [vmem:[%s2 + $0x3e0] sm:$0xff]
    %v185 = vld [vmem:[%s2 + $0x3e8] sm:$0xff]
    %v186 = vld [vmem:[%s2 + $0x3f0] sm:$0xff]
    %v187 = vld [vmem:[%s2 + $0x3f8] sm:$0xff]
    %v188 = vld [vmem:[%s2 + $0x400] sm:$0xff]
    %v189 = vld [vmem:[%s2 + $0x408] sm:$0xff]
    %v190 = vld [vmem:[%s2 + $0x410] sm:$0xff]
    %v191 = vld [vmem:[%s2 + $0x418] sm:$0xff]
    %v192 = vld [vmem:[%s2 + $0x420] sm:$0xff]
    %v193 = vld [vmem:[%s2 + $0x428] sm:$0xff]
    %v194 = vld [vmem:[%s2 + $0x430] sm:$0xff]
    %v195 = vld [vmem:[%s2 + $0x438] sm:$0xff]
    %v196 = vld [vmem:[%s2 + $0x440] sm:$0xff]
    %v197 = vld [vmem:[%s2 + $0x448] sm:$0xff]
    %v198 = vld [vmem:[%s2 + $0x450] sm:$0xff]
    %v199 = vld [vmem:[%s2 + $0x458] sm:$0xff]
    %v200 = vld [vmem:[%s2 + $0x460] sm:$0xff]
    %v201 = vld [vmem:[%s2 + $0x468] sm:$0xff]
    %v202 = vld [vmem:[%s2 + $0x470] sm:$0xff]
    %v203 = vld [vmem:[%s2 + $0x478] sm:$0xff]
    %v204 = vld [vmem:[%s2 + $0x480] sm:$0xff]
    %v205 = vld [vmem:[%s2 + $0x488] sm:$0xff]
    %v206 = vld [vmem:[%s2 + $0x490] sm:$0xff]
    %v207 = vld [vmem:[%s2 + $0x498] sm:$0xff]
    %v208 = vld [vmem:[%s2 + $0x4a0] sm:$0xff]
    %v209 = vld [vmem:[%s2 + $0x4a8] sm:$0xff]
    %v210 = vld [vmem:[%s2 + $0x4b0] sm:$0xff]
    %v211 = vld [vmem:[%s2 + $0x4b8] sm:$0xff]
    %v212 = vld [vmem:[%s2 + $0x4c0] sm:$0xff]
    %v213 = vld [vmem:[%s2 + $0x4c8] sm:$0xff]
    %v214 = vld [vmem:[%s2 + $0x4d0] sm:$0xff]
    %v215 = vld [vmem:[%s2 + $0x4d8] sm:$0xff]
    %v216 = vld [vmem:[%s2 + $0x4e0] sm:$0xff]
    %v217 = vld [vmem:[%s2 + $0x4e8] sm:$0xff]
    %v218 = vld [vmem:[%s2 + $0x4f0] sm:$0xff]
    %v219 = vld [vmem:[%s2 + $0x4f8] sm:$0xff]
    %v220 = vld [vmem:[%s2 + $0x500] sm:$0xff]
    %v221 = vld [vmem:[%s2 + $0x508] sm:$0xff]
    %v222 = vld [vmem:[%s2 + $0x510] sm:$0xff]
    %v223 = vld [vmem:[%s2 + $0x518] sm:$0xff]
    %v224 = vld [vmem:[%s2 + $0x520] sm:$0xff]
    %v225 = vld [vmem:[%s2 + $0x528] sm:$0xff]
    %v226 = vld [vmem:[%s2 + $0x530] sm:$0xff]
    %v227 = vld [vmem:[%s2 + $0x538] sm:$0xff]
    %v228 = vld [vmem:[%s2 + $0x540] sm:$0xff]
    %v229 = vld [vmem:[%s2 + $0x548] sm:$0xff]
    %v230 = vld [vmem:[%s2 + $0x550] sm:$0xff]
    %v231 = vld [vmem:[%s2 + $0x558] sm:$0xff]
    %v232 = vld [vmem:[%s2 + $0x560] sm:$0xff]
    %v233 = vld [vmem:[%s2 + $0x568] sm:$0xff]
    %v234 = vld [vmem:[%s2 + $0x570] sm:$0xff]
    %v235 = vld [vmem:[%s2 + $0x578] sm:$0xff]
    %v236 = vld [vmem:[%s2 + $0x580] sm:$0xff]
    %v237 = vld [vmem:[%s2 + $0x588] sm:$0xff]
    %v238 = vld [vmem:[%s2 + $0x590] sm:$0xff]
    %v239 = vld [vmem:[%s2 + $0x598] sm:$0xff]
    %v240 = vld [vmem:[%s2 + $0x5a0] sm:$0xff]
    %v241 = vld [vmem:[%s2 + $0x5a8] sm:$0xff]
    %v242 = vld [vmem:[%s2 + $0x5b0] sm:$0xff]
    %v243 = vld [vmem:[%s2 + $0x5b8] sm:$0xff]
    %v244 = vld [vmem:[%s2 + $0x5c0] sm:$0xff]
    %v245 = vld [vmem:[%s2 + $0x5c8] sm:$0xff]
    %v246 = vld [vmem:[%s2 + $0x5d0] sm:$0xff]
    %v247 = vld [vmem:[%s2 + $0x5d8] sm:$0xff]
    %v248 = vld [vmem:[%s2 + $0x5e0] sm:$0xff]
    %v249 = vld [vmem:[%s2 + $0x5e8] sm:$0xff]
    %v250 = vld [vmem:[%s2 + $0x5f0] sm:$0xff]
    %v251 = vld [vmem:[%s2 + $0x5f8] sm:$0xff]
    %v252 = vld [vmem:[%s2 + $0x600] sm:$0xff]
    %v253 = vld [vmem:[%s2 + $0x608] sm:$0xff]
    %v254 = vld [vmem:[%s2 + $0x610] sm:$0xff]
    %v255 = vld [vmem:[%s2 + $0x618] sm:$0xff]
    %v256 = vld [vmem:[%s2 + $0x620] sm:$0xff]
    %v257 = vld [vmem:[%s2 + $0x628] sm:$0xff]
    %v258 = vld [vmem:[%s2 + $0x630] sm:$0xff]
    %v259 = vld [vmem:[%s2 + $0x638] sm:$0xff]
    %v260 = vld [vmem:[%s2 + $0x640] sm:$0xff]
    %v261 = vld [vmem:[%s2 + $0x648] sm:$0xff]
    %v262 = vld [vmem:[%s2 + $0x650] sm:$0xff]
    %v263 = vld [vmem:[%s2 + $0x658] sm:$0xff]
    %v264 = vld [vmem:[%s2 + $0x660] sm:$0xff]
    %v265 = vld [vmem:[%s2 + $0x668] sm:$0xff]
    %v266 = vld [vmem:[%s2 + $0x670] sm:$0xff]
    %v267 = vld [vmem:[%s2 + $0x678] sm:$0xff]
    %v268 = vld [vmem:[%s2 + $0x680] sm:$0xff]
    %v269 = vld [vmem:[%s2 + $0x688] sm:$0xff]
    %v270 = vld [vmem:[%s2 + $0x690] sm:$0xff]
    %v271 = vld [vmem:[%s2 + $0x698] sm:$0xff]
    %v272 = vld [vmem:[%s2 + $0x6a0] sm:$0xff]
    %v273 = vld [vmem:[%s2 + $0x6a8] sm:$0xff]
    %v274 = vld [vmem:[%s2 + $0x6b0] sm:$0xff]
    %v275 = vld [vmem:[%s2 + $0x6b8] sm:$0xff]
    %v276 = vld [vmem:[%s2 + $0x6c0] sm:$0xff]
    %v277 = vld [vmem:[%s2 + $0x6c8] sm:$0xff]
    %v278 = vld [vmem:[%s2 + $0x6d0] sm:$0xff]
    %v279 = vld [vmem:[%s2 + $0x6d8] sm:$0xff]
    %v280 = vld [vmem:[%s2 + $0x6e0] sm:$0xff]
    %v281 = vld [vmem:[%s2 + $0x6e8] sm:$0xff]
    %v282 = vld [vmem:[%s2 + $0x6f0] sm:$0xff]
    %v283 = vld [vmem:[%s2 + $0x6f8] sm:$0xff]
    %v284 = vld [vmem:[%s2 + $0x700] sm:$0xff]
    %v285 = vld [vmem:[%s2 + $0x708] sm:$0xff]
    %v286 = vld [vmem:[%s2 + $0x710] sm:$0xff]
    %v287 = vld [vmem:[%s2 + $0x718] sm:$0xff]
    %v288 = vld [vmem:[%s2 + $0x720] sm:$0xff]
    %v289 = vld [vmem:[%s2 + $0x728] sm:$0xff]
    %v290 = vld [vmem:[%s2 + $0x730] sm:$0xff]
    %v291 = vld [vmem:[%s2 + $0x738] sm:$0xff]
    %v292 = vld [vmem:[%s2 + $0x740] sm:$0xff]
    %v293 = vld [vmem:[%s2 + $0x748] sm:$0xff]
    %v294 = vld [vmem:[%s2 + $0x750] sm:$0xff]
    %v295 = vld [vmem:[%s2 + $0x758] sm:$0xff]
    %v296 = vld [vmem:[%s2 + $0x760] sm:$0xff]
    %v297 = vld [vmem:[%s2 + $0x768] sm:$0xff]
    %v298 = vld [vmem:[%s2 + $0x770] sm:$0xff]
    %v299 = vld [vmem:[%s2 + $0x778] sm:$0xff]
    %v300 = vld [vmem:[%s2 + $0x780] sm:$0xff]
    %v301 = vld [vmem:[%s2 + $0x788] sm:$0xff]
    %v302 = vld [vmem:[%s2 + $0x790] sm:$0xff]
    %v303 = vld [vmem:[%s2 + $0x798] sm:$0xff]
    %v304 = vld [vmem:[%s2 + $0x7a0] sm:$0xff]
    %v305 = vld [vmem:[%s2 + $0x7a8] sm:$0xff]
    %v306 = vld [vmem:[%s2 + $0x7b0] sm:$0xff]
    %v307 = vld [vmem:[%s2 + $0x7b8] sm:$0xff]
    %v308 = vld [vmem:[%s2 + $0x7c0] sm:$0xff]
    %v309 = vld [vmem:[%s2 + $0x7c8] sm:$0xff]
    %v310 = vld [vmem:[%s2 + $0x7d0] sm:$0xff]
    %v311 = vld [vmem:[%s2 + $0x7d8] sm:$0xff]
    %v312 = vld [vmem:[%s2 + $0x7e0] sm:$0xff]
    %v313 = vld [vmem:[%s2 + $0x7e8] sm:$0xff]
    %v314 = vld [vmem:[%s2 + $0x7f0] sm:$0xff]
    %v315 = vld [vmem:[%s2 + $0x7f8] sm:$0xff]
    %v316 = vld [vmem:[%s2 + $0x800] sm:$0xff]
    %v317 = vld [vmem:[%s2 + $0x808] sm:$0xff]
    %v318 = vld [vmem:[%s2 + $0x810] sm:$0xff]
    %v319 = vld [vmem:[%s2 + $0x818] sm:$0xff]
    %v320 = vld [vmem:[%s2 + $0x820] sm:$0xff]
    %v321 = vld [vmem:[%s2 + $0x828] sm:$0xff]
    %v322 = vld [vmem:[%s2 + $0x830] sm:$0xff]
    %v323 = vld [vmem:[%s2 + $0x838] sm:$0xff]
    %v324 = vld [vmem:[%s2 + $0x840] sm:$0xff]
    %v325 = vld [vmem:[%s2 + $0x848] sm:$0xff]
    %v326 = vld [vmem:[%s2 + $0x850] sm:$0xff]
    %v327 = vld [vmem:[%s2 + $0x858] sm:$0xff]
    %v328 = vld [vmem:[%s2 + $0x860] sm:$0xff]
    %v329 = vld [vmem:[%s2 + $0x868] sm:$0xff]
    %v330 = vld [vmem:[%s2 + $0x870] sm:$0xff]
    %v331 = vld [vmem:[%s2 + $0x878] sm:$0xff]
    %v332 = vld [vmem:[%s2 + $0x880] sm:$0xff]
    %v333 = vld [vmem:[%s2 + $0x888] sm:$0xff]
    %v334 = vld [vmem:[%s2 + $0x890] sm:$0xff]
    %v335 = vld [vmem:[%s2 + $0x898] sm:$0xff]
    %v336 = vld [vmem:[%s2 + $0x8a0] sm:$0xff]
    %v337 = vld [vmem:[%s2 + $0x8a8] sm:$0xff]
    %v338 = vld [vmem:[%s2 + $0x8b0] sm:$0xff]
    %v339 = vld [vmem:[%s2 + $0x8b8] sm:$0xff]
    %v340 = vld [vmem:[%s2 + $0x8c0] sm:$0xff]
    %v341 = vld [vmem:[%s2 + $0x8c8] sm:$0xff]
    %v342 = vld [vmem:[%s2 + $0x8d0] sm:$0xff]
    %v343 = vld [vmem:[%s2 + $0x8d8] sm:$0xff]
    %v344 = vld [vmem:[%s2 + $0x8e0] sm:$0xff]
    %v345 = vld [vmem:[%s2 + $0x8e8] sm:$0xff]
    %v346 = vld [vmem:[%s2 + $0x8f0] sm:$0xff]
    %v347 = vld [vmem:[%s2 + $0x8f8] sm:$0xff]
    %v348 = vld [vmem:[%s2 + $0x900] sm:$0xff]
    %v349 = vld [vmem:[%s2 + $0x908] sm:$0xff]
    %v350 = vld [vmem:[%s2 + $0x910] sm:$0xff]
    %v351 = vld [vmem:[%s2 + $0x918] sm:$0xff]
    %v352 = vld [vmem:[%s2 + $0x920] sm:$0xff]
    %v353 = vld [vmem:[%s2 + $0x928] sm:$0xff]
    %v354 = vld [vmem:[%s2 + $0x930] sm:$0xff]
    %v355 = vld [vmem:[%s2 + $0x938] sm:$0xff]
    %v356 = vld [vmem:[%s2 + $0x940] sm:$0xff]
    %v357 = vld [vmem:[%s2 + $0x948] sm:$0xff]
    %v358 = vld [vmem:[%s2 + $0x950] sm:$0xff]
    %v359 = vld [vmem:[%s2 + $0x958] sm:$0xff]
    %v360 = vld [vmem:[%s3] sm:$0xf]
    %v362 = vperm.slane %v360, 0
    %v363 = vperm.slane %v360, 1
    %v364 = vperm.slane %v360, 2
    %v365 = vperm.slane %v360, 3
    %v670 = vunpack.c.l.b16 %v60
    %v671 = vunpack.c.h.b16 %v60
    %v672 = vunpack.c.l.b16 %v61
    %v673 = vunpack.c.h.b16 %v61
    %v674 = vunpack.c.l.b16 %v62
    %v675 = vunpack.c.h.b16 %v62
    %v676 = vunpack.c.l.b16 %v63
    %v677 = vunpack.c.h.b16 %v63
    %v678 = vunpack.c.l.b16 %v64
    %v679 = vunpack.c.h.b16 %v64
    %v680 = vunpack.c.l.b16 %v65
    %v681 = vunpack.c.h.b16 %v65
    %v682 = vunpack.c.l.b16 %v66
    %v683 = vunpack.c.h.b16 %v66
    %v684 = vunpack.c.l.b16 %v67
    %v685 = vunpack.c.h.b16 %v67
    %v686 = vunpack.c.l.b16 %v68
    %v687 = vunpack.c.h.b16 %v68
    %v688 = vunpack.c.l.b16 %v69
    %v689 = vunpack.c.h.b16 %v69
    %v690 = vunpack.c.l.b16 %v70
    %v691 = vunpack.c.h.b16 %v70
    %v692 = vunpack.c.l.b16 %v71
    %v693 = vunpack.c.h.b16 %v71
    %v694 = vunpack.c.l.b16 %v72
    %v695 = vunpack.c.h.b16 %v72
    %v696 = vunpack.c.l.b16 %v73
    %v697 = vunpack.c.h.b16 %v73
    %v698 = vunpack.c.l.b16 %v74
    %v699 = vunpack.c.h.b16 %v74
    %v700 = vunpack.c.l.b16 %v75
    %v701 = vunpack.c.h.b16 %v75
    %v702 = vunpack.c.l.b16 %v76
    %v703 = vunpack.c.h.b16 %v76
    %v704 = vunpack.c.l.b16 %v77
    %v705 = vunpack.c.h.b16 %v77
    %v706 = vunpack.c.l.b16 %v78
    %v707 = vunpack.c.h.b16 %v78
    %v708 = vunpack.c.l.b16 %v79
    %v709 = vunpack.c.h.b16 %v79
    %v710 = vunpack.c.l.b16 %v80
    %v711 = vunpack.c.h.b16 %v80
    %v712 = vunpack.c.l.b16 %v81
    %v713 = vunpack.c.h.b16 %v81
    %v714 = vunpack.c.l.b16 %v82
    %v715 = vunpack.c.h.b16 %v82
    %v716 = vunpack.c.l.b16 %v83
    %v717 = vunpack.c.h.b16 %v83
    %v718 = vunpack.c.l.b16 %v84
    %v719 = vunpack.c.h.b16 %v84
    %v720 = vunpack.c.l.b16 %v85
    %v721 = vunpack.c.h.b16 %v85
    %v722 = vunpack.c.l.b16 %v86
    %v723 = vunpack.c.h.b16 %v86
    %v724 = vunpack.c.l.b16 %v87
    %v725 = vunpack.c.h.b16 %v87
    %v726 = vunpack.c.l.b16 %v88
    %v727 = vunpack.c.h.b16 %v88
    %v728 = vunpack.c.l.b16 %v89
    %v729 = vunpack.c.h.b16 %v89
    %v730 = vunpack.c.l.b16 %v90
    %v731 = vunpack.c.h.b16 %v90
    %v732 = vunpack.c.l.b16 %v91
    %v733 = vunpack.c.h.b16 %v91
    %v734 = vunpack.c.l.b16 %v92
    %v735 = vunpack.c.h.b16 %v92
    %v736 = vunpack.c.l.b16 %v93
    %v737 = vunpack.c.h.b16 %v93
    %v738 = vunpack.c.l.b16 %v94
    %v739 = vunpack.c.h.b16 %v94
    %v740 = vunpack.c.l.b16 %v95
    %v741 = vunpack.c.h.b16 %v95
    %v742 = vunpack.c.l.b16 %v96
    %v743 = vunpack.c.h.b16 %v96
    %v744 = vunpack.c.l.b16 %v97
    %v745 = vunpack.c.h.b16 %v97
    %v746 = vunpack.c.l.b16 %v98
    %v747 = vunpack.c.h.b16 %v98
    %v748 = vunpack.c.l.b16 %v99
    %v749 = vunpack.c.h.b16 %v99
    %v750 = vunpack.c.l.b16 %v100
    %v751 = vunpack.c.h.b16 %v100
    %v752 = vunpack.c.l.b16 %v101
    %v753 = vunpack.c.h.b16 %v101
    %v754 = vunpack.c.l.b16 %v102
    %v755 = vunpack.c.h.b16 %v102
    %v756 = vunpack.c.l.b16 %v103
    %v757 = vunpack.c.h.b16 %v103
    %v758 = vunpack.c.l.b16 %v104
    %v759 = vunpack.c.h.b16 %v104
    %v760 = vunpack.c.l.b16 %v105
    %v761 = vunpack.c.h.b16 %v105
    %v762 = vunpack.c.l.b16 %v106
    %v763 = vunpack.c.h.b16 %v106
    %v764 = vunpack.c.l.b16 %v107
    %v765 = vunpack.c.h.b16 %v107
    %v766 = vunpack.c.l.b16 %v108
    %v767 = vunpack.c.h.b16 %v108
    %v768 = vunpack.c.l.b16 %v109
    %v769 = vunpack.c.h.b16 %v109
    %v770 = vunpack.c.l.b16 %v110
    %v771 = vunpack.c.h.b16 %v110
    %v772 = vunpack.c.l.b16 %v111
    %v773 = vunpack.c.h.b16 %v111
    %v774 = vunpack.c.l.b16 %v112
    %v775 = vunpack.c.h.b16 %v112
    %v776 = vunpack.c.l.b16 %v113
    %v777 = vunpack.c.h.b16 %v113
    %v778 = vunpack.c.l.b16 %v114
    %v779 = vunpack.c.h.b16 %v114
    %v780 = vunpack.c.l.b16 %v115
    %v781 = vunpack.c.h.b16 %v115
    %v782 = vunpack.c.l.b16 %v116
    %v783 = vunpack.c.h.b16 %v116
    %v784 = vunpack.c.l.b16 %v117
    %v785 = vunpack.c.h.b16 %v117
    %v786 = vunpack.c.l.b16 %v118
    %v787 = vunpack.c.h.b16 %v118
    %v788 = vunpack.c.l.b16 %v119
    %v789 = vunpack.c.h.b16 %v119
    %v790 = vunpack.c.l.b16 %v120
    %v791 = vunpack.c.h.b16 %v120
    %v792 = vunpack.c.l.b16 %v121
    %v793 = vunpack.c.h.b16 %v121
    %v794 = vunpack.c.l.b16 %v122
    %v795 = vunpack.c.h.b16 %v122
    %v796 = vunpack.c.l.b16 %v123
    %v797 = vunpack.c.h.b16 %v123
    %v798 = vunpack.c.l.b16 %v124
    %v799 = vunpack.c.h.b16 %v124
    %v800 = vunpack.c.l.b16 %v125
    %v801 = vunpack.c.h.b16 %v125
    %v802 = vunpack.c.l.b16 %v126
    %v803 = vunpack.c.h.b16 %v126
    %v804 = vunpack.c.l.b16 %v127
    %v805 = vunpack.c.h.b16 %v127
    %v806 = vunpack.c.l.b16 %v128
    %v807 = vunpack.c.h.b16 %v128
    %v808 = vunpack.c.l.b16 %v129
    %v809 = vunpack.c.h.b16 %v129
    %v810 = vunpack.c.l.b16 %v130
    %v811 = vunpack.c.h.b16 %v130
    %v812 = vunpack.c.l.b16 %v131
    %v813 = vunpack.c.h.b16 %v131
    %v814 = vunpack.c.l.b16 %v132
    %v815 = vunpack.c.h.b16 %v132
    %v816 = vunpack.c.l.b16 %v133
    %v817 = vunpack.c.h.b16 %v133
    %v818 = vunpack.c.l.b16 %v134
    %v819 = vunpack.c.h.b16 %v134
    %v820 = vunpack.c.l.b16 %v135
    %v821 = vunpack.c.h.b16 %v135
    %v822 = vunpack.c.l.b16 %v136
    %v823 = vunpack.c.h.b16 %v136
    %v824 = vunpack.c.l.b16 %v137
    %v825 = vunpack.c.h.b16 %v137
    %v826 = vunpack.c.l.b16 %v138
    %v827 = vunpack.c.h.b16 %v138
    %v828 = vunpack.c.l.b16 %v139
    %v829 = vunpack.c.h.b16 %v139
    %v830 = vunpack.c.l.b16 %v140
    %v831 = vunpack.c.h.b16 %v140
    %v832 = vunpack.c.l.b16 %v141
    %v833 = vunpack.c.h.b16 %v141
    %v834 = vunpack.c.l.b16 %v142
    %v835 = vunpack.c.h.b16 %v142
    %v836 = vunpack.c.l.b16 %v143
    %v837 = vunpack.c.h.b16 %v143
    %v838 = vunpack.c.l.b16 %v144
    %v839 = vunpack.c.h.b16 %v144
    %v840 = vunpack.c.l.b16 %v145
    %v841 = vunpack.c.h.b16 %v145
    %v842 = vunpack.c.l.b16 %v146
    %v843 = vunpack.c.h.b16 %v146
    %v844 = vunpack.c.l.b16 %v147
    %v845 = vunpack.c.h.b16 %v147
    %v846 = vunpack.c.l.b16 %v148
    %v847 = vunpack.c.h.b16 %v148
    %v848 = vunpack.c.l.b16 %v149
    %v849 = vunpack.c.h.b16 %v149
    %v850 = vunpack.c.l.b16 %v150
    %v851 = vunpack.c.h.b16 %v150
    %v852 = vunpack.c.l.b16 %v151
    %v853 = vunpack.c.h.b16 %v151
    %v854 = vunpack.c.l.b16 %v152
    %v855 = vunpack.c.h.b16 %v152
    %v856 = vunpack.c.l.b16 %v153
    %v857 = vunpack.c.h.b16 %v153
    %v858 = vunpack.c.l.b16 %v154
    %v859 = vunpack.c.h.b16 %v154
    %v860 = vunpack.c.l.b16 %v155
    %v861 = vunpack.c.h.b16 %v155
    %v862 = vunpack.c.l.b16 %v156
    %v863 = vunpack.c.h.b16 %v156
    %v864 = vunpack.c.l.b16 %v157
    %v865 = vunpack.c.h.b16 %v157
    %v866 = vunpack.c.l.b16 %v158
    %v867 = vunpack.c.h.b16 %v158
    %v868 = vunpack.c.l.b16 %v159
    %v869 = vunpack.c.h.b16 %v159
    %v870 = vunpack.c.l.b16 %v160
    %v871 = vunpack.c.h.b16 %v160
    %v872 = vunpack.c.l.b16 %v161
    %v873 = vunpack.c.h.b16 %v161
    %v874 = vunpack.c.l.b16 %v162
    %v875 = vunpack.c.h.b16 %v162
    %v876 = vunpack.c.l.b16 %v163
    %v877 = vunpack.c.h.b16 %v163
    %v878 = vunpack.c.l.b16 %v164
    %v879 = vunpack.c.h.b16 %v164
    %v880 = vunpack.c.l.b16 %v165
    %v881 = vunpack.c.h.b16 %v165
    %v882 = vunpack.c.l.b16 %v166
    %v883 = vunpack.c.h.b16 %v166
    %v884 = vunpack.c.l.b16 %v167
    %v885 = vunpack.c.h.b16 %v167
    %v886 = vunpack.c.l.b16 %v168
    %v887 = vunpack.c.h.b16 %v168
    %v888 = vunpack.c.l.b16 %v169
    %v889 = vunpack.c.h.b16 %v169
    %v890 = vunpack.c.l.b16 %v170
    %v891 = vunpack.c.h.b16 %v170
    %v892 = vunpack.c.l.b16 %v171
    %v893 = vunpack.c.h.b16 %v171
    %v894 = vunpack.c.l.b16 %v172
    %v895 = vunpack.c.h.b16 %v172
    %v896 = vunpack.c.l.b16 %v173
    %v897 = vunpack.c.h.b16 %v173
    %v898 = vunpack.c.l.b16 %v174
    %v899 = vunpack.c.h.b16 %v174
    %v900 = vunpack.c.l.b16 %v175
    %v901 = vunpack.c.h.b16 %v175
    %v902 = vunpack.c.l.b16 %v176
    %v903 = vunpack.c.h.b16 %v176
    %v904 = vunpack.c.l.b16 %v177
    %v905 = vunpack.c.h.b16 %v177
    %v906 = vunpack.c.l.b16 %v178
    %v907 = vunpack.c.h.b16 %v178
    %v908 = vunpack.c.l.b16 %v179
    %v909 = vunpack.c.h.b16 %v179
    %v910 = vunpack.c.l.b16 %v180
    %v911 = vunpack.c.h.b16 %v180
    %v912 = vunpack.c.l.b16 %v181
    %v913 = vunpack.c.h.b16 %v181
    %v914 = vunpack.c.l.b16 %v182
    %v915 = vunpack.c.h.b16 %v182
    %v916 = vunpack.c.l.b16 %v183
    %v917 = vunpack.c.h.b16 %v183
    %v918 = vunpack.c.l.b16 %v184
    %v919 = vunpack.c.h.b16 %v184
    %v920 = vunpack.c.l.b16 %v185
    %v921 = vunpack.c.h.b16 %v185
    %v922 = vunpack.c.l.b16 %v186
    %v923 = vunpack.c.h.b16 %v186
    %v924 = vunpack.c.l.b16 %v187
    %v925 = vunpack.c.h.b16 %v187
    %v926 = vunpack.c.l.b16 %v188
    %v927 = vunpack.c.h.b16 %v188
    %v928 = vunpack.c.l.b16 %v189
    %v929 = vunpack.c.h.b16 %v189
    %v930 = vunpack.c.l.b16 %v190
    %v931 = vunpack.c.h.b16 %v190
    %v932 = vunpack.c.l.b16 %v191
    %v933 = vunpack.c.h.b16 %v191
    %v934 = vunpack.c.l.b16 %v192
    %v935 = vunpack.c.h.b16 %v192
    %v936 = vunpack.c.l.b16 %v193
    %v937 = vunpack.c.h.b16 %v193
    %v938 = vunpack.c.l.b16 %v194
    %v939 = vunpack.c.h.b16 %v194
    %v940 = vunpack.c.l.b16 %v195
    %v941 = vunpack.c.h.b16 %v195
    %v942 = vunpack.c.l.b16 %v196
    %v943 = vunpack.c.h.b16 %v196
    %v944 = vunpack.c.l.b16 %v197
    %v945 = vunpack.c.h.b16 %v197
    %v946 = vunpack.c.l.b16 %v198
    %v947 = vunpack.c.h.b16 %v198
    %v948 = vunpack.c.l.b16 %v199
    %v949 = vunpack.c.h.b16 %v199
    %v950 = vunpack.c.l.b16 %v200
    %v951 = vunpack.c.h.b16 %v200
    %v952 = vunpack.c.l.b16 %v201
    %v953 = vunpack.c.h.b16 %v201
    %v954 = vunpack.c.l.b16 %v202
    %v955 = vunpack.c.h.b16 %v202
    %v956 = vunpack.c.l.b16 %v203
    %v957 = vunpack.c.h.b16 %v203
    %v958 = vunpack.c.l.b16 %v204
    %v959 = vunpack.c.h.b16 %v204
    %v960 = vunpack.c.l.b16 %v205
    %v961 = vunpack.c.h.b16 %v205
    %v962 = vunpack.c.l.b16 %v206
    %v963 = vunpack.c.h.b16 %v206
    %v964 = vunpack.c.l.b16 %v207
    %v965 = vunpack.c.h.b16 %v207
    %v966 = vunpack.c.l.b16 %v208
    %v967 = vunpack.c.h.b16 %v208
    %v968 = vunpack.c.l.b16 %v209
    %v969 = vunpack.c.h.b16 %v209
    %v970 = vunpack.c.l.b16 %v210
    %v971 = vunpack.c.h.b16 %v210
    %v972 = vunpack.c.l.b16 %v211
    %v973 = vunpack.c.h.b16 %v211
    %v974 = vunpack.c.l.b16 %v212
    %v975 = vunpack.c.h.b16 %v212
    %v976 = vunpack.c.l.b16 %v213
    %v977 = vunpack.c.h.b16 %v213
    %v978 = vunpack.c.l.b16 %v214
    %v979 = vunpack.c.h.b16 %v214
    %v980 = vunpack.c.l.b16 %v215
    %v981 = vunpack.c.h.b16 %v215
    %v982 = vunpack.c.l.b16 %v216
    %v983 = vunpack.c.h.b16 %v216
    %v984 = vunpack.c.l.b16 %v217
    %v985 = vunpack.c.h.b16 %v217
    %v986 = vunpack.c.l.b16 %v218
    %v987 = vunpack.c.h.b16 %v218
    %v988 = vunpack.c.l.b16 %v219
    %v989 = vunpack.c.h.b16 %v219
    %v990 = vunpack.c.l.b16 %v220
    %v991 = vunpack.c.h.b16 %v220
    %v992 = vunpack.c.l.b16 %v221
    %v993 = vunpack.c.h.b16 %v221
    %v994 = vunpack.c.l.b16 %v222
    %v995 = vunpack.c.h.b16 %v222
    %v996 = vunpack.c.l.b16 %v223
    %v997 = vunpack.c.h.b16 %v223
    %v998 = vunpack.c.l.b16 %v224
    %v999 = vunpack.c.h.b16 %v224
    %v1000 = vunpack.c.l.b16 %v225
    %v1001 = vunpack.c.h.b16 %v225
    %v1002 = vunpack.c.l.b16 %v226
    %v1003 = vunpack.c.h.b16 %v226
    %v1004 = vunpack.c.l.b16 %v227
    %v1005 = vunpack.c.h.b16 %v227
    %v1006 = vunpack.c.l.b16 %v228
    %v1007 = vunpack.c.h.b16 %v228
    %v1008 = vunpack.c.l.b16 %v229
    %v1009 = vunpack.c.h.b16 %v229
    %v1010 = vunpack.c.l.b16 %v230
    %v1011 = vunpack.c.h.b16 %v230
    %v1012 = vunpack.c.l.b16 %v231
    %v1013 = vunpack.c.h.b16 %v231
    %v1014 = vunpack.c.l.b16 %v232
    %v1015 = vunpack.c.h.b16 %v232
    %v1016 = vunpack.c.l.b16 %v233
    %v1017 = vunpack.c.h.b16 %v233
    %v1018 = vunpack.c.l.b16 %v234
    %v1019 = vunpack.c.h.b16 %v234
    %v1020 = vunpack.c.l.b16 %v235
    %v1021 = vunpack.c.h.b16 %v235
    %v1022 = vunpack.c.l.b16 %v236
    %v1023 = vunpack.c.h.b16 %v236
    %v1024 = vunpack.c.l.b16 %v237
    %v1025 = vunpack.c.h.b16 %v237
    %v1026 = vunpack.c.l.b16 %v238
    %v1027 = vunpack.c.h.b16 %v238
    %v1028 = vunpack.c.l.b16 %v239
    %v1029 = vunpack.c.h.b16 %v239
    %v1030 = vunpack.c.l.b16 %v240
    %v1031 = vunpack.c.h.b16 %v240
    %v1032 = vunpack.c.l.b16 %v241
    %v1033 = vunpack.c.h.b16 %v241
    %v1034 = vunpack.c.l.b16 %v242
    %v1035 = vunpack.c.h.b16 %v242
    %v1036 = vunpack.c.l.b16 %v243
    %v1037 = vunpack.c.h.b16 %v243
    %v1038 = vunpack.c.l.b16 %v244
    %v1039 = vunpack.c.h.b16 %v244
    %v1040 = vunpack.c.l.b16 %v245
    %v1041 = vunpack.c.h.b16 %v245
    %v1042 = vunpack.c.l.b16 %v246
    %v1043 = vunpack.c.h.b16 %v246
    %v1044 = vunpack.c.l.b16 %v247
    %v1045 = vunpack.c.h.b16 %v247
    %v1046 = vunpack.c.l.b16 %v248
    %v1047 = vunpack.c.h.b16 %v248
    %v1048 = vunpack.c.l.b16 %v249
    %v1049 = vunpack.c.h.b16 %v249
    %v1050 = vunpack.c.l.b16 %v250
    %v1051 = vunpack.c.h.b16 %v250
    %v1052 = vunpack.c.l.b16 %v251
    %v1053 = vunpack.c.h.b16 %v251
    %v1054 = vunpack.c.l.b16 %v252
    %v1055 = vunpack.c.h.b16 %v252
    %v1056 = vunpack.c.l.b16 %v253
    %v1057 = vunpack.c.h.b16 %v253
    %v1058 = vunpack.c.l.b16 %v254
    %v1059 = vunpack.c.h.b16 %v254
    %v1060 = vunpack.c.l.b16 %v255
    %v1061 = vunpack.c.h.b16 %v255
    %v1062 = vunpack.c.l.b16 %v256
    %v1063 = vunpack.c.h.b16 %v256
    %v1064 = vunpack.c.l.b16 %v257
    %v1065 = vunpack.c.h.b16 %v257
    %v1066 = vunpack.c.l.b16 %v258
    %v1067 = vunpack.c.h.b16 %v258
    %v1068 = vunpack.c.l.b16 %v259
    %v1069 = vunpack.c.h.b16 %v259
    %v1070 = vunpack.c.l.b16 %v260
    %v1071 = vunpack.c.h.b16 %v260
    %v1072 = vunpack.c.l.b16 %v261
    %v1073 = vunpack.c.h.b16 %v261
    %v1074 = vunpack.c.l.b16 %v262
    %v1075 = vunpack.c.h.b16 %v262
    %v1076 = vunpack.c.l.b16 %v263
    %v1077 = vunpack.c.h.b16 %v263
    %v1078 = vunpack.c.l.b16 %v264
    %v1079 = vunpack.c.h.b16 %v264
    %v1080 = vunpack.c.l.b16 %v265
    %v1081 = vunpack.c.h.b16 %v265
    %v1082 = vunpack.c.l.b16 %v266
    %v1083 = vunpack.c.h.b16 %v266
    %v1084 = vunpack.c.l.b16 %v267
    %v1085 = vunpack.c.h.b16 %v267
    %v1086 = vunpack.c.l.b16 %v268
    %v1087 = vunpack.c.h.b16 %v268
    %v1088 = vunpack.c.l.b16 %v269
    %v1089 = vunpack.c.h.b16 %v269
    %v1090 = vunpack.c.l.b16 %v270
    %v1091 = vunpack.c.h.b16 %v270
    %v1092 = vunpack.c.l.b16 %v271
    %v1093 = vunpack.c.h.b16 %v271
    %v1094 = vunpack.c.l.b16 %v272
    %v1095 = vunpack.c.h.b16 %v272
    %v1096 = vunpack.c.l.b16 %v273
    %v1097 = vunpack.c.h.b16 %v273
    %v1098 = vunpack.c.l.b16 %v274
    %v1099 = vunpack.c.h.b16 %v274
    %v1100 = vunpack.c.l.b16 %v275
    %v1101 = vunpack.c.h.b16 %v275
    %v1102 = vunpack.c.l.b16 %v276
    %v1103 = vunpack.c.h.b16 %v276
    %v1104 = vunpack.c.l.b16 %v277
    %v1105 = vunpack.c.h.b16 %v277
    %v1106 = vunpack.c.l.b16 %v278
    %v1107 = vunpack.c.h.b16 %v278
    %v1108 = vunpack.c.l.b16 %v279
    %v1109 = vunpack.c.h.b16 %v279
    %v1110 = vunpack.c.l.b16 %v280
    %v1111 = vunpack.c.h.b16 %v280
    %v1112 = vunpack.c.l.b16 %v281
    %v1113 = vunpack.c.h.b16 %v281
    %v1114 = vunpack.c.l.b16 %v282
    %v1115 = vunpack.c.h.b16 %v282
    %v1116 = vunpack.c.l.b16 %v283
    %v1117 = vunpack.c.h.b16 %v283
    %v1118 = vunpack.c.l.b16 %v284
    %v1119 = vunpack.c.h.b16 %v284
    %v1120 = vunpack.c.l.b16 %v285
    %v1121 = vunpack.c.h.b16 %v285
    %v1122 = vunpack.c.l.b16 %v286
    %v1123 = vunpack.c.h.b16 %v286
    %v1124 = vunpack.c.l.b16 %v287
    %v1125 = vunpack.c.h.b16 %v287
    %v1126 = vunpack.c.l.b16 %v288
    %v1127 = vunpack.c.h.b16 %v288
    %v1128 = vunpack.c.l.b16 %v289
    %v1129 = vunpack.c.h.b16 %v289
    %v1130 = vunpack.c.l.b16 %v290
    %v1131 = vunpack.c.h.b16 %v290
    %v1132 = vunpack.c.l.b16 %v291
    %v1133 = vunpack.c.h.b16 %v291
    %v1134 = vunpack.c.l.b16 %v292
    %v1135 = vunpack.c.h.b16 %v292
    %v1136 = vunpack.c.l.b16 %v293
    %v1137 = vunpack.c.h.b16 %v293
    %v1138 = vunpack.c.l.b16 %v294
    %v1139 = vunpack.c.h.b16 %v294
    %v1140 = vunpack.c.l.b16 %v295
    %v1141 = vunpack.c.h.b16 %v295
    %v1142 = vunpack.c.l.b16 %v296
    %v1143 = vunpack.c.h.b16 %v296
    %v1144 = vunpack.c.l.b16 %v297
    %v1145 = vunpack.c.h.b16 %v297
    %v1146 = vunpack.c.l.b16 %v298
    %v1147 = vunpack.c.h.b16 %v298
    %v1148 = vunpack.c.l.b16 %v299
    %v1149 = vunpack.c.h.b16 %v299
    %v1150 = vunpack.c.l.b16 %v300
    %v1151 = vunpack.c.h.b16 %v300
    %v1152 = vunpack.c.l.b16 %v301
    %v1153 = vunpack.c.h.b16 %v301
    %v1154 = vunpack.c.l.b16 %v302
    %v1155 = vunpack.c.h.b16 %v302
    %v1156 = vunpack.c.l.b16 %v303
    %v1157 = vunpack.c.h.b16 %v303
    %v1158 = vunpack.c.l.b16 %v304
    %v1159 = vunpack.c.h.b16 %v304
    %v1160 = vunpack.c.l.b16 %v305
    %v1161 = vunpack.c.h.b16 %v305
    %v1162 = vunpack.c.l.b16 %v306
    %v1163 = vunpack.c.h.b16 %v306
    %v1164 = vunpack.c.l.b16 %v307
    %v1165 = vunpack.c.h.b16 %v307
    %v1166 = vunpack.c.l.b16 %v308
    %v1167 = vunpack.c.h.b16 %v308
    %v1168 = vunpack.c.l.b16 %v309
    %v1169 = vunpack.c.h.b16 %v309
    %v1170 = vunpack.c.l.b16 %v310
    %v1171 = vunpack.c.h.b16 %v310
    %v1172 = vunpack.c.l.b16 %v311
    %v1173 = vunpack.c.h.b16 %v311
    %v1174 = vunpack.c.l.b16 %v312
    %v1175 = vunpack.c.h.b16 %v312
    %v1176 = vunpack.c.l.b16 %v313
    %v1177 = vunpack.c.h.b16 %v313
    %v1178 = vunpack.c.l.b16 %v314
    %v1179 = vunpack.c.h.b16 %v314
    %v1180 = vunpack.c.l.b16 %v315
    %v1181 = vunpack.c.h.b16 %v315
    %v1182 = vunpack.c.l.b16 %v316
    %v1183 = vunpack.c.h.b16 %v316
    %v1184 = vunpack.c.l.b16 %v317
    %v1185 = vunpack.c.h.b16 %v317
    %v1186 = vunpack.c.l.b16 %v318
    %v1187 = vunpack.c.h.b16 %v318
    %v1188 = vunpack.c.l.b16 %v319
    %v1189 = vunpack.c.h.b16 %v319
    %v1190 = vunpack.c.l.b16 %v320
    %v1191 = vunpack.c.h.b16 %v320
    %v1192 = vunpack.c.l.b16 %v321
    %v1193 = vunpack.c.h.b16 %v321
    %v1194 = vunpack.c.l.b16 %v322
    %v1195 = vunpack.c.h.b16 %v322
    %v1196 = vunpack.c.l.b16 %v323
    %v1197 = vunpack.c.h.b16 %v323
    %v1198 = vunpack.c.l.b16 %v324
    %v1199 = vunpack.c.h.b16 %v324
    %v1200 = vunpack.c.l.b16 %v325
    %v1201 = vunpack.c.h.b16 %v325
    %v1202 = vunpack.c.l.b16 %v326
    %v1203 = vunpack.c.h.b16 %v326
    %v1204 = vunpack.c.l.b16 %v327
    %v1205 = vunpack.c.h.b16 %v327
    %v1206 = vunpack.c.l.b16 %v328
    %v1207 = vunpack.c.h.b16 %v328
    %v1208 = vunpack.c.l.b16 %v329
    %v1209 = vunpack.c.h.b16 %v329
    %v1210 = vunpack.c.l.b16 %v330
    %v1211 = vunpack.c.h.b16 %v330
    %v1212 = vunpack.c.l.b16 %v331
    %v1213 = vunpack.c.h.b16 %v331
    %v1214 = vunpack.c.l.b16 %v332
    %v1215 = vunpack.c.h.b16 %v332
    %v1216 = vunpack.c.l.b16 %v333
    %v1217 = vunpack.c.h.b16 %v333
    %v1218 = vunpack.c.l.b16 %v334
    %v1219 = vunpack.c.h.b16 %v334
    %v1220 = vunpack.c.l.b16 %v335
    %v1221 = vunpack.c.h.b16 %v335
    %v1222 = vunpack.c.l.b16 %v336
    %v1223 = vunpack.c.h.b16 %v336
    %v1224 = vunpack.c.l.b16 %v337
    %v1225 = vunpack.c.h.b16 %v337
    %v1226 = vunpack.c.l.b16 %v338
    %v1227 = vunpack.c.h.b16 %v338
    %v1228 = vunpack.c.l.b16 %v339
    %v1229 = vunpack.c.h.b16 %v339
    %v1230 = vunpack.c.l.b16 %v340
    %v1231 = vunpack.c.h.b16 %v340
    %v1232 = vunpack.c.l.b16 %v341
    %v1233 = vunpack.c.h.b16 %v341
    %v1234 = vunpack.c.l.b16 %v342
    %v1235 = vunpack.c.h.b16 %v342
    %v1236 = vunpack.c.l.b16 %v343
    %v1237 = vunpack.c.h.b16 %v343
    %v1238 = vunpack.c.l.b16 %v344
    %v1239 = vunpack.c.h.b16 %v344
    %v1240 = vunpack.c.l.b16 %v345
    %v1241 = vunpack.c.h.b16 %v345
    %v1242 = vunpack.c.l.b16 %v346
    %v1243 = vunpack.c.h.b16 %v346
    %v1244 = vunpack.c.l.b16 %v347
    %v1245 = vunpack.c.h.b16 %v347
    %v1246 = vunpack.c.l.b16 %v348
    %v1247 = vunpack.c.h.b16 %v348
    %v1248 = vunpack.c.l.b16 %v349
    %v1249 = vunpack.c.h.b16 %v349
    %v1250 = vunpack.c.l.b16 %v350
    %v1251 = vunpack.c.h.b16 %v350
    %v1252 = vunpack.c.l.b16 %v351
    %v1253 = vunpack.c.h.b16 %v351
    %v1254 = vunpack.c.l.b16 %v352
    %v1255 = vunpack.c.h.b16 %v352
    %v1256 = vunpack.c.l.b16 %v353
    %v1257 = vunpack.c.h.b16 %v353
    %v1258 = vunpack.c.l.b16 %v354
    %v1259 = vunpack.c.h.b16 %v354
    %v1260 = vunpack.c.l.b16 %v355
    %v1261 = vunpack.c.h.b16 %v355
    %v1262 = vunpack.c.l.b16 %v356
    %v1263 = vunpack.c.h.b16 %v356
    %v1264 = vunpack.c.l.b16 %v357
    %v1265 = vunpack.c.h.b16 %v357
    %v1266 = vunpack.c.l.b16 %v358
    %v1267 = vunpack.c.h.b16 %v358
    %v1268 = vunpack.c.l.b16 %v359
    %v1269 = vunpack.c.h.b16 %v359
    %v1270 = vpack.c.b16 %v674, %v670
    %v1271 = vpack.c.b16 %v675, %v671
    %v1272 = vpack.c.b16 %v676, %v672
    %v1273 = vpack.c.b16 %v677, %v673
    %v1274 = vpack.c.b16 %v682, %v678
    %v1275 = vpack.c.b16 %v683, %v679
    %v1276 = vpack.c.b16 %v684, %v680
    %v1277 = vpack.c.b16 %v685, %v681
    %v1278 = vpack.c.b16 %v690, %v686
    %v1279 = vpack.c.b16 %v691, %v687
    %v1280 = vpack.c.b16 %v692, %v688
    %v1281 = vpack.c.b16 %v693, %v689
    %v1282 = vpack.c.b16 %v698, %v694
    %v1283 = vpack.c.b16 %v699, %v695
    %v1284 = vpack.c.b16 %v700, %v696
    %v1285 = vpack.c.b16 %v701, %v697
    %v1286 = vpack.c.b16 %v706, %v702
    %v1287 = vpack.c.b16 %v707, %v703
    %v1288 = vpack.c.b16 %v708, %v704
    %v1289 = vpack.c.b16 %v709, %v705
    %v1290 = vpack.c.b16 %v714, %v710
    %v1291 = vpack.c.b16 %v715, %v711
    %v1292 = vpack.c.b16 %v716, %v712
    %v1293 = vpack.c.b16 %v717, %v713
    %v1294 = vpack.c.b16 %v722, %v718
    %v1295 = vpack.c.b16 %v723, %v719
    %v1296 = vpack.c.b16 %v724, %v720
    %v1297 = vpack.c.b16 %v725, %v721
    %v1298 = vpack.c.b16 %v730, %v726
    %v1299 = vpack.c.b16 %v731, %v727
    %v1300 = vpack.c.b16 %v732, %v728
    %v1301 = vpack.c.b16 %v733, %v729
    %v1302 = vpack.c.b16 %v738, %v734
    %v1303 = vpack.c.b16 %v739, %v735
    %v1304 = vpack.c.b16 %v740, %v736
    %v1305 = vpack.c.b16 %v741, %v737
    %v1306 = vpack.c.b16 %v746, %v742
    %v1307 = vpack.c.b16 %v747, %v743
    %v1308 = vpack.c.b16 %v748, %v744
    %v1309 = vpack.c.b16 %v749, %v745
    %v1310 = vpack.c.b16 %v754, %v750
    %v1311 = vpack.c.b16 %v755, %v751
    %v1312 = vpack.c.b16 %v756, %v752
    %v1313 = vpack.c.b16 %v757, %v753
    %v1314 = vpack.c.b16 %v762, %v758
    %v1315 = vpack.c.b16 %v763, %v759
    %v1316 = vpack.c.b16 %v764, %v760
    %v1317 = vpack.c.b16 %v765, %v761
    %v1318 = vpack.c.b16 %v770, %v766
    %v1319 = vpack.c.b16 %v771, %v767
    %v1320 = vpack.c.b16 %v772, %v768
    %v1321 = vpack.c.b16 %v773, %v769
    %v1322 = vpack.c.b16 %v778, %v774
    %v1323 = vpack.c.b16 %v779, %v775
    %v1324 = vpack.c.b16 %v780, %v776
    %v1325 = vpack.c.b16 %v781, %v777
    %v1326 = vpack.c.b16 %v786, %v782
    %v1327 = vpack.c.b16 %v787, %v783
    %v1328 = vpack.c.b16 %v788, %v784
    %v1329 = vpack.c.b16 %v789, %v785
    %v1330 = vpack.c.b16 %v794, %v790
    %v1331 = vpack.c.b16 %v795, %v791
    %v1332 = vpack.c.b16 %v796, %v792
    %v1333 = vpack.c.b16 %v797, %v793
    %v1334 = vpack.c.b16 %v802, %v798
    %v1335 = vpack.c.b16 %v803, %v799
    %v1336 = vpack.c.b16 %v804, %v800
    %v1337 = vpack.c.b16 %v805, %v801
    %v1338 = vpack.c.b16 %v810, %v806
    %v1339 = vpack.c.b16 %v811, %v807
    %v1340 = vpack.c.b16 %v812, %v808
    %v1341 = vpack.c.b16 %v813, %v809
    %v1342 = vpack.c.b16 %v818, %v814
    %v1343 = vpack.c.b16 %v819, %v815
    %v1344 = vpack.c.b16 %v820, %v816
    %v1345 = vpack.c.b16 %v821, %v817
    %v1346 = vpack.c.b16 %v826, %v822
    %v1347 = vpack.c.b16 %v827, %v823
    %v1348 = vpack.c.b16 %v828, %v824
    %v1349 = vpack.c.b16 %v829, %v825
    %v1350 = vpack.c.b16 %v834, %v830
    %v1351 = vpack.c.b16 %v835, %v831
    %v1352 = vpack.c.b16 %v836, %v832
    %v1353 = vpack.c.b16 %v837, %v833
    %v1354 = vpack.c.b16 %v842, %v838
    %v1355 = vpack.c.b16 %v843, %v839
    %v1356 = vpack.c.b16 %v844, %v840
    %v1357 = vpack.c.b16 %v845, %v841
    %v1358 = vpack.c.b16 %v850, %v846
    %v1359 = vpack.c.b16 %v851, %v847
    %v1360 = vpack.c.b16 %v852, %v848
    %v1361 = vpack.c.b16 %v853, %v849
    %v1362 = vpack.c.b16 %v858, %v854
    %v1363 = vpack.c.b16 %v859, %v855
    %v1364 = vpack.c.b16 %v860, %v856
    %v1365 = vpack.c.b16 %v861, %v857
    %v1366 = vpack.c.b16 %v866, %v862
    %v1367 = vpack.c.b16 %v867, %v863
    %v1368 = vpack.c.b16 %v868, %v864
    %v1369 = vpack.c.b16 %v869, %v865
    %v1370 = vpack.c.b16 %v874, %v870
    %v1371 = vpack.c.b16 %v875, %v871
    %v1372 = vpack.c.b16 %v876, %v872
    %v1373 = vpack.c.b16 %v877, %v873
    %v1374 = vpack.c.b16 %v882, %v878
    %v1375 = vpack.c.b16 %v883, %v879
    %v1376 = vpack.c.b16 %v884, %v880
    %v1377 = vpack.c.b16 %v885, %v881
    %v1378 = vpack.c.b16 %v890, %v886
    %v1379 = vpack.c.b16 %v891, %v887
    %v1380 = vpack.c.b16 %v892, %v888
    %v1381 = vpack.c.b16 %v893, %v889
    %v1382 = vpack.c.b16 %v898, %v894
    %v1383 = vpack.c.b16 %v899, %v895
    %v1384 = vpack.c.b16 %v900, %v896
    %v1385 = vpack.c.b16 %v901, %v897
    %v1386 = vpack.c.b16 %v906, %v902
    %v1387 = vpack.c.b16 %v907, %v903
    %v1388 = vpack.c.b16 %v908, %v904
    %v1389 = vpack.c.b16 %v909, %v905
    %v1390 = vpack.c.b16 %v914, %v910
    %v1391 = vpack.c.b16 %v915, %v911
    %v1392 = vpack.c.b16 %v916, %v912
    %v1393 = vpack.c.b16 %v917, %v913
    %v1394 = vpack.c.b16 %v922, %v918
    %v1395 = vpack.c.b16 %v923, %v919
    %v1396 = vpack.c.b16 %v924, %v920
    %v1397 = vpack.c.b16 %v925, %v921
    %v1398 = vpack.c.b16 %v930, %v926
    %v1399 = vpack.c.b16 %v931, %v927
    %v1400 = vpack.c.b16 %v932, %v928
    %v1401 = vpack.c.b16 %v933, %v929
    %v1402 = vpack.c.b16 %v938, %v934
    %v1403 = vpack.c.b16 %v939, %v935
    %v1404 = vpack.c.b16 %v940, %v936
    %v1405 = vpack.c.b16 %v941, %v937
    %v1406 = vpack.c.b16 %v946, %v942
    %v1407 = vpack.c.b16 %v947, %v943
    %v1408 = vpack.c.b16 %v948, %v944
    %v1409 = vpack.c.b16 %v949, %v945
    %v1410 = vpack.c.b16 %v954, %v950
    %v1411 = vpack.c.b16 %v955, %v951
    %v1412 = vpack.c.b16 %v956, %v952
    %v1413 = vpack.c.b16 %v957, %v953
    %v1414 = vpack.c.b16 %v962, %v958
    %v1415 = vpack.c.b16 %v963, %v959
    %v1416 = vpack.c.b16 %v964, %v960
    %v1417 = vpack.c.b16 %v965, %v961
    %v1418 = vpack.c.b16 %v970, %v966
    %v1419 = vpack.c.b16 %v971, %v967
    %v1420 = vpack.c.b16 %v972, %v968
    %v1421 = vpack.c.b16 %v973, %v969
    %v1422 = vpack.c.b16 %v978, %v974
    %v1423 = vpack.c.b16 %v979, %v975
    %v1424 = vpack.c.b16 %v980, %v976
    %v1425 = vpack.c.b16 %v981, %v977
    %v1426 = vpack.c.b16 %v986, %v982
    %v1427 = vpack.c.b16 %v987, %v983
    %v1428 = vpack.c.b16 %v988, %v984
    %v1429 = vpack.c.b16 %v989, %v985
    %v1430 = vpack.c.b16 %v994, %v990
    %v1431 = vpack.c.b16 %v995, %v991
    %v1432 = vpack.c.b16 %v996, %v992
    %v1433 = vpack.c.b16 %v997, %v993
    %v1434 = vpack.c.b16 %v1002, %v998
    %v1435 = vpack.c.b16 %v1003, %v999
    %v1436 = vpack.c.b16 %v1004, %v1000
    %v1437 = vpack.c.b16 %v1005, %v1001
    %v1438 = vpack.c.b16 %v1010, %v1006
    %v1439 = vpack.c.b16 %v1011, %v1007
    %v1440 = vpack.c.b16 %v1012, %v1008
    %v1441 = vpack.c.b16 %v1013, %v1009
    %v1442 = vpack.c.b16 %v1018, %v1014
    %v1443 = vpack.c.b16 %v1019, %v1015
    %v1444 = vpack.c.b16 %v1020, %v1016
    %v1445 = vpack.c.b16 %v1021, %v1017
    %v1446 = vpack.c.b16 %v1026, %v1022
    %v1447 = vpack.c.b16 %v1027, %v1023
    %v1448 = vpack.c.b16 %v1028, %v1024
    %v1449 = vpack.c.b16 %v1029, %v1025
    %v1450 = vpack.c.b16 %v1034, %v1030
    %v1451 = vpack.c.b16 %v1035, %v1031
    %v1452 = vpack.c.b16 %v1036, %v1032
    %v1453 = vpack.c.b16 %v1037, %v1033
    %v1454 = vpack.c.b16 %v1042, %v1038
    %v1455 = vpack.c.b16 %v1043, %v1039
    %v1456 = vpack.c.b16 %v1044, %v1040
    %v1457 = vpack.c.b16 %v1045, %v1041
    %v1458 = vpack.c.b16 %v1050, %v1046
    %v1459 = vpack.c.b16 %v1051, %v1047
    %v1460 = vpack.c.b16 %v1052, %v1048
    %v1461 = vpack.c.b16 %v1053, %v1049
    %v1462 = vpack.c.b16 %v1058, %v1054
    %v1463 = vpack.c.b16 %v1059, %v1055
    %v1464 = vpack.c.b16 %v1060, %v1056
    %v1465 = vpack.c.b16 %v1061, %v1057
    %v1466 = vpack.c.b16 %v1066, %v1062
    %v1467 = vpack.c.b16 %v1067, %v1063
    %v1468 = vpack.c.b16 %v1068, %v1064
    %v1469 = vpack.c.b16 %v1069, %v1065
    %v1470 = vpack.c.b16 %v1074, %v1070
    %v1471 = vpack.c.b16 %v1075, %v1071
    %v1472 = vpack.c.b16 %v1076, %v1072
    %v1473 = vpack.c.b16 %v1077, %v1073
    %v1474 = vpack.c.b16 %v1082, %v1078
    %v1475 = vpack.c.b16 %v1083, %v1079
    %v1476 = vpack.c.b16 %v1084, %v1080
    %v1477 = vpack.c.b16 %v1085, %v1081
    %v1478 = vpack.c.b16 %v1090, %v1086
    %v1479 = vpack.c.b16 %v1091, %v1087
    %v1480 = vpack.c.b16 %v1092, %v1088
    %v1481 = vpack.c.b16 %v1093, %v1089
    %v1482 = vpack.c.b16 %v1098, %v1094
    %v1483 = vpack.c.b16 %v1099, %v1095
    %v1484 = vpack.c.b16 %v1100, %v1096
    %v1485 = vpack.c.b16 %v1101, %v1097
    %v1486 = vpack.c.b16 %v1106, %v1102
    %v1487 = vpack.c.b16 %v1107, %v1103
    %v1488 = vpack.c.b16 %v1108, %v1104
    %v1489 = vpack.c.b16 %v1109, %v1105
    %v1490 = vpack.c.b16 %v1114, %v1110
    %v1491 = vpack.c.b16 %v1115, %v1111
    %v1492 = vpack.c.b16 %v1116, %v1112
    %v1493 = vpack.c.b16 %v1117, %v1113
    %v1494 = vpack.c.b16 %v1122, %v1118
    %v1495 = vpack.c.b16 %v1123, %v1119
    %v1496 = vpack.c.b16 %v1124, %v1120
    %v1497 = vpack.c.b16 %v1125, %v1121
    %v1498 = vpack.c.b16 %v1130, %v1126
    %v1499 = vpack.c.b16 %v1131, %v1127
    %v1500 = vpack.c.b16 %v1132, %v1128
    %v1501 = vpack.c.b16 %v1133, %v1129
    %v1502 = vpack.c.b16 %v1138, %v1134
    %v1503 = vpack.c.b16 %v1139, %v1135
    %v1504 = vpack.c.b16 %v1140, %v1136
    %v1505 = vpack.c.b16 %v1141, %v1137
    %v1506 = vpack.c.b16 %v1146, %v1142
    %v1507 = vpack.c.b16 %v1147, %v1143
    %v1508 = vpack.c.b16 %v1148, %v1144
    %v1509 = vpack.c.b16 %v1149, %v1145
    %v1510 = vpack.c.b16 %v1154, %v1150
    %v1511 = vpack.c.b16 %v1155, %v1151
    %v1512 = vpack.c.b16 %v1156, %v1152
    %v1513 = vpack.c.b16 %v1157, %v1153
    %v1514 = vpack.c.b16 %v1162, %v1158
    %v1515 = vpack.c.b16 %v1163, %v1159
    %v1516 = vpack.c.b16 %v1164, %v1160
    %v1517 = vpack.c.b16 %v1165, %v1161
    %v1518 = vpack.c.b16 %v1170, %v1166
    %v1519 = vpack.c.b16 %v1171, %v1167
    %v1520 = vpack.c.b16 %v1172, %v1168
    %v1521 = vpack.c.b16 %v1173, %v1169
    %v1522 = vpack.c.b16 %v1178, %v1174
    %v1523 = vpack.c.b16 %v1179, %v1175
    %v1524 = vpack.c.b16 %v1180, %v1176
    %v1525 = vpack.c.b16 %v1181, %v1177
    %v1526 = vpack.c.b16 %v1186, %v1182
    %v1527 = vpack.c.b16 %v1187, %v1183
    %v1528 = vpack.c.b16 %v1188, %v1184
    %v1529 = vpack.c.b16 %v1189, %v1185
    %v1530 = vpack.c.b16 %v1194, %v1190
    %v1531 = vpack.c.b16 %v1195, %v1191
    %v1532 = vpack.c.b16 %v1196, %v1192
    %v1533 = vpack.c.b16 %v1197, %v1193
    %v1534 = vpack.c.b16 %v1202, %v1198
    %v1535 = vpack.c.b16 %v1203, %v1199
    %v1536 = vpack.c.b16 %v1204, %v1200
    %v1537 = vpack.c.b16 %v1205, %v1201
    %v1538 = vpack.c.b16 %v1210, %v1206
    %v1539 = vpack.c.b16 %v1211, %v1207
    %v1540 = vpack.c.b16 %v1212, %v1208
    %v1541 = vpack.c.b16 %v1213, %v1209
    %v1542 = vpack.c.b16 %v1218, %v1214
    %v1543 = vpack.c.b16 %v1219, %v1215
    %v1544 = vpack.c.b16 %v1220, %v1216
    %v1545 = vpack.c.b16 %v1221, %v1217
    %v1546 = vpack.c.b16 %v1226, %v1222
    %v1547 = vpack.c.b16 %v1227, %v1223
    %v1548 = vpack.c.b16 %v1228, %v1224
    %v1549 = vpack.c.b16 %v1229, %v1225
    %v1550 = vpack.c.b16 %v1234, %v1230
    %v1551 = vpack.c.b16 %v1235, %v1231
    %v1552 = vpack.c.b16 %v1236, %v1232
    %v1553 = vpack.c.b16 %v1237, %v1233
    %v1554 = vpack.c.b16 %v1242, %v1238
    %v1555 = vpack.c.b16 %v1243, %v1239
    %v1556 = vpack.c.b16 %v1244, %v1240
    %v1557 = vpack.c.b16 %v1245, %v1241
    %v1558 = vpack.c.b16 %v1250, %v1246
    %v1559 = vpack.c.b16 %v1251, %v1247
    %v1560 = vpack.c.b16 %v1252, %v1248
    %v1561 = vpack.c.b16 %v1253, %v1249
    %v1562 = vpack.c.b16 %v1258, %v1254
    %v1563 = vpack.c.b16 %v1259, %v1255
    %v1564 = vpack.c.b16 %v1260, %v1256
    %v1565 = vpack.c.b16 %v1261, %v1257
    %v1566 = vpack.c.b16 %v1266, %v1262
    %v1567 = vpack.c.b16 %v1267, %v1263
    %v1568 = vpack.c.b16 %v1268, %v1264
    %v1569 = vpack.c.b16 %v1269, %v1265
    %vm1870 = vcmask 392192
    %v1872 = vsel %vm1870, %v59, 0
    %1874 = vmatpush.bf16.msra.mxu0 %v1298
    %1875 = vmatpush.bf16.msra.mxu0 %v1294
    %1876 = vmatpush.bf16.msra.mxu0 %v1290
    %1877 = vmatpush.bf16.msra.mxu0 %v1286
    %1878 = vmatpush.bf16.msra.mxu0 %v1282
    %1879 = vmatpush.bf16.msra.mxu0 %v1278
    %1880 = vmatpush.bf16.msra.mxu0 %v1274
    %1881 = vmatpush.bf16.msra.mxu0 %v1270
    %1882 = vmatmul.bf16.gmra.mxu0 %v50
    %v1883 = vpop.f32.mrf.mxu0
    %v1884 = vadd.f32 %v362, %v1883
    %v1885 = vpop.f32.mrf.mxu0
    %1886 = vdwg.mxu0
    %1887 = vmatpush.bf16.msra.mxu0 %v1330
    %1888 = vmatpush.bf16.msra.mxu0 %v1326
    %1889 = vmatpush.bf16.msra.mxu0 %v1322
    %1890 = vmatpush.bf16.msra.mxu0 %v1318
    %1891 = vmatpush.bf16.msra.mxu0 %v1314
    %1892 = vmatpush.bf16.msra.mxu0 %v1310
    %1893 = vmatpush.bf16.msra.mxu0 %v1306
    %1894 = vmatpush.bf16.msra.mxu0 %v1302
    %1895 = vmatmul.bf16.gmra.mxu0 %v51
    %v1896 = vpop.f32.mrf.mxu0
    %v1897 = vadd.f32 %v1884, %v1896
    %v1898 = vpop.f32.mrf.mxu0
    %1899 = vdwg.mxu0
    %1900 = vmatpush.bf16.msra.mxu0 %v1362
    %1901 = vmatpush.bf16.msra.mxu0 %v1358
    %1902 = vmatpush.bf16.msra.mxu0 %v1354
    %1903 = vmatpush.bf16.msra.mxu0 %v1350
    %1904 = vmatpush.bf16.msra.mxu0 %v1346
    %1905 = vmatpush.bf16.msra.mxu0 %v1342
    %1906 = vmatpush.bf16.msra.mxu0 %v1338
    %1907 = vmatpush.bf16.msra.mxu0 %v1334
    %1908 = vmatmul.bf16.gmra.mxu0 %v52
    %v1909 = vpop.f32.mrf.mxu0
    %v1910 = vadd.f32 %v1897, %v1909
    %v1911 = vpop.f32.mrf.mxu0
    %1912 = vdwg.mxu0
    %1913 = vmatpush.bf16.msra.mxu0 %v1394
    %1914 = vmatpush.bf16.msra.mxu0 %v1390
    %1915 = vmatpush.bf16.msra.mxu0 %v1386
    %1916 = vmatpush.bf16.msra.mxu0 %v1382
    %1917 = vmatpush.bf16.msra.mxu0 %v1378
    %1918 = vmatpush.bf16.msra.mxu0 %v1374
    %1919 = vmatpush.bf16.msra.mxu0 %v1370
    %1920 = vmatpush.bf16.msra.mxu0 %v1366
    %1921 = vmatmul.bf16.gmra.mxu0 %v53
    %v1922 = vpop.f32.mrf.mxu0
    %v1923 = vadd.f32 %v1910, %v1922
    %v1924 = vpop.f32.mrf.mxu0
    %1925 = vdwg.mxu0
    %1926 = vmatpush.bf16.msra.mxu0 %v1426
    %1927 = vmatpush.bf16.msra.mxu0 %v1422
    %1928 = vmatpush.bf16.msra.mxu0 %v1418
    %1929 = vmatpush.bf16.msra.mxu0 %v1414
    %1930 = vmatpush.bf16.msra.mxu0 %v1410
    %1931 = vmatpush.bf16.msra.mxu0 %v1406
    %1932 = vmatpush.bf16.msra.mxu0 %v1402
    %1933 = vmatpush.bf16.msra.mxu0 %v1398
    %1934 = vmatmul.bf16.gmra.mxu0 %v54
    %v1935 = vpop.f32.mrf.mxu0
    %v1936 = vadd.f32 %v1923, %v1935
    %v1937 = vpop.f32.mrf.mxu0
    %1938 = vdwg.mxu0
    %1939 = vmatpush.bf16.msra.mxu0 %v1458
    %1940 = vmatpush.bf16.msra.mxu0 %v1454
    %1941 = vmatpush.bf16.msra.mxu0 %v1450
    %1942 = vmatpush.bf16.msra.mxu0 %v1446
    %1943 = vmatpush.bf16.msra.mxu0 %v1442
    %1944 = vmatpush.bf16.msra.mxu0 %v1438
    %1945 = vmatpush.bf16.msra.mxu0 %v1434
    %1946 = vmatpush.bf16.msra.mxu0 %v1430
    %1947 = vmatmul.bf16.gmra.mxu0 %v55
    %v1948 = vpop.f32.mrf.mxu0
    %v1949 = vadd.f32 %v1936, %v1948
    %v1950 = vpop.f32.mrf.mxu0
    %1951 = vdwg.mxu0
    %1952 = vmatpush.bf16.msra.mxu0 %v1490
    %1953 = vmatpush.bf16.msra.mxu0 %v1486
    %1954 = vmatpush.bf16.msra.mxu0 %v1482
    %1955 = vmatpush.bf16.msra.mxu0 %v1478
    %1956 = vmatpush.bf16.msra.mxu0 %v1474
    %1957 = vmatpush.bf16.msra.mxu0 %v1470
    %1958 = vmatpush.bf16.msra.mxu0 %v1466
    %1959 = vmatpush.bf16.msra.mxu0 %v1462
    %1960 = vmatmul.bf16.gmra.mxu0 %v56
    %v1961 = vpop.f32.mrf.mxu0
    %v1962 = vadd.f32 %v1949, %v1961
    %v1963 = vpop.f32.mrf.mxu0
    %1964 = vdwg.mxu0
    %1965 = vmatpush.bf16.msra.mxu0 %v1522
    %1966 = vmatpush.bf16.msra.mxu0 %v1518
    %1967 = vmatpush.bf16.msra.mxu0 %v1514
    %1968 = vmatpush.bf16.msra.mxu0 %v1510
    %1969 = vmatpush.bf16.msra.mxu0 %v1506
    %1970 = vmatpush.bf16.msra.mxu0 %v1502
    %1971 = vmatpush.bf16.msra.mxu0 %v1498
    %1972 = vmatpush.bf16.msra.mxu0 %v1494
    %1973 = vmatmul.bf16.gmra.mxu0 %v57
    %v1974 = vpop.f32.mrf.mxu0
    %v1975 = vadd.f32 %v1962, %v1974
    %v1976 = vpop.f32.mrf.mxu0
    %1977 = vdwg.mxu0
    %1978 = vmatpush.bf16.msra.mxu0 %v1554
    %1979 = vmatpush.bf16.msra.mxu0 %v1550
    %1980 = vmatpush.bf16.msra.mxu0 %v1546
    %1981 = vmatpush.bf16.msra.mxu0 %v1542
    %1982 = vmatpush.bf16.msra.mxu0 %v1538
    %1983 = vmatpush.bf16.msra.mxu0 %v1534
    %1984 = vmatpush.bf16.msra.mxu0 %v1530
    %1985 = vmatpush.bf16.msra.mxu0 %v1526
    %1986 = vmatmul.bf16.gmra.mxu0 %v58
    %v1987 = vpop.f32.mrf.mxu0
    %v1988 = vadd.f32 %v1975, %v1987
    %v1989 = vpop.f32.mrf.mxu0
    %1990 = vdwg.mxu0
    %1991 = vmatpush.bf16.msra.mxu0 0
    %1992 = vmatpush.bf16.msra.mxu0 0
    %1993 = vmatpush.bf16.msra.mxu0 0
    %1994 = vmatpush.bf16.msra.mxu0 0
    %1995 = vmatpush.bf16.msra.mxu0 0
    %1996 = vmatpush.bf16.msra.mxu0 %v1566
    %1997 = vmatpush.bf16.msra.mxu0 %v1562
    %1998 = vmatpush.bf16.msra.mxu0 %v1558
    %1999 = vmatmul.bf16.gmra.mxu0 %v1872
    %v2000 = vpop.f32.mrf.mxu0
    %v2001 = vadd.f32 %v1988, %v2000
    %v2002 = vpop.f32.mrf.mxu0
    %2003 = vdwg.mxu0
    %2004 = vmatpush.bf16.msra.mxu0 %v1299
    %2005 = vmatpush.bf16.msra.mxu0 %v1295
    %2006 = vmatpush.bf16.msra.mxu0 %v1291
    %2007 = vmatpush.bf16.msra.mxu0 %v1287
    %2008 = vmatpush.bf16.msra.mxu0 %v1283
    %2009 = vmatpush.bf16.msra.mxu0 %v1279
    %2010 = vmatpush.bf16.msra.mxu0 %v1275
    %2011 = vmatpush.bf16.msra.mxu0 %v1271
    %2012 = vmatmul.bf16.gmra.mxu0 %v50
    %v2013 = vpop.f32.mrf.mxu0
    %v2014 = vadd.f32 %v363, %v2013
    %v2015 = vpop.f32.mrf.mxu0
    %2016 = vdwg.mxu0
    %2017 = vmatpush.bf16.msra.mxu0 %v1331
    %2018 = vmatpush.bf16.msra.mxu0 %v1327
    %2019 = vmatpush.bf16.msra.mxu0 %v1323
    %2020 = vmatpush.bf16.msra.mxu0 %v1319
    %2021 = vmatpush.bf16.msra.mxu0 %v1315
    %2022 = vmatpush.bf16.msra.mxu0 %v1311
    %2023 = vmatpush.bf16.msra.mxu0 %v1307
    %2024 = vmatpush.bf16.msra.mxu0 %v1303
    %2025 = vmatmul.bf16.gmra.mxu0 %v51
    %v2026 = vpop.f32.mrf.mxu0
    %v2027 = vadd.f32 %v2014, %v2026
    %v2028 = vpop.f32.mrf.mxu0
    %2029 = vdwg.mxu0
    %2030 = vmatpush.bf16.msra.mxu0 %v1363
    %2031 = vmatpush.bf16.msra.mxu0 %v1359
    %2032 = vmatpush.bf16.msra.mxu0 %v1355
    %2033 = vmatpush.bf16.msra.mxu0 %v1351
    %2034 = vmatpush.bf16.msra.mxu0 %v1347
    %2035 = vmatpush.bf16.msra.mxu0 %v1343
    %2036 = vmatpush.bf16.msra.mxu0 %v1339
    %2037 = vmatpush.bf16.msra.mxu0 %v1335
    %2038 = vmatmul.bf16.gmra.mxu0 %v52
    %v2039 = vpop.f32.mrf.mxu0
    %v2040 = vadd.f32 %v2027, %v2039
    %v2041 = vpop.f32.mrf.mxu0
    %2042 = vdwg.mxu0
    %2043 = vmatpush.bf16.msra.mxu0 %v1395
    %2044 = vmatpush.bf16.msra.mxu0 %v1391
    %2045 = vmatpush.bf16.msra.mxu0 %v1387
    %2046 = vmatpush.bf16.msra.mxu0 %v1383
    %2047 = vmatpush.bf16.msra.mxu0 %v1379
    %2048 = vmatpush.bf16.msra.mxu0 %v1375
    %2049 = vmatpush.bf16.msra.mxu0 %v1371
    %2050 = vmatpush.bf16.msra.mxu0 %v1367
    %2051 = vmatmul.bf16.gmra.mxu0 %v53
    %v2052 = vpop.f32.mrf.mxu0
    %v2053 = vadd.f32 %v2040, %v2052
    %v2054 = vpop.f32.mrf.mxu0
    %2055 = vdwg.mxu0
    %2056 = vmatpush.bf16.msra.mxu0 %v1427
    %2057 = vmatpush.bf16.msra.mxu0 %v1423
    %2058 = vmatpush.bf16.msra.mxu0 %v1419
    %2059 = vmatpush.bf16.msra.mxu0 %v1415
    %2060 = vmatpush.bf16.msra.mxu0 %v1411
    %2061 = vmatpush.bf16.msra.mxu0 %v1407
    %2062 = vmatpush.bf16.msra.mxu0 %v1403
    %2063 = vmatpush.bf16.msra.mxu0 %v1399
    %2064 = vmatmul.bf16.gmra.mxu0 %v54
    %v2065 = vpop.f32.mrf.mxu0
    %v2066 = vadd.f32 %v2053, %v2065
    %v2067 = vpop.f32.mrf.mxu0
    %2068 = vdwg.mxu0
    %2069 = vmatpush.bf16.msra.mxu0 %v1459
    %2070 = vmatpush.bf16.msra.mxu0 %v1455
    %2071 = vmatpush.bf16.msra.mxu0 %v1451
    %2072 = vmatpush.bf16.msra.mxu0 %v1447
    %2073 = vmatpush.bf16.msra.mxu0 %v1443
    %2074 = vmatpush.bf16.msra.mxu0 %v1439
    %2075 = vmatpush.bf16.msra.mxu0 %v1435
    %2076 = vmatpush.bf16.msra.mxu0 %v1431
    %2077 = vmatmul.bf16.gmra.mxu0 %v55
    %v2078 = vpop.f32.mrf.mxu0
    %v2079 = vadd.f32 %v2066, %v2078
    %v2080 = vpop.f32.mrf.mxu0
    %2081 = vdwg.mxu0
    %2082 = vmatpush.bf16.msra.mxu0 %v1491
    %2083 = vmatpush.bf16.msra.mxu0 %v1487
    %2084 = vmatpush.bf16.msra.mxu0 %v1483
    %2085 = vmatpush.bf16.msra.mxu0 %v1479
    %2086 = vmatpush.bf16.msra.mxu0 %v1475
    %2087 = vmatpush.bf16.msra.mxu0 %v1471
    %2088 = vmatpush.bf16.msra.mxu0 %v1467
    %2089 = vmatpush.bf16.msra.mxu0 %v1463
    %2090 = vmatmul.bf16.gmra.mxu0 %v56
    %v2091 = vpop.f32.mrf.mxu0
    %v2092 = vadd.f32 %v2079, %v2091
    %v2093 = vpop.f32.mrf.mxu0
    %2094 = vdwg.mxu0
    %2095 = vmatpush.bf16.msra.mxu0 %v1523
    %2096 = vmatpush.bf16.msra.mxu0 %v1519
    %2097 = vmatpush.bf16.msra.mxu0 %v1515
    %2098 = vmatpush.bf16.msra.mxu0 %v1511
    %2099 = vmatpush.bf16.msra.mxu0 %v1507
    %2100 = vmatpush.bf16.msra.mxu0 %v1503
    %2101 = vmatpush.bf16.msra.mxu0 %v1499
    %2102 = vmatpush.bf16.msra.mxu0 %v1495
    %2103 = vmatmul.bf16.gmra.mxu0 %v57
    %v2104 = vpop.f32.mrf.mxu0
    %v2105 = vadd.f32 %v2092, %v2104
    %v2106 = vpop.f32.mrf.mxu0
    %2107 = vdwg.mxu0
    %2108 = vmatpush.bf16.msra.mxu0 %v1555
    %2109 = vmatpush.bf16.msra.mxu0 %v1551
    %2110 = vmatpush.bf16.msra.mxu0 %v1547
    %2111 = vmatpush.bf16.msra.mxu0 %v1543
    %2112 = vmatpush.bf16.msra.mxu0 %v1539
    %2113 = vmatpush.bf16.msra.mxu0 %v1535
    %2114 = vmatpush.bf16.msra.mxu0 %v1531
    %2115 = vmatpush.bf16.msra.mxu0 %v1527
    %2116 = vmatmul.bf16.gmra.mxu0 %v58
    %v2117 = vpop.f32.mrf.mxu0
    %v2118 = vadd.f32 %v2105, %v2117
    %v2119 = vpop.f32.mrf.mxu0
    %2120 = vdwg.mxu0
    %2121 = vmatpush.bf16.msra.mxu0 0
    %2122 = vmatpush.bf16.msra.mxu0 0
    %2123 = vmatpush.bf16.msra.mxu0 0
    %2124 = vmatpush.bf16.msra.mxu0 0
    %2125 = vmatpush.bf16.msra.mxu0 0
    %2126 = vmatpush.bf16.msra.mxu0 %v1567
    %2127 = vmatpush.bf16.msra.mxu0 %v1563
    %2128 = vmatpush.bf16.msra.mxu0 %v1559
    %2129 = vmatmul.bf16.gmra.mxu0 %v1872
    %v2130 = vpop.f32.mrf.mxu0
    %v2131 = vadd.f32 %v2118, %v2130
    %v2132 = vpop.f32.mrf.mxu0
    %2133 = vdwg.mxu0
    %2134 = vmatpush.bf16.msra.mxu0 %v1300
    %2135 = vmatpush.bf16.msra.mxu0 %v1296
    %2136 = vmatpush.bf16.msra.mxu0 %v1292
    %2137 = vmatpush.bf16.msra.mxu0 %v1288
    %2138 = vmatpush.bf16.msra.mxu0 %v1284
    %2139 = vmatpush.bf16.msra.mxu0 %v1280
    %2140 = vmatpush.bf16.msra.mxu0 %v1276
    %2141 = vmatpush.bf16.msra.mxu0 %v1272
    %2142 = vmatmul.bf16.gmra.mxu0 %v50
    %v2143 = vpop.f32.mrf.mxu0
    %v2144 = vadd.f32 %v364, %v2143
    %v2145 = vpop.f32.mrf.mxu0
    %2146 = vdwg.mxu0
    %2147 = vmatpush.bf16.msra.mxu0 %v1332
    %2148 = vmatpush.bf16.msra.mxu0 %v1328
    %2149 = vmatpush.bf16.msra.mxu0 %v1324
    %2150 = vmatpush.bf16.msra.mxu0 %v1320
    %2151 = vmatpush.bf16.msra.mxu0 %v1316
    %2152 = vmatpush.bf16.msra.mxu0 %v1312
    %2153 = vmatpush.bf16.msra.mxu0 %v1308
    %2154 = vmatpush.bf16.msra.mxu0 %v1304
    %2155 = vmatmul.bf16.gmra.mxu0 %v51
    %v2156 = vpop.f32.mrf.mxu0
    %v2157 = vadd.f32 %v2144, %v2156
    %v2158 = vpop.f32.mrf.mxu0
    %2159 = vdwg.mxu0
    %2160 = vmatpush.bf16.msra.mxu0 %v1364
    %2161 = vmatpush.bf16.msra.mxu0 %v1360
    %2162 = vmatpush.bf16.msra.mxu0 %v1356
    %2163 = vmatpush.bf16.msra.mxu0 %v1352
    %2164 = vmatpush.bf16.msra.mxu0 %v1348
    %2165 = vmatpush.bf16.msra.mxu0 %v1344
    %2166 = vmatpush.bf16.msra.mxu0 %v1340
    %2167 = vmatpush.bf16.msra.mxu0 %v1336
    %2168 = vmatmul.bf16.gmra.mxu0 %v52
    %v2169 = vpop.f32.mrf.mxu0
    %v2170 = vadd.f32 %v2157, %v2169
    %v2171 = vpop.f32.mrf.mxu0
    %2172 = vdwg.mxu0
    %2173 = vmatpush.bf16.msra.mxu0 %v1396
    %2174 = vmatpush.bf16.msra.mxu0 %v1392
    %2175 = vmatpush.bf16.msra.mxu0 %v1388
    %2176 = vmatpush.bf16.msra.mxu0 %v1384
    %2177 = vmatpush.bf16.msra.mxu0 %v1380
    %2178 = vmatpush.bf16.msra.mxu0 %v1376
    %2179 = vmatpush.bf16.msra.mxu0 %v1372
    %2180 = vmatpush.bf16.msra.mxu0 %v1368
    %2181 = vmatmul.bf16.gmra.mxu0 %v53
    %v2182 = vpop.f32.mrf.mxu0
    %v2183 = vadd.f32 %v2170, %v2182
    %v2184 = vpop.f32.mrf.mxu0
    %2185 = vdwg.mxu0
    %2186 = vmatpush.bf16.msra.mxu0 %v1428
    %2187 = vmatpush.bf16.msra.mxu0 %v1424
    %2188 = vmatpush.bf16.msra.mxu0 %v1420
    %2189 = vmatpush.bf16.msra.mxu0 %v1416
    %2190 = vmatpush.bf16.msra.mxu0 %v1412
    %2191 = vmatpush.bf16.msra.mxu0 %v1408
    %2192 = vmatpush.bf16.msra.mxu0 %v1404
    %2193 = vmatpush.bf16.msra.mxu0 %v1400
    %2194 = vmatmul.bf16.gmra.mxu0 %v54
    %v2195 = vpop.f32.mrf.mxu0
    %v2196 = vadd.f32 %v2183, %v2195
    %v2197 = vpop.f32.mrf.mxu0
    %2198 = vdwg.mxu0
    %2199 = vmatpush.bf16.msra.mxu0 %v1460
    %2200 = vmatpush.bf16.msra.mxu0 %v1456
    %2201 = vmatpush.bf16.msra.mxu0 %v1452
    %2202 = vmatpush.bf16.msra.mxu0 %v1448
    %2203 = vmatpush.bf16.msra.mxu0 %v1444
    %2204 = vmatpush.bf16.msra.mxu0 %v1440
    %2205 = vmatpush.bf16.msra.mxu0 %v1436
    %2206 = vmatpush.bf16.msra.mxu0 %v1432
    %2207 = vmatmul.bf16.gmra.mxu0 %v55
    %v2208 = vpop.f32.mrf.mxu0
    %v2209 = vadd.f32 %v2196, %v2208
    %v2210 = vpop.f32.mrf.mxu0
    %2211 = vdwg.mxu0
    %2212 = vmatpush.bf16.msra.mxu0 %v1492
    %2213 = vmatpush.bf16.msra.mxu0 %v1488
    %2214 = vmatpush.bf16.msra.mxu0 %v1484
    %2215 = vmatpush.bf16.msra.mxu0 %v1480
    %2216 = vmatpush.bf16.msra.mxu0 %v1476
    %2217 = vmatpush.bf16.msra.mxu0 %v1472
    %2218 = vmatpush.bf16.msra.mxu0 %v1468
    %2219 = vmatpush.bf16.msra.mxu0 %v1464
    %2220 = vmatmul.bf16.gmra.mxu0 %v56
    %v2221 = vpop.f32.mrf.mxu0
    %v2222 = vadd.f32 %v2209, %v2221
    %v2223 = vpop.f32.mrf.mxu0
    %2224 = vdwg.mxu0
    %2225 = vmatpush.bf16.msra.mxu0 %v1524
    %2226 = vmatpush.bf16.msra.mxu0 %v1520
    %2227 = vmatpush.bf16.msra.mxu0 %v1516
    %2228 = vmatpush.bf16.msra.mxu0 %v1512
    %2229 = vmatpush.bf16.msra.mxu0 %v1508
    %2230 = vmatpush.bf16.msra.mxu0 %v1504
    %2231 = vmatpush.bf16.msra.mxu0 %v1500
    %2232 = vmatpush.bf16.msra.mxu0 %v1496
    %2233 = vmatmul.bf16.gmra.mxu0 %v57
    %v2234 = vpop.f32.mrf.mxu0
    %v2235 = vadd.f32 %v2222, %v2234
    %v2236 = vpop.f32.mrf.mxu0
    %2237 = vdwg.mxu0
    %2238 = vmatpush.bf16.msra.mxu0 %v1556
    %2239 = vmatpush.bf16.msra.mxu0 %v1552
    %2240 = vmatpush.bf16.msra.mxu0 %v1548
    %2241 = vmatpush.bf16.msra.mxu0 %v1544
    %2242 = vmatpush.bf16.msra.mxu0 %v1540
    %2243 = vmatpush.bf16.msra.mxu0 %v1536
    %2244 = vmatpush.bf16.msra.mxu0 %v1532
    %2245 = vmatpush.bf16.msra.mxu0 %v1528
    %2246 = vmatmul.bf16.gmra.mxu0 %v58
    %v2247 = vpop.f32.mrf.mxu0
    %v2248 = vadd.f32 %v2235, %v2247
    %v2249 = vpop.f32.mrf.mxu0
    %2250 = vdwg.mxu0
    %2251 = vmatpush.bf16.msra.mxu0 0
    %2252 = vmatpush.bf16.msra.mxu0 0
    %2253 = vmatpush.bf16.msra.mxu0 0
    %2254 = vmatpush.bf16.msra.mxu0 0
    %2255 = vmatpush.bf16.msra.mxu0 0
    %2256 = vmatpush.bf16.msra.mxu0 %v1568
    %2257 = vmatpush.bf16.msra.mxu0 %v1564
    %2258 = vmatpush.bf16.msra.mxu0 %v1560
    %2259 = vmatmul.bf16.gmra.mxu0 %v1872
    %v2260 = vpop.f32.mrf.mxu0
    %v2261 = vadd.f32 %v2248, %v2260
    %v2262 = vpop.f32.mrf.mxu0
    %2263 = vdwg.mxu0
    %2264 = vmatpush.bf16.msra.mxu0 %v1301
    %2265 = vmatpush.bf16.msra.mxu0 %v1297
    %2266 = vmatpush.bf16.msra.mxu0 %v1293
    %2267 = vmatpush.bf16.msra.mxu0 %v1289
    %2268 = vmatpush.bf16.msra.mxu0 %v1285
    %2269 = vmatpush.bf16.msra.mxu0 %v1281
    %2270 = vmatpush.bf16.msra.mxu0 %v1277
    %2271 = vmatpush.bf16.msra.mxu0 %v1273
    %2272 = vmatmul.bf16.gmra.mxu0 %v50
    %v2273 = vpop.f32.mrf.mxu0
    %v2274 = vadd.f32 %v365, %v2273
    %v2275 = vpop.f32.mrf.mxu0
    %2276 = vdwg.mxu0
    %2277 = vmatpush.bf16.msra.mxu0 %v1333
    %2278 = vmatpush.bf16.msra.mxu0 %v1329
    %2279 = vmatpush.bf16.msra.mxu0 %v1325
    %2280 = vmatpush.bf16.msra.mxu0 %v1321
    %2281 = vmatpush.bf16.msra.mxu0 %v1317
    %2282 = vmatpush.bf16.msra.mxu0 %v1313
    %2283 = vmatpush.bf16.msra.mxu0 %v1309
    %2284 = vmatpush.bf16.msra.mxu0 %v1305
    %2285 = vmatmul.bf16.gmra.mxu0 %v51
    %v2286 = vpop.f32.mrf.mxu0
    %v2287 = vadd.f32 %v2274, %v2286
    %v2288 = vpop.f32.mrf.mxu0
    %2289 = vdwg.mxu0
    %2290 = vmatpush.bf16.msra.mxu0 %v1365
    %2291 = vmatpush.bf16.msra.mxu0 %v1361
    %2292 = vmatpush.bf16.msra.mxu0 %v1357
    %2293 = vmatpush.bf16.msra.mxu0 %v1353
    %2294 = vmatpush.bf16.msra.mxu0 %v1349
    %2295 = vmatpush.bf16.msra.mxu0 %v1345
    %2296 = vmatpush.bf16.msra.mxu0 %v1341
    %2297 = vmatpush.bf16.msra.mxu0 %v1337
    %2298 = vmatmul.bf16.gmra.mxu0 %v52
    %v2299 = vpop.f32.mrf.mxu0
    %v2300 = vadd.f32 %v2287, %v2299
    %v2301 = vpop.f32.mrf.mxu0
    %2302 = vdwg.mxu0
    %2303 = vmatpush.bf16.msra.mxu0 %v1397
    %2304 = vmatpush.bf16.msra.mxu0 %v1393
    %2305 = vmatpush.bf16.msra.mxu0 %v1389
    %2306 = vmatpush.bf16.msra.mxu0 %v1385
    %2307 = vmatpush.bf16.msra.mxu0 %v1381
    %2308 = vmatpush.bf16.msra.mxu0 %v1377
    %2309 = vmatpush.bf16.msra.mxu0 %v1373
    %2310 = vmatpush.bf16.msra.mxu0 %v1369
    %2311 = vmatmul.bf16.gmra.mxu0 %v53
    %v2312 = vpop.f32.mrf.mxu0
    %v2313 = vadd.f32 %v2300, %v2312
    %v2314 = vpop.f32.mrf.mxu0
    %2315 = vdwg.mxu0
    %2316 = vmatpush.bf16.msra.mxu0 %v1429
    %2317 = vmatpush.bf16.msra.mxu0 %v1425
    %2318 = vmatpush.bf16.msra.mxu0 %v1421
    %2319 = vmatpush.bf16.msra.mxu0 %v1417
    %2320 = vmatpush.bf16.msra.mxu0 %v1413
    %2321 = vmatpush.bf16.msra.mxu0 %v1409
    %2322 = vmatpush.bf16.msra.mxu0 %v1405
    %2323 = vmatpush.bf16.msra.mxu0 %v1401
    %2324 = vmatmul.bf16.gmra.mxu0 %v54
    %v2325 = vpop.f32.mrf.mxu0
    %v2326 = vadd.f32 %v2313, %v2325
    %v2327 = vpop.f32.mrf.mxu0
    %2328 = vdwg.mxu0
    %2329 = vmatpush.bf16.msra.mxu0 %v1461
    %2330 = vmatpush.bf16.msra.mxu0 %v1457
    %2331 = vmatpush.bf16.msra.mxu0 %v1453
    %2332 = vmatpush.bf16.msra.mxu0 %v1449
    %2333 = vmatpush.bf16.msra.mxu0 %v1445
    %2334 = vmatpush.bf16.msra.mxu0 %v1441
    %2335 = vmatpush.bf16.msra.mxu0 %v1437
    %2336 = vmatpush.bf16.msra.mxu0 %v1433
    %2337 = vmatmul.bf16.gmra.mxu0 %v55
    %v2338 = vpop.f32.mrf.mxu0
    %v2339 = vadd.f32 %v2326, %v2338
    %v2340 = vpop.f32.mrf.mxu0
    %2341 = vdwg.mxu0
    %2342 = vmatpush.bf16.msra.mxu0 %v1493
    %2343 = vmatpush.bf16.msra.mxu0 %v1489
    %2344 = vmatpush.bf16.msra.mxu0 %v1485
    %2345 = vmatpush.bf16.msra.mxu0 %v1481
    %2346 = vmatpush.bf16.msra.mxu0 %v1477
    %2347 = vmatpush.bf16.msra.mxu0 %v1473
    %2348 = vmatpush.bf16.msra.mxu0 %v1469
    %2349 = vmatpush.bf16.msra.mxu0 %v1465
    %2350 = vmatmul.bf16.gmra.mxu0 %v56
    %v2351 = vpop.f32.mrf.mxu0
    %v2352 = vadd.f32 %v2339, %v2351
    %v2353 = vpop.f32.mrf.mxu0
    %2354 = vdwg.mxu0
    %2355 = vmatpush.bf16.msra.mxu0 %v1525
    %2356 = vmatpush.bf16.msra.mxu0 %v1521
    %2357 = vmatpush.bf16.msra.mxu0 %v1517
    %2358 = vmatpush.bf16.msra.mxu0 %v1513
    %2359 = vmatpush.bf16.msra.mxu0 %v1509
    %2360 = vmatpush.bf16.msra.mxu0 %v1505
    %2361 = vmatpush.bf16.msra.mxu0 %v1501
    %2362 = vmatpush.bf16.msra.mxu0 %v1497
    %2363 = vmatmul.bf16.gmra.mxu0 %v57
    %v2364 = vpop.f32.mrf.mxu0
    %v2365 = vadd.f32 %v2352, %v2364
    %v2366 = vpop.f32.mrf.mxu0
    %2367 = vdwg.mxu0
    %2368 = vmatpush.bf16.msra.mxu0 %v1557
    %2369 = vmatpush.bf16.msra.mxu0 %v1553
    %2370 = vmatpush.bf16.msra.mxu0 %v1549
    %2371 = vmatpush.bf16.msra.mxu0 %v1545
    %2372 = vmatpush.bf16.msra.mxu0 %v1541
    %2373 = vmatpush.bf16.msra.mxu0 %v1537
    %2374 = vmatpush.bf16.msra.mxu0 %v1533
    %2375 = vmatpush.bf16.msra.mxu0 %v1529
    %2376 = vmatmul.bf16.gmra.mxu0 %v58
    %v2377 = vpop.f32.mrf.mxu0
    %v2378 = vadd.f32 %v2365, %v2377
    %v2379 = vpop.f32.mrf.mxu0
    %2380 = vdwg.mxu0
    %2381 = vmatpush.bf16.msra.mxu0 0
    %2382 = vmatpush.bf16.msra.mxu0 0
    %2383 = vmatpush.bf16.msra.mxu0 0
    %2384 = vmatpush.bf16.msra.mxu0 0
    %2385 = vmatpush.bf16.msra.mxu0 0
    %2386 = vmatpush.bf16.msra.mxu0 %v1569
    %2387 = vmatpush.bf16.msra.mxu0 %v1565
    %2388 = vmatpush.bf16.msra.mxu0 %v1561
    %2389 = vmatmul.bf16.gmra.mxu0 %v1872
    %v2390 = vpop.f32.mrf.mxu0
    %v2391 = vadd.f32 %v2378, %v2390
    %v2392 = vpop.f32.mrf.mxu0
    %2393 = vdwg.mxu0
    %v2394 = vmax.f32 %v2001, 0.0
    %v2395 = vmax.f32 %v2131, 0.0
    %v2396 = vmax.f32 %v2261, 0.0
    %v2397 = vmax.f32 %v2391, 0.0
    %v2398 = vpack.c.bf16 %v2394, %v2394
    %v2399 = vpack.c.bf16 %v2395, %v2395
    %v2400 = vpack.c.bf16 %v2396, %v2396
    %v2401 = vpack.c.bf16 %v2397, %v2397
    %v2402 = vld [vmem:[%s4] sm:$0xf]
    %v2403 = vld [vmem:[%s4 + $0x4] sm:$0xf]
    %v2404 = vld [vmem:[%s4 + $0x8] sm:$0xf]
    %v2405 = vld [vmem:[%s4 + $0xc] sm:$0xf]
    %v2406 = vld [vmem:[%s4 + $0x10] sm:$0xf]
    %v2407 = vld [vmem:[%s4 + $0x14] sm:$0xf]
    %v2408 = vld [vmem:[%s4 + $0x18] sm:$0xf]
    %v2409 = vld [vmem:[%s4 + $0x1c] sm:$0xf]
    %v2410 = vld [vmem:[%s4 + $0x20] sm:$0xf]
    %v2411 = vld [vmem:[%s4 + $0x24] sm:$0xf]
    %v2412 = vld [vmem:[%s4 + $0x28] sm:$0xf]
    %v2413 = vld [vmem:[%s4 + $0x2c] sm:$0xf]
    %v2414 = vld [vmem:[%s4 + $0x30] sm:$0xf]
    %v2415 = vld [vmem:[%s4 + $0x34] sm:$0xf]
    %v2416 = vld [vmem:[%s4 + $0x38] sm:$0xf]
    %v2417 = vld [vmem:[%s4 + $0x3c] sm:$0xf]
    %v2418 = vld [vmem:[%s4 + $0x40] sm:$0xf]
    %v2419 = vld [vmem:[%s4 + $0x44] sm:$0xf]
    %v2420 = vld [vmem:[%s4 + $0x48] sm:$0xf]
    %v2421 = vld [vmem:[%s4 + $0x4c] sm:$0xf]
    %v2422 = vld [vmem:[%s4 + $0x50] sm:$0xf]
    %v2423 = vld [vmem:[%s4 + $0x54] sm:$0xf]
    %v2424 = vld [vmem:[%s4 + $0x58] sm:$0xf]
    %v2425 = vld [vmem:[%s4 + $0x5c] sm:$0xf]
    %v2426 = vld [vmem:[%s4 + $0x60] sm:$0xf]
    %v2427 = vld [vmem:[%s4 + $0x64] sm:$0xf]
    %v2428 = vld [vmem:[%s4 + $0x68] sm:$0xf]
    %v2429 = vld [vmem:[%s4 + $0x6c] sm:$0xf]
    %v2430 = vld [vmem:[%s4 + $0x70] sm:$0xf]
    %v2431 = vld [vmem:[%s4 + $0x74] sm:$0xf]
    %v2432 = vld [vmem:[%s4 + $0x78] sm:$0xf]
    %v2433 = vld [vmem:[%s4 + $0x7c] sm:$0xf]
    %v2434 = vld [vmem:[%s4 + $0x80] sm:$0xf]
    %v2435 = vld [vmem:[%s4 + $0x84] sm:$0xf]
    %v2436 = vld [vmem:[%s4 + $0x88] sm:$0xf]
    %v2437 = vld [vmem:[%s4 + $0x8c] sm:$0xf]
    %v2438 = vld [vmem:[%s4 + $0x90] sm:$0xf]
    %v2439 = vld [vmem:[%s4 + $0x94] sm:$0xf]
    %v2440 = vld [vmem:[%s4 + $0x98] sm:$0xf]
    %v2441 = vld [vmem:[%s4 + $0x9c] sm:$0xf]
    %v2442 = vld [vmem:[%s4 + $0xa0] sm:$0xf]
    %v2443 = vld [vmem:[%s4 + $0xa4] sm:$0xf]
    %v2444 = vld [vmem:[%s4 + $0xa8] sm:$0xf]
    %v2445 = vld [vmem:[%s4 + $0xac] sm:$0xf]
    %v2446 = vld [vmem:[%s4 + $0xb0] sm:$0xf]
    %v2447 = vld [vmem:[%s4 + $0xb4] sm:$0xf]
    %v2448 = vld [vmem:[%s4 + $0xb8] sm:$0xf]
    %v2449 = vld [vmem:[%s4 + $0xbc] sm:$0xf]
    %v2450 = vld [vmem:[%s4 + $0xc0] sm:$0xf]
    %v2451 = vld [vmem:[%s4 + $0xc4] sm:$0xf]
    %v2452 = vld [vmem:[%s5] sm:$0x1]
    %v2454 = vperm.slane %v2452, 0
    %v2506 = vunpack.c.l.b16 %v2402
    %v2507 = vunpack.c.l.b16 %v2403
    %v2508 = vunpack.c.l.b16 %v2404
    %v2509 = vunpack.c.l.b16 %v2405
    %v2510 = vunpack.c.l.b16 %v2406
    %v2511 = vunpack.c.l.b16 %v2407
    %v2512 = vunpack.c.l.b16 %v2408
    %v2513 = vunpack.c.l.b16 %v2409
    %v2514 = vunpack.c.l.b16 %v2410
    %v2515 = vunpack.c.l.b16 %v2411
    %v2516 = vunpack.c.l.b16 %v2412
    %v2517 = vunpack.c.l.b16 %v2413
    %v2518 = vunpack.c.l.b16 %v2414
    %v2519 = vunpack.c.l.b16 %v2415
    %v2520 = vunpack.c.l.b16 %v2416
    %v2521 = vunpack.c.l.b16 %v2417
    %v2522 = vunpack.c.l.b16 %v2418
    %v2523 = vunpack.c.l.b16 %v2419
    %v2524 = vunpack.c.l.b16 %v2420
    %v2525 = vunpack.c.l.b16 %v2421
    %v2526 = vunpack.c.l.b16 %v2422
    %v2527 = vunpack.c.l.b16 %v2423
    %v2528 = vunpack.c.l.b16 %v2424
    %v2529 = vunpack.c.l.b16 %v2425
    %v2530 = vunpack.c.l.b16 %v2426
    %v2531 = vunpack.c.l.b16 %v2427
    %v2532 = vunpack.c.l.b16 %v2428
    %v2533 = vunpack.c.l.b16 %v2429
    %v2534 = vunpack.c.l.b16 %v2430
    %v2535 = vunpack.c.l.b16 %v2431
    %v2536 = vunpack.c.l.b16 %v2432
    %v2537 = vunpack.c.l.b16 %v2433
    %v2538 = vunpack.c.l.b16 %v2434
    %v2539 = vunpack.c.l.b16 %v2435
    %v2540 = vunpack.c.l.b16 %v2436
    %v2541 = vunpack.c.l.b16 %v2437
    %v2542 = vunpack.c.l.b16 %v2438
    %v2543 = vunpack.c.l.b16 %v2439
    %v2544 = vunpack.c.l.b16 %v2440
    %v2545 = vunpack.c.l.b16 %v2441
    %v2546 = vunpack.c.l.b16 %v2442
    %v2547 = vunpack.c.l.b16 %v2443
    %v2548 = vunpack.c.l.b16 %v2444
    %v2549 = vunpack.c.l.b16 %v2445
    %v2550 = vunpack.c.l.b16 %v2446
    %v2551 = vunpack.c.l.b16 %v2447
    %v2552 = vunpack.c.l.b16 %v2448
    %v2553 = vunpack.c.l.b16 %v2449
    %v2554 = vunpack.c.l.b16 %v2450
    %v2555 = vunpack.c.l.b16 %v2451
    %v2556 = vpack.c.b16 %v2507, %v2506
    %v2557 = vpack.c.b16 %v2509, %v2508
    %v2558 = vpack.c.b16 %v2511, %v2510
    %v2559 = vpack.c.b16 %v2513, %v2512
    %v2560 = vpack.c.b16 %v2515, %v2514
    %v2561 = vpack.c.b16 %v2517, %v2516
    %v2562 = vpack.c.b16 %v2519, %v2518
    %v2563 = vpack.c.b16 %v2521, %v2520
    %v2564 = vpack.c.b16 %v2523, %v2522
    %v2565 = vpack.c.b16 %v2525, %v2524
    %v2566 = vpack.c.b16 %v2527, %v2526
    %v2567 = vpack.c.b16 %v2529, %v2528
    %v2568 = vpack.c.b16 %v2531, %v2530
    %v2569 = vpack.c.b16 %v2533, %v2532
    %v2570 = vpack.c.b16 %v2535, %v2534
    %v2571 = vpack.c.b16 %v2537, %v2536
    %v2572 = vpack.c.b16 %v2539, %v2538
    %v2573 = vpack.c.b16 %v2541, %v2540
    %v2574 = vpack.c.b16 %v2543, %v2542
    %v2575 = vpack.c.b16 %v2545, %v2544
    %v2576 = vpack.c.b16 %v2547, %v2546
    %v2577 = vpack.c.b16 %v2549, %v2548
    %v2578 = vpack.c.b16 %v2551, %v2550
    %v2579 = vpack.c.b16 %v2553, %v2552
    %v2580 = vpack.c.b16 %v2555, %v2554
    %vm2606 = vcmask 130048
    %v2608 = vsel %vm2606, %v2401, 0
    %2610 = vmatpush.bf16.msra.mxu0 %v2563
    %2611 = vmatpush.bf16.msra.mxu0 %v2562
    %2612 = vmatpush.bf16.msra.mxu0 %v2561
    %2613 = vmatpush.bf16.msra.mxu0 %v2560
    %2614 = vmatpush.bf16.msra.mxu0 %v2559
    %2615 = vmatpush.bf16.msra.mxu0 %v2558
    %2616 = vmatpush.bf16.msra.mxu0 %v2557
    %2617 = vmatpush.bf16.msra.mxu0 %v2556
    %2618 = vmatmul.bf16.gmra.mxu0 %v2398
    %v2619 = vpop.f32.mrf.mxu0
    %v2620 = vadd.f32 %v2454, %v2619
    %v2621 = vpop.f32.mrf.mxu0
    %2622 = vdwg.mxu0
    %2623 = vmatpush.bf16.msra.mxu0 %v2571
    %2624 = vmatpush.bf16.msra.mxu0 %v2570
    %2625 = vmatpush.bf16.msra.mxu0 %v2569
    %2626 = vmatpush.bf16.msra.mxu0 %v2568
    %2627 = vmatpush.bf16.msra.mxu0 %v2567
    %2628 = vmatpush.bf16.msra.mxu0 %v2566
    %2629 = vmatpush.bf16.msra.mxu0 %v2565
    %2630 = vmatpush.bf16.msra.mxu0 %v2564
    %2631 = vmatmul.bf16.gmra.mxu0 %v2399
    %v2632 = vpop.f32.mrf.mxu0
    %v2633 = vadd.f32 %v2620, %v2632
    %v2634 = vpop.f32.mrf.mxu0
    %2635 = vdwg.mxu0
    %2636 = vmatpush.bf16.msra.mxu0 %v2579
    %2637 = vmatpush.bf16.msra.mxu0 %v2578
    %2638 = vmatpush.bf16.msra.mxu0 %v2577
    %2639 = vmatpush.bf16.msra.mxu0 %v2576
    %2640 = vmatpush.bf16.msra.mxu0 %v2575
    %2641 = vmatpush.bf16.msra.mxu0 %v2574
    %2642 = vmatpush.bf16.msra.mxu0 %v2573
    %2643 = vmatpush.bf16.msra.mxu0 %v2572
    %2644 = vmatmul.bf16.gmra.mxu0 %v2400
    %v2645 = vpop.f32.mrf.mxu0
    %v2646 = vadd.f32 %v2633, %v2645
    %v2647 = vpop.f32.mrf.mxu0
    %2648 = vdwg.mxu0
    %2649 = vmatpush.bf16.msra.mxu0 0
    %2650 = vmatpush.bf16.msra.mxu0 0
    %2651 = vmatpush.bf16.msra.mxu0 0
    %2652 = vmatpush.bf16.msra.mxu0 0
    %2653 = vmatpush.bf16.msra.mxu0 0
    %2654 = vmatpush.bf16.msra.mxu0 0
    %2655 = vmatpush.bf16.msra.mxu0 0
    %2656 = vmatpush.bf16.msra.mxu0 %v2580
    %2657 = vmatmul.bf16.gmra.mxu0 %v2608
    %v2658 = vpop.f32.mrf.mxu0
    %v2659 = vadd.f32 %v2646, %v2658
    %v2660 = vpop.f32.mrf.mxu0
    %2661 = vdwg.mxu0
    %v2662 = vld [vmem:[%s1] sm:$0xff]
    %v2663 = vmul.f32 %v2659, 0.5
    %v2664 = vmul.f32 %v2663, 1.442695
    %v2665 = vpow.pop %v2664
    %2667 = vrot.lane.b32.xlu0 %v2665, 108
    %v2668 = vpop.permute.xlu0 %2667
    %v2670 = vmul.f32 %v2662, %v2668
    %v2671 = vadd.f32 %v2659, %v2670
    %v2672 = vpack.c.bf16 %v2671, %v2671
    %v2673 = vld [vmem:[%s6] sm:$0xff]
    %v2674 = vld [vmem:[%s6 + $0x8] sm:$0xff]
    %v2675 = vld [vmem:[%s6 + $0x10] sm:$0xff]
    %v2676 = vld [vmem:[%s6 + $0x18] sm:$0xff]
    %v2677 = vld [vmem:[%s6 + $0x20] sm:$0x33]
    %v2678 = vld [vmem:[%s6 + $0x28] sm:$0x33]
    %v2679 = vld [vmem:[%s7] sm:$0xf]
    %v2681 = vperm.slane %v2679, 0
    %v2682 = vperm.slane %v2679, 1
    %v2683 = vperm.slane %v2679, 2
    %v2684 = vperm.slane %v2679, 3
    %v2695 = vunpack.c.l.b16 %v2673
    %v2696 = vunpack.c.h.b16 %v2673
    %v2697 = vunpack.c.l.b16 %v2674
    %v2698 = vunpack.c.h.b16 %v2674
    %v2699 = vunpack.c.l.b16 %v2675
    %v2700 = vunpack.c.h.b16 %v2675
    %v2701 = vunpack.c.l.b16 %v2676
    %v2702 = vunpack.c.h.b16 %v2676
    %v2703 = vunpack.c.l.b16 %v2677
    %v2704 = vunpack.c.h.b16 %v2677
    %v2705 = vunpack.c.l.b16 %v2678
    %v2706 = vunpack.c.h.b16 %v2678
    %v2707 = vpack.c.b16 %v2699, %v2695
    %v2708 = vpack.c.b16 %v2700, %v2696
    %v2709 = vpack.c.b16 %v2701, %v2697
    %v2710 = vpack.c.b16 %v2702, %v2698
    %v2711 = vpack.c.b16 %v2703, %v2703
    %v2712 = vpack.c.b16 %v2704, %v2704
    %v2713 = vpack.c.b16 %v2705, %v2705
    %v2714 = vpack.c.b16 %v2706, %v2706
    %vm2719 = vcmask 162816
    %v2721 = vsel %vm2719, %v2672, 0
    %vm2723 = vcmask 1041408
    %v2725 = vsel %vm2723, %v2711, 0
    %v2728 = vsel %vm2723, %v2712, 0
    %v2731 = vsel %vm2723, %v2713, 0
    %v2734 = vsel %vm2723, %v2714, 0
    %2736 = vmatpush.bf16.msra.mxu0 0
    %2737 = vmatpush.bf16.msra.mxu0 0
    %2738 = vmatpush.bf16.msra.mxu0 0
    %2739 = vmatpush.bf16.msra.mxu0 0
    %2740 = vmatpush.bf16.msra.mxu0 0
    %2741 = vmatpush.bf16.msra.mxu0 0
    %2742 = vmatpush.bf16.msra.mxu0 %v2725
    %2743 = vmatpush.bf16.msra.mxu0 %v2707
    %2744 = vmatmul.bf16.gmra.mxu0 %v2721
    %v2745 = vpop.f32.mrf.mxu0
    %v2746 = vadd.f32 %v2681, %v2745
    %v2747 = vpop.f32.mrf.mxu0
    %2748 = vdwg.mxu0
    %2749 = vmatpush.bf16.msra.mxu0 0
    %2750 = vmatpush.bf16.msra.mxu0 0
    %2751 = vmatpush.bf16.msra.mxu0 0
    %2752 = vmatpush.bf16.msra.mxu0 0
    %2753 = vmatpush.bf16.msra.mxu0 0
    %2754 = vmatpush.bf16.msra.mxu0 0
    %2755 = vmatpush.bf16.msra.mxu0 %v2728
    %2756 = vmatpush.bf16.msra.mxu0 %v2708
    %2757 = vmatmul.bf16.gmra.mxu0 %v2721
    %v2758 = vpop.f32.mrf.mxu0
    %v2759 = vadd.f32 %v2682, %v2758
    %v2760 = vpop.f32.mrf.mxu0
    %2761 = vdwg.mxu0
    %2762 = vmatpush.bf16.msra.mxu0 0
    %2763 = vmatpush.bf16.msra.mxu0 0
    %2764 = vmatpush.bf16.msra.mxu0 0
    %2765 = vmatpush.bf16.msra.mxu0 0
    %2766 = vmatpush.bf16.msra.mxu0 0
    %2767 = vmatpush.bf16.msra.mxu0 0
    %2768 = vmatpush.bf16.msra.mxu0 %v2731
    %2769 = vmatpush.bf16.msra.mxu0 %v2709
    %2770 = vmatmul.bf16.gmra.mxu0 %v2721
    %v2771 = vpop.f32.mrf.mxu0
    %v2772 = vadd.f32 %v2683, %v2771
    %v2773 = vpop.f32.mrf.mxu0
    %2774 = vdwg.mxu0
    %2775 = vmatpush.bf16.msra.mxu0 0
    %2776 = vmatpush.bf16.msra.mxu0 0
    %2777 = vmatpush.bf16.msra.mxu0 0
    %2778 = vmatpush.bf16.msra.mxu0 0
    %2779 = vmatpush.bf16.msra.mxu0 0
    %2780 = vmatpush.bf16.msra.mxu0 0
    %2781 = vmatpush.bf16.msra.mxu0 %v2734
    %2782 = vmatpush.bf16.msra.mxu0 %v2710
    %2783 = vmatmul.bf16.gmra.mxu0 %v2721
    %v2784 = vpop.f32.mrf.mxu0
    %v2785 = vadd.f32 %v2684, %v2784
    %v2786 = vpop.f32.mrf.mxu0
    %2787 = vdwg.mxu0
    %v2788 = vmax.f32 %v2746, 0.0
    %v2789 = vmax.f32 %v2759, 0.0
    %v2790 = vmax.f32 %v2772, 0.0
    %v2791 = vmax.f32 %v2785, 0.0
    %v2792 = vpack.c.bf16 %v2788, %v2788
    %v2793 = vpack.c.bf16 %v2789, %v2789
    %v2794 = vpack.c.bf16 %v2790, %v2790
    %v2795 = vpack.c.bf16 %v2791, %v2791
    %v2796 = vld [vmem:[%s8] sm:$0xff]
    %v2797 = vld [vmem:[%s8 + $0x8] sm:$0xff]
    %v2798 = vld [vmem:[%s8 + $0x10] sm:$0xff]
    %v2799 = vld [vmem:[%s8 + $0x18] sm:$0xff]
    %v2800 = vld [vmem:[%s8 + $0x20] sm:$0xff]
    %v2801 = vld [vmem:[%s8 + $0x28] sm:$0xff]
    %v2802 = vld [vmem:[%s8 + $0x30] sm:$0xff]
    %v2803 = vld [vmem:[%s8 + $0x38] sm:$0xff]
    %v2804 = vld [vmem:[%s8 + $0x40] sm:$0xff]
    %v2805 = vld [vmem:[%s8 + $0x48] sm:$0xff]
    %v2806 = vld [vmem:[%s8 + $0x50] sm:$0xff]
    %v2807 = vld [vmem:[%s8 + $0x58] sm:$0xff]
    %v2808 = vld [vmem:[%s8 + $0x60] sm:$0xff]
    %v2809 = vld [vmem:[%s8 + $0x68] sm:$0xff]
    %v2810 = vld [vmem:[%s8 + $0x70] sm:$0xff]
    %v2811 = vld [vmem:[%s8 + $0x78] sm:$0xff]
    %v2812 = vld [vmem:[%s8 + $0x80] sm:$0xff]
    %v2813 = vld [vmem:[%s8 + $0x88] sm:$0xff]
    %v2814 = vld [vmem:[%s8 + $0x90] sm:$0xff]
    %v2815 = vld [vmem:[%s8 + $0x98] sm:$0xff]
    %v2816 = vld [vmem:[%s8 + $0xa0] sm:$0xff]
    %v2817 = vld [vmem:[%s8 + $0xa8] sm:$0xff]
    %v2818 = vld [vmem:[%s8 + $0xb0] sm:$0xff]
    %v2819 = vld [vmem:[%s8 + $0xb8] sm:$0xff]
    %v2820 = vld [vmem:[%s8 + $0xc0] sm:$0xff]
    %v2821 = vld [vmem:[%s8 + $0xc8] sm:$0xff]
    %v2822 = vld [vmem:[%s8 + $0xd0] sm:$0xff]
    %v2823 = vld [vmem:[%s8 + $0xd8] sm:$0xff]
    %v2824 = vld [vmem:[%s8 + $0xe0] sm:$0xff]
    %v2825 = vld [vmem:[%s8 + $0xe8] sm:$0xff]
    %v2826 = vld [vmem:[%s8 + $0xf0] sm:$0xff]
    %v2827 = vld [vmem:[%s8 + $0xf8] sm:$0xff]
    %v2828 = vld [vmem:[%s8 + $0x100] sm:$0xff]
    %v2829 = vld [vmem:[%s8 + $0x108] sm:$0xff]
    %v2830 = vld [vmem:[%s8 + $0x110] sm:$0xff]
    %v2831 = vld [vmem:[%s8 + $0x118] sm:$0xff]
    %v2832 = vld [vmem:[%s8 + $0x120] sm:$0xff]
    %v2833 = vld [vmem:[%s8 + $0x128] sm:$0xff]
    %v2834 = vld [vmem:[%s8 + $0x130] sm:$0xff]
    %v2835 = vld [vmem:[%s8 + $0x138] sm:$0xff]
    %v2836 = vld [vmem:[%s8 + $0x140] sm:$0xff]
    %v2837 = vld [vmem:[%s8 + $0x148] sm:$0xff]
    %v2838 = vld [vmem:[%s8 + $0x150] sm:$0xff]
    %v2839 = vld [vmem:[%s8 + $0x158] sm:$0xff]
    %v2840 = vld [vmem:[%s8 + $0x160] sm:$0xff]
    %v2841 = vld [vmem:[%s8 + $0x168] sm:$0xff]
    %v2842 = vld [vmem:[%s8 + $0x170] sm:$0xff]
    %v2843 = vld [vmem:[%s8 + $0x178] sm:$0xff]
    %v2844 = vld [vmem:[%s8 + $0x180] sm:$0xff]
    %v2845 = vld [vmem:[%s8 + $0x188] sm:$0xff]
    %v2846 = vld [vmem:[%s8 + $0x190] sm:$0xff]
    %v2847 = vld [vmem:[%s8 + $0x198] sm:$0xff]
    %v2848 = vld [vmem:[%s8 + $0x1a0] sm:$0xff]
    %v2849 = vld [vmem:[%s8 + $0x1a8] sm:$0xff]
    %v2850 = vld [vmem:[%s8 + $0x1b0] sm:$0xff]
    %v2851 = vld [vmem:[%s8 + $0x1b8] sm:$0xff]
    %v2852 = vld [vmem:[%s8 + $0x1c0] sm:$0xff]
    %v2853 = vld [vmem:[%s8 + $0x1c8] sm:$0xff]
    %v2854 = vld [vmem:[%s8 + $0x1d0] sm:$0xff]
    %v2855 = vld [vmem:[%s8 + $0x1d8] sm:$0xff]
    %v2856 = vld [vmem:[%s8 + $0x1e0] sm:$0xff]
    %v2857 = vld [vmem:[%s8 + $0x1e8] sm:$0xff]
    %v2858 = vld [vmem:[%s8 + $0x1f0] sm:$0xff]
    %v2859 = vld [vmem:[%s8 + $0x1f8] sm:$0xff]
    %v2860 = vld [vmem:[%s8 + $0x200] sm:$0xff]
    %v2861 = vld [vmem:[%s8 + $0x208] sm:$0xff]
    %v2862 = vld [vmem:[%s8 + $0x210] sm:$0xff]
    %v2863 = vld [vmem:[%s8 + $0x218] sm:$0xff]
    %v2864 = vld [vmem:[%s8 + $0x220] sm:$0xff]
    %v2865 = vld [vmem:[%s8 + $0x228] sm:$0xff]
    %v2866 = vld [vmem:[%s8 + $0x230] sm:$0xff]
    %v2867 = vld [vmem:[%s8 + $0x238] sm:$0xff]
    %v2868 = vld [vmem:[%s8 + $0x240] sm:$0xff]
    %v2869 = vld [vmem:[%s8 + $0x248] sm:$0xff]
    %v2870 = vld [vmem:[%s8 + $0x250] sm:$0xff]
    %v2871 = vld [vmem:[%s8 + $0x258] sm:$0xff]
    %v2872 = vld [vmem:[%s8 + $0x260] sm:$0xff]
    %v2873 = vld [vmem:[%s8 + $0x268] sm:$0xff]
    %v2874 = vld [vmem:[%s8 + $0x270] sm:$0xff]
    %v2875 = vld [vmem:[%s8 + $0x278] sm:$0xff]
    %v2876 = vld [vmem:[%s8 + $0x280] sm:$0xff]
    %v2877 = vld [vmem:[%s8 + $0x288] sm:$0xff]
    %v2878 = vld [vmem:[%s8 + $0x290] sm:$0xff]
    %v2879 = vld [vmem:[%s8 + $0x298] sm:$0xff]
    %v2880 = vld [vmem:[%s8 + $0x2a0] sm:$0xff]
    %v2881 = vld [vmem:[%s8 + $0x2a8] sm:$0xff]
    %v2882 = vld [vmem:[%s8 + $0x2b0] sm:$0xff]
    %v2883 = vld [vmem:[%s8 + $0x2b8] sm:$0xff]
    %v2884 = vld [vmem:[%s8 + $0x2c0] sm:$0xff]
    %v2885 = vld [vmem:[%s8 + $0x2c8] sm:$0xff]
    %v2886 = vld [vmem:[%s8 + $0x2d0] sm:$0xff]
    %v2887 = vld [vmem:[%s8 + $0x2d8] sm:$0xff]
    %v2888 = vld [vmem:[%s8 + $0x2e0] sm:$0xff]
    %v2889 = vld [vmem:[%s8 + $0x2e8] sm:$0xff]
    %v2890 = vld [vmem:[%s8 + $0x2f0] sm:$0xff]
    %v2891 = vld [vmem:[%s8 + $0x2f8] sm:$0xff]
    %v2892 = vld [vmem:[%s8 + $0x300] sm:$0xff]
    %v2893 = vld [vmem:[%s8 + $0x308] sm:$0xff]
    %v2894 = vld [vmem:[%s8 + $0x310] sm:$0xff]
    %v2895 = vld [vmem:[%s8 + $0x318] sm:$0xff]
    %v2896 = vld [vmem:[%s8 + $0x320] sm:$0xff]
    %v2897 = vld [vmem:[%s8 + $0x328] sm:$0xff]
    %v2898 = vld [vmem:[%s8 + $0x330] sm:$0xff]
    %v2899 = vld [vmem:[%s8 + $0x338] sm:$0xff]
    %v2900 = vld [vmem:[%s8 + $0x340] sm:$0xff]
    %v2901 = vld [vmem:[%s8 + $0x348] sm:$0xff]
    %v2902 = vld [vmem:[%s8 + $0x350] sm:$0xff]
    %v2903 = vld [vmem:[%s8 + $0x358] sm:$0xff]
    %v2904 = vld [vmem:[%s8 + $0x360] sm:$0xff]
    %v2905 = vld [vmem:[%s8 + $0x368] sm:$0xff]
    %v2906 = vld [vmem:[%s8 + $0x370] sm:$0xff]
    %v2907 = vld [vmem:[%s8 + $0x378] sm:$0xff]
    %v2908 = vld [vmem:[%s8 + $0x380] sm:$0xff]
    %v2909 = vld [vmem:[%s8 + $0x388] sm:$0xff]
    %v2910 = vld [vmem:[%s8 + $0x390] sm:$0xff]
    %v2911 = vld [vmem:[%s8 + $0x398] sm:$0xff]
    %v2912 = vld [vmem:[%s8 + $0x3a0] sm:$0xff]
    %v2913 = vld [vmem:[%s8 + $0x3a8] sm:$0xff]
    %v2914 = vld [vmem:[%s8 + $0x3b0] sm:$0xff]
    %v2915 = vld [vmem:[%s8 + $0x3b8] sm:$0xff]
    %v2916 = vld [vmem:[%s8 + $0x3c0] sm:$0xff]
    %v2917 = vld [vmem:[%s8 + $0x3c8] sm:$0xff]
    %v2918 = vld [vmem:[%s8 + $0x3d0] sm:$0xff]
    %v2919 = vld [vmem:[%s8 + $0x3d8] sm:$0xff]
    %v2920 = vld [vmem:[%s8 + $0x3e0] sm:$0xff]
    %v2921 = vld [vmem:[%s8 + $0x3e8] sm:$0xff]
    %v2922 = vld [vmem:[%s8 + $0x3f0] sm:$0xff]
    %v2923 = vld [vmem:[%s8 + $0x3f8] sm:$0xff]
    %v2924 = vld [vmem:[%s8 + $0x400] sm:$0xff]
    %v2925 = vld [vmem:[%s8 + $0x408] sm:$0xff]
    %v2926 = vld [vmem:[%s8 + $0x410] sm:$0xff]
    %v2927 = vld [vmem:[%s8 + $0x418] sm:$0xff]
    %v2928 = vld [vmem:[%s8 + $0x420] sm:$0xff]
    %v2929 = vld [vmem:[%s8 + $0x428] sm:$0xff]
    %v2930 = vld [vmem:[%s8 + $0x430] sm:$0xff]
    %v2931 = vld [vmem:[%s8 + $0x438] sm:$0xff]
    %v2932 = vld [vmem:[%s8 + $0x440] sm:$0xff]
    %v2933 = vld [vmem:[%s8 + $0x448] sm:$0xff]
    %v2934 = vld [vmem:[%s8 + $0x450] sm:$0xff]
    %v2935 = vld [vmem:[%s8 + $0x458] sm:$0xff]
    %v2936 = vld [vmem:[%s8 + $0x460] sm:$0xff]
    %v2937 = vld [vmem:[%s8 + $0x468] sm:$0xff]
    %v2938 = vld [vmem:[%s8 + $0x470] sm:$0xff]
    %v2939 = vld [vmem:[%s8 + $0x478] sm:$0xff]
    %v2940 = vld [vmem:[%s8 + $0x480] sm:$0xff]
    %v2941 = vld [vmem:[%s8 + $0x488] sm:$0xff]
    %v2942 = vld [vmem:[%s8 + $0x490] sm:$0xff]
    %v2943 = vld [vmem:[%s8 + $0x498] sm:$0xff]
    %v2944 = vld [vmem:[%s8 + $0x4a0] sm:$0xff]
    %v2945 = vld [vmem:[%s8 + $0x4a8] sm:$0xff]
    %v2946 = vld [vmem:[%s8 + $0x4b0] sm:$0xff]
    %v2947 = vld [vmem:[%s8 + $0x4b8] sm:$0xff]
    %v2948 = vld [vmem:[%s8 + $0x4c0] sm:$0xff]
    %v2949 = vld [vmem:[%s8 + $0x4c8] sm:$0xff]
    %v2950 = vld [vmem:[%s8 + $0x4d0] sm:$0xff]
    %v2951 = vld [vmem:[%s8 + $0x4d8] sm:$0xff]
    %v2952 = vld [vmem:[%s8 + $0x4e0] sm:$0xff]
    %v2953 = vld [vmem:[%s8 + $0x4e8] sm:$0xff]
    %v2954 = vld [vmem:[%s8 + $0x4f0] sm:$0xff]
    %v2955 = vld [vmem:[%s8 + $0x4f8] sm:$0xff]
    %v2956 = vld [vmem:[%s8 + $0x500] sm:$0xff]
    %v2957 = vld [vmem:[%s8 + $0x508] sm:$0xff]
    %v2958 = vld [vmem:[%s8 + $0x510] sm:$0xff]
    %v2959 = vld [vmem:[%s8 + $0x518] sm:$0xff]
    %v2960 = vld [vmem:[%s8 + $0x520] sm:$0xff]
    %v2961 = vld [vmem:[%s8 + $0x528] sm:$0xff]
    %v2962 = vld [vmem:[%s8 + $0x530] sm:$0xff]
    %v2963 = vld [vmem:[%s8 + $0x538] sm:$0xff]
    %v2964 = vld [vmem:[%s8 + $0x540] sm:$0xff]
    %v2965 = vld [vmem:[%s8 + $0x548] sm:$0xff]
    %v2966 = vld [vmem:[%s8 + $0x550] sm:$0xff]
    %v2967 = vld [vmem:[%s8 + $0x558] sm:$0xff]
    %v2968 = vld [vmem:[%s8 + $0x560] sm:$0xff]
    %v2969 = vld [vmem:[%s8 + $0x568] sm:$0xff]
    %v2970 = vld [vmem:[%s8 + $0x570] sm:$0xff]
    %v2971 = vld [vmem:[%s8 + $0x578] sm:$0xff]
    %v2972 = vld [vmem:[%s8 + $0x580] sm:$0xff]
    %v2973 = vld [vmem:[%s8 + $0x588] sm:$0xff]
    %v2974 = vld [vmem:[%s8 + $0x590] sm:$0xff]
    %v2975 = vld [vmem:[%s8 + $0x598] sm:$0xff]
    %v2976 = vld [vmem:[%s8 + $0x5a0] sm:$0xff]
    %v2977 = vld [vmem:[%s8 + $0x5a8] sm:$0xff]
    %v2978 = vld [vmem:[%s8 + $0x5b0] sm:$0xff]
    %v2979 = vld [vmem:[%s8 + $0x5b8] sm:$0xff]
    %v2980 = vld [vmem:[%s8 + $0x5c0] sm:$0xff]
    %v2981 = vld [vmem:[%s8 + $0x5c8] sm:$0xff]
    %v2982 = vld [vmem:[%s8 + $0x5d0] sm:$0xff]
    %v2983 = vld [vmem:[%s8 + $0x5d8] sm:$0xff]
    %v2984 = vld [vmem:[%s8 + $0x5e0] sm:$0xff]
    %v2985 = vld [vmem:[%s8 + $0x5e8] sm:$0xff]
    %v2986 = vld [vmem:[%s8 + $0x5f0] sm:$0xff]
    %v2987 = vld [vmem:[%s8 + $0x5f8] sm:$0xff]
    %v2988 = vld [vmem:[%s8 + $0x600] sm:$0xff]
    %v2989 = vld [vmem:[%s8 + $0x608] sm:$0xff]
    %v2990 = vld [vmem:[%s8 + $0x610] sm:$0xff]
    %v2991 = vld [vmem:[%s8 + $0x618] sm:$0xff]
    %v2992 = vld [vmem:[%s8 + $0x620] sm:$0xff]
    %v2993 = vld [vmem:[%s8 + $0x628] sm:$0xff]
    %v2994 = vld [vmem:[%s8 + $0x630] sm:$0xff]
    %v2995 = vld [vmem:[%s8 + $0x638] sm:$0xff]
    %v2996 = vld [vmem:[%s8 + $0x640] sm:$0xff]
    %v2997 = vld [vmem:[%s8 + $0x648] sm:$0xff]
    %v2998 = vld [vmem:[%s8 + $0x650] sm:$0xff]
    %v2999 = vld [vmem:[%s8 + $0x658] sm:$0xff]
    %v3000 = vld [vmem:[%s8 + $0x660] sm:$0xff]
    %v3001 = vld [vmem:[%s8 + $0x668] sm:$0xff]
    %v3002 = vld [vmem:[%s8 + $0x670] sm:$0xff]
    %v3003 = vld [vmem:[%s8 + $0x678] sm:$0xff]
    %v3004 = vld [vmem:[%s8 + $0x680] sm:$0xff]
    %v3005 = vld [vmem:[%s8 + $0x688] sm:$0xff]
    %v3006 = vld [vmem:[%s8 + $0x690] sm:$0xff]
    %v3007 = vld [vmem:[%s8 + $0x698] sm:$0xff]
    %v3008 = vld [vmem:[%s8 + $0x6a0] sm:$0xff]
    %v3009 = vld [vmem:[%s8 + $0x6a8] sm:$0xff]
    %v3010 = vld [vmem:[%s8 + $0x6b0] sm:$0xff]
    %v3011 = vld [vmem:[%s8 + $0x6b8] sm:$0xff]
    %v3012 = vld [vmem:[%s8 + $0x6c0] sm:$0xff]
    %v3013 = vld [vmem:[%s8 + $0x6c8] sm:$0xff]
    %v3014 = vld [vmem:[%s8 + $0x6d0] sm:$0xff]
    %v3015 = vld [vmem:[%s8 + $0x6d8] sm:$0xff]
    %v3016 = vld [vmem:[%s8 + $0x6e0] sm:$0xff]
    %v3017 = vld [vmem:[%s8 + $0x6e8] sm:$0xff]
    %v3018 = vld [vmem:[%s8 + $0x6f0] sm:$0xff]
    %v3019 = vld [vmem:[%s8 + $0x6f8] sm:$0xff]
    %v3020 = vld [vmem:[%s8 + $0x700] sm:$0xff]
    %v3021 = vld [vmem:[%s8 + $0x708] sm:$0xff]
    %v3022 = vld [vmem:[%s8 + $0x710] sm:$0xff]
    %v3023 = vld [vmem:[%s8 + $0x718] sm:$0xff]
    %v3024 = vld [vmem:[%s8 + $0x720] sm:$0xff]
    %v3025 = vld [vmem:[%s8 + $0x728] sm:$0xff]
    %v3026 = vld [vmem:[%s8 + $0x730] sm:$0xff]
    %v3027 = vld [vmem:[%s8 + $0x738] sm:$0xff]
    %v3028 = vld [vmem:[%s8 + $0x740] sm:$0xff]
    %v3029 = vld [vmem:[%s8 + $0x748] sm:$0xff]
    %v3030 = vld [vmem:[%s8 + $0x750] sm:$0xff]
    %v3031 = vld [vmem:[%s8 + $0x758] sm:$0xff]
    %v3032 = vld [vmem:[%s8 + $0x760] sm:$0xff]
    %v3033 = vld [vmem:[%s8 + $0x768] sm:$0xff]
    %v3034 = vld [vmem:[%s8 + $0x770] sm:$0xff]
    %v3035 = vld [vmem:[%s8 + $0x778] sm:$0xff]
    %v3036 = vld [vmem:[%s8 + $0x780] sm:$0xff]
    %v3037 = vld [vmem:[%s8 + $0x788] sm:$0xff]
    %v3038 = vld [vmem:[%s8 + $0x790] sm:$0xff]
    %v3039 = vld [vmem:[%s8 + $0x798] sm:$0xff]
    %v3040 = vld [vmem:[%s8 + $0x7a0] sm:$0xff]
    %v3041 = vld [vmem:[%s8 + $0x7a8] sm:$0xff]
    %v3042 = vld [vmem:[%s8 + $0x7b0] sm:$0xff]
    %v3043 = vld [vmem:[%s8 + $0x7b8] sm:$0xff]
    %v3044 = vld [vmem:[%s8 + $0x7c0] sm:$0xff]
    %v3045 = vld [vmem:[%s8 + $0x7c8] sm:$0xff]
    %v3046 = vld [vmem:[%s9] sm:$0xff]
    %v3047 = vld [vmem:[%s9 + $0x8] sm:$0x3]
    %v3050 = vperm.slane %v3046, 0
    %v3051 = vperm.slane %v3046, 1
    %v3052 = vperm.slane %v3046, 2
    %v3053 = vperm.slane %v3046, 3
    %v3054 = vperm.slane %v3046, 4
    %v3055 = vperm.slane %v3046, 5
    %v3056 = vperm.slane %v3046, 6
    %v3057 = vperm.slane %v3046, 7
    %v3058 = vperm.slane %v3047, 0
    %v3059 = vperm.slane %v3047, 1
    %v3320 = vunpack.c.l.b16 %v2796
    %v3321 = vunpack.c.h.b16 %v2796
    %v3322 = vunpack.c.l.b16 %v2797
    %v3323 = vunpack.c.h.b16 %v2797
    %v3324 = vunpack.c.l.b16 %v2798
    %v3325 = vunpack.c.h.b16 %v2798
    %v3326 = vunpack.c.l.b16 %v2799
    %v3327 = vunpack.c.h.b16 %v2799
    %v3328 = vunpack.c.l.b16 %v2800
    %v3329 = vunpack.c.h.b16 %v2800
    %v3330 = vunpack.c.l.b16 %v2801
    %v3331 = vunpack.c.h.b16 %v2801
    %v3332 = vunpack.c.l.b16 %v2802
    %v3333 = vunpack.c.h.b16 %v2802
    %v3334 = vunpack.c.l.b16 %v2803
    %v3335 = vunpack.c.h.b16 %v2803
    %v3336 = vunpack.c.l.b16 %v2804
    %v3337 = vunpack.c.h.b16 %v2804
    %v3338 = vunpack.c.l.b16 %v2805
    %v3339 = vunpack.c.h.b16 %v2805
    %v3340 = vunpack.c.l.b16 %v2806
    %v3341 = vunpack.c.h.b16 %v2806
    %v3342 = vunpack.c.l.b16 %v2807
    %v3343 = vunpack.c.h.b16 %v2807
    %v3344 = vunpack.c.l.b16 %v2808
    %v3345 = vunpack.c.h.b16 %v2808
    %v3346 = vunpack.c.l.b16 %v2809
    %v3347 = vunpack.c.h.b16 %v2809
    %v3348 = vunpack.c.l.b16 %v2810
    %v3349 = vunpack.c.h.b16 %v2810
    %v3350 = vunpack.c.l.b16 %v2811
    %v3351 = vunpack.c.h.b16 %v2811
    %v3352 = vunpack.c.l.b16 %v2812
    %v3353 = vunpack.c.h.b16 %v2812
    %v3354 = vunpack.c.l.b16 %v2813
    %v3355 = vunpack.c.h.b16 %v2813
    %v3356 = vunpack.c.l.b16 %v2814
    %v3357 = vunpack.c.h.b16 %v2814
    %v3358 = vunpack.c.l.b16 %v2815
    %v3359 = vunpack.c.h.b16 %v2815
    %v3360 = vunpack.c.l.b16 %v2816
    %v3361 = vunpack.c.h.b16 %v2816
    %v3362 = vunpack.c.l.b16 %v2817
    %v3363 = vunpack.c.h.b16 %v2817
    %v3364 = vunpack.c.l.b16 %v2818
    %v3365 = vunpack.c.h.b16 %v2818
    %v3366 = vunpack.c.l.b16 %v2819
    %v3367 = vunpack.c.h.b16 %v2819
    %v3368 = vunpack.c.l.b16 %v2820
    %v3369 = vunpack.c.h.b16 %v2820
    %v3370 = vunpack.c.l.b16 %v2821
    %v3371 = vunpack.c.h.b16 %v2821
    %v3372 = vunpack.c.l.b16 %v2822
    %v3373 = vunpack.c.h.b16 %v2822
    %v3374 = vunpack.c.l.b16 %v2823
    %v3375 = vunpack.c.h.b16 %v2823
    %v3376 = vunpack.c.l.b16 %v2824
    %v3377 = vunpack.c.h.b16 %v2824
    %v3378 = vunpack.c.l.b16 %v2825
    %v3379 = vunpack.c.h.b16 %v2825
    %v3380 = vunpack.c.l.b16 %v2826
    %v3381 = vunpack.c.h.b16 %v2826
    %v3382 = vunpack.c.l.b16 %v2827
    %v3383 = vunpack.c.h.b16 %v2827
    %v3384 = vunpack.c.l.b16 %v2828
    %v3385 = vunpack.c.h.b16 %v2828
    %v3386 = vunpack.c.l.b16 %v2829
    %v3387 = vunpack.c.h.b16 %v2829
    %v3388 = vunpack.c.l.b16 %v2830
    %v3389 = vunpack.c.h.b16 %v2830
    %v3390 = vunpack.c.l.b16 %v2831
    %v3391 = vunpack.c.h.b16 %v2831
    %v3392 = vunpack.c.l.b16 %v2832
    %v3393 = vunpack.c.h.b16 %v2832
    %v3394 = vunpack.c.l.b16 %v2833
    %v3395 = vunpack.c.h.b16 %v2833
    %v3396 = vunpack.c.l.b16 %v2834
    %v3397 = vunpack.c.h.b16 %v2834
    %v3398 = vunpack.c.l.b16 %v2835
    %v3399 = vunpack.c.h.b16 %v2835
    %v3400 = vunpack.c.l.b16 %v2836
    %v3401 = vunpack.c.h.b16 %v2836
    %v3402 = vunpack.c.l.b16 %v2837
    %v3403 = vunpack.c.h.b16 %v2837
    %v3404 = vunpack.c.l.b16 %v2838
    %v3405 = vunpack.c.h.b16 %v2838
    %v3406 = vunpack.c.l.b16 %v2839
    %v3407 = vunpack.c.h.b16 %v2839
    %v3408 = vunpack.c.l.b16 %v2840
    %v3409 = vunpack.c.h.b16 %v2840
    %v3410 = vunpack.c.l.b16 %v2841
    %v3411 = vunpack.c.h.b16 %v2841
    %v3412 = vunpack.c.l.b16 %v2842
    %v3413 = vunpack.c.h.b16 %v2842
    %v3414 = vunpack.c.l.b16 %v2843
    %v3415 = vunpack.c.h.b16 %v2843
    %v3416 = vunpack.c.l.b16 %v2844
    %v3417 = vunpack.c.h.b16 %v2844
    %v3418 = vunpack.c.l.b16 %v2845
    %v3419 = vunpack.c.h.b16 %v2845
    %v3420 = vunpack.c.l.b16 %v2846
    %v3421 = vunpack.c.h.b16 %v2846
    %v3422 = vunpack.c.l.b16 %v2847
    %v3423 = vunpack.c.h.b16 %v2847
    %v3424 = vunpack.c.l.b16 %v2848
    %v3425 = vunpack.c.h.b16 %v2848
    %v3426 = vunpack.c.l.b16 %v2849
    %v3427 = vunpack.c.h.b16 %v2849
    %v3428 = vunpack.c.l.b16 %v2850
    %v3429 = vunpack.c.h.b16 %v2850
    %v3430 = vunpack.c.l.b16 %v2851
    %v3431 = vunpack.c.h.b16 %v2851
    %v3432 = vunpack.c.l.b16 %v2852
    %v3433 = vunpack.c.h.b16 %v2852
    %v3434 = vunpack.c.l.b16 %v2853
    %v3435 = vunpack.c.h.b16 %v2853
    %v3436 = vunpack.c.l.b16 %v2854
    %v3437 = vunpack.c.h.b16 %v2854
    %v3438 = vunpack.c.l.b16 %v2855
    %v3439 = vunpack.c.h.b16 %v2855
    %v3440 = vunpack.c.l.b16 %v2856
    %v3441 = vunpack.c.h.b16 %v2856
    %v3442 = vunpack.c.l.b16 %v2857
    %v3443 = vunpack.c.h.b16 %v2857
    %v3444 = vunpack.c.l.b16 %v2858
    %v3445 = vunpack.c.h.b16 %v2858
    %v3446 = vunpack.c.l.b16 %v2859
    %v3447 = vunpack.c.h.b16 %v2859
    %v3448 = vunpack.c.l.b16 %v2860
    %v3449 = vunpack.c.h.b16 %v2860
    %v3450 = vunpack.c.l.b16 %v2861
    %v3451 = vunpack.c.h.b16 %v2861
    %v3452 = vunpack.c.l.b16 %v2862
    %v3453 = vunpack.c.h.b16 %v2862
    %v3454 = vunpack.c.l.b16 %v2863
    %v3455 = vunpack.c.h.b16 %v2863
    %v3456 = vunpack.c.l.b16 %v2864
    %v3457 = vunpack.c.h.b16 %v2864
    %v3458 = vunpack.c.l.b16 %v2865
    %v3459 = vunpack.c.h.b16 %v2865
    %v3460 = vunpack.c.l.b16 %v2866
    %v3461 = vunpack.c.h.b16 %v2866
    %v3462 = vunpack.c.l.b16 %v2867
    %v3463 = vunpack.c.h.b16 %v2867
    %v3464 = vunpack.c.l.b16 %v2868
    %v3465 = vunpack.c.h.b16 %v2868
    %v3466 = vunpack.c.l.b16 %v2869
    %v3467 = vunpack.c.h.b16 %v2869
    %v3468 = vunpack.c.l.b16 %v2870
    %v3469 = vunpack.c.h.b16 %v2870
    %v3470 = vunpack.c.l.b16 %v2871
    %v3471 = vunpack.c.h.b16 %v2871
    %v3472 = vunpack.c.l.b16 %v2872
    %v3473 = vunpack.c.h.b16 %v2872
    %v3474 = vunpack.c.l.b16 %v2873
    %v3475 = vunpack.c.h.b16 %v2873
    %v3476 = vunpack.c.l.b16 %v2874
    %v3477 = vunpack.c.h.b16 %v2874
    %v3478 = vunpack.c.l.b16 %v2875
    %v3479 = vunpack.c.h.b16 %v2875
    %v3480 = vunpack.c.l.b16 %v2876
    %v3481 = vunpack.c.h.b16 %v2876
    %v3482 = vunpack.c.l.b16 %v2877
    %v3483 = vunpack.c.h.b16 %v2877
    %v3484 = vunpack.c.l.b16 %v2878
    %v3485 = vunpack.c.h.b16 %v2878
    %v3486 = vunpack.c.l.b16 %v2879
    %v3487 = vunpack.c.h.b16 %v2879
    %v3488 = vunpack.c.l.b16 %v2880
    %v3489 = vunpack.c.h.b16 %v2880
    %v3490 = vunpack.c.l.b16 %v2881
    %v3491 = vunpack.c.h.b16 %v2881
    %v3492 = vunpack.c.l.b16 %v2882
    %v3493 = vunpack.c.h.b16 %v2882
    %v3494 = vunpack.c.l.b16 %v2883
    %v3495 = vunpack.c.h.b16 %v2883
    %v3496 = vunpack.c.l.b16 %v2884
    %v3497 = vunpack.c.h.b16 %v2884
    %v3498 = vunpack.c.l.b16 %v2885
    %v3499 = vunpack.c.h.b16 %v2885
    %v3500 = vunpack.c.l.b16 %v2886
    %v3501 = vunpack.c.h.b16 %v2886
    %v3502 = vunpack.c.l.b16 %v2887
    %v3503 = vunpack.c.h.b16 %v2887
    %v3504 = vunpack.c.l.b16 %v2888
    %v3505 = vunpack.c.h.b16 %v2888
    %v3506 = vunpack.c.l.b16 %v2889
    %v3507 = vunpack.c.h.b16 %v2889
    %v3508 = vunpack.c.l.b16 %v2890
    %v3509 = vunpack.c.h.b16 %v2890
    %v3510 = vunpack.c.l.b16 %v2891
    %v3511 = vunpack.c.h.b16 %v2891
    %v3512 = vunpack.c.l.b16 %v2892
    %v3513 = vunpack.c.h.b16 %v2892
    %v3514 = vunpack.c.l.b16 %v2893
    %v3515 = vunpack.c.h.b16 %v2893
    %v3516 = vunpack.c.l.b16 %v2894
    %v3517 = vunpack.c.h.b16 %v2894
    %v3518 = vunpack.c.l.b16 %v2895
    %v3519 = vunpack.c.h.b16 %v2895
    %v3520 = vunpack.c.l.b16 %v2896
    %v3521 = vunpack.c.h.b16 %v2896
    %v3522 = vunpack.c.l.b16 %v2897
    %v3523 = vunpack.c.h.b16 %v2897
    %v3524 = vunpack.c.l.b16 %v2898
    %v3525 = vunpack.c.h.b16 %v2898
    %v3526 = vunpack.c.l.b16 %v2899
    %v3527 = vunpack.c.h.b16 %v2899
    %v3528 = vunpack.c.l.b16 %v2900
    %v3529 = vunpack.c.h.b16 %v2900
    %v3530 = vunpack.c.l.b16 %v2901
    %v3531 = vunpack.c.h.b16 %v2901
    %v3532 = vunpack.c.l.b16 %v2902
    %v3533 = vunpack.c.h.b16 %v2902
    %v3534 = vunpack.c.l.b16 %v2903
    %v3535 = vunpack.c.h.b16 %v2903
    %v3536 = vunpack.c.l.b16 %v2904
    %v3537 = vunpack.c.h.b16 %v2904
    %v3538 = vunpack.c.l.b16 %v2905
    %v3539 = vunpack.c.h.b16 %v2905
    %v3540 = vunpack.c.l.b16 %v2906
    %v3541 = vunpack.c.h.b16 %v2906
    %v3542 = vunpack.c.l.b16 %v2907
    %v3543 = vunpack.c.h.b16 %v2907
    %v3544 = vunpack.c.l.b16 %v2908
    %v3545 = vunpack.c.h.b16 %v2908
    %v3546 = vunpack.c.l.b16 %v2909
    %v3547 = vunpack.c.h.b16 %v2909
    %v3548 = vunpack.c.l.b16 %v2910
    %v3549 = vunpack.c.h.b16 %v2910
    %v3550 = vunpack.c.l.b16 %v2911
    %v3551 = vunpack.c.h.b16 %v2911
    %v3552 = vunpack.c.l.b16 %v2912
    %v3553 = vunpack.c.h.b16 %v2912
    %v3554 = vunpack.c.l.b16 %v2913
    %v3555 = vunpack.c.h.b16 %v2913
    %v3556 = vunpack.c.l.b16 %v2914
    %v3557 = vunpack.c.h.b16 %v2914
    %v3558 = vunpack.c.l.b16 %v2915
    %v3559 = vunpack.c.h.b16 %v2915
    %v3560 = vunpack.c.l.b16 %v2916
    %v3561 = vunpack.c.h.b16 %v2916
    %v3562 = vunpack.c.l.b16 %v2917
    %v3563 = vunpack.c.h.b16 %v2917
    %v3564 = vunpack.c.l.b16 %v2918
    %v3565 = vunpack.c.h.b16 %v2918
    %v3566 = vunpack.c.l.b16 %v2919
    %v3567 = vunpack.c.h.b16 %v2919
    %v3568 = vunpack.c.l.b16 %v2920
    %v3569 = vunpack.c.h.b16 %v2920
    %v3570 = vunpack.c.l.b16 %v2921
    %v3571 = vunpack.c.h.b16 %v2921
    %v3572 = vunpack.c.l.b16 %v2922
    %v3573 = vunpack.c.h.b16 %v2922
    %v3574 = vunpack.c.l.b16 %v2923
    %v3575 = vunpack.c.h.b16 %v2923
    %v3576 = vunpack.c.l.b16 %v2924
    %v3577 = vunpack.c.h.b16 %v2924
    %v3578 = vunpack.c.l.b16 %v2925
    %v3579 = vunpack.c.h.b16 %v2925
    %v3580 = vunpack.c.l.b16 %v2926
    %v3581 = vunpack.c.h.b16 %v2926
    %v3582 = vunpack.c.l.b16 %v2927
    %v3583 = vunpack.c.h.b16 %v2927
    %v3584 = vunpack.c.l.b16 %v2928
    %v3585 = vunpack.c.h.b16 %v2928
    %v3586 = vunpack.c.l.b16 %v2929
    %v3587 = vunpack.c.h.b16 %v2929
    %v3588 = vunpack.c.l.b16 %v2930
    %v3589 = vunpack.c.h.b16 %v2930
    %v3590 = vunpack.c.l.b16 %v2931
    %v3591 = vunpack.c.h.b16 %v2931
    %v3592 = vunpack.c.l.b16 %v2932
    %v3593 = vunpack.c.h.b16 %v2932
    %v3594 = vunpack.c.l.b16 %v2933
    %v3595 = vunpack.c.h.b16 %v2933
    %v3596 = vunpack.c.l.b16 %v2934
    %v3597 = vunpack.c.h.b16 %v2934
    %v3598 = vunpack.c.l.b16 %v2935
    %v3599 = vunpack.c.h.b16 %v2935
    %v3600 = vunpack.c.l.b16 %v2936
    %v3601 = vunpack.c.h.b16 %v2936
    %v3602 = vunpack.c.l.b16 %v2937
    %v3603 = vunpack.c.h.b16 %v2937
    %v3604 = vunpack.c.l.b16 %v2938
    %v3605 = vunpack.c.h.b16 %v2938
    %v3606 = vunpack.c.l.b16 %v2939
    %v3607 = vunpack.c.h.b16 %v2939
    %v3608 = vunpack.c.l.b16 %v2940
    %v3609 = vunpack.c.h.b16 %v2940
    %v3610 = vunpack.c.l.b16 %v2941
    %v3611 = vunpack.c.h.b16 %v2941
    %v3612 = vunpack.c.l.b16 %v2942
    %v3613 = vunpack.c.h.b16 %v2942
    %v3614 = vunpack.c.l.b16 %v2943
    %v3615 = vunpack.c.h.b16 %v2943
    %v3616 = vunpack.c.l.b16 %v2944
    %v3617 = vunpack.c.h.b16 %v2944
    %v3618 = vunpack.c.l.b16 %v2945
    %v3619 = vunpack.c.h.b16 %v2945
    %v3620 = vunpack.c.l.b16 %v2946
    %v3621 = vunpack.c.h.b16 %v2946
    %v3622 = vunpack.c.l.b16 %v2947
    %v3623 = vunpack.c.h.b16 %v2947
    %v3624 = vunpack.c.l.b16 %v2948
    %v3625 = vunpack.c.h.b16 %v2948
    %v3626 = vunpack.c.l.b16 %v2949
    %v3627 = vunpack.c.h.b16 %v2949
    %v3628 = vunpack.c.l.b16 %v2950
    %v3629 = vunpack.c.h.b16 %v2950
    %v3630 = vunpack.c.l.b16 %v2951
    %v3631 = vunpack.c.h.b16 %v2951
    %v3632 = vunpack.c.l.b16 %v2952
    %v3633 = vunpack.c.h.b16 %v2952
    %v3634 = vunpack.c.l.b16 %v2953
    %v3635 = vunpack.c.h.b16 %v2953
    %v3636 = vunpack.c.l.b16 %v2954
    %v3637 = vunpack.c.h.b16 %v2954
    %v3638 = vunpack.c.l.b16 %v2955
    %v3639 = vunpack.c.h.b16 %v2955
    %v3640 = vunpack.c.l.b16 %v2956
    %v3641 = vunpack.c.h.b16 %v2956
    %v3642 = vunpack.c.l.b16 %v2957
    %v3643 = vunpack.c.h.b16 %v2957
    %v3644 = vunpack.c.l.b16 %v2958
    %v3645 = vunpack.c.h.b16 %v2958
    %v3646 = vunpack.c.l.b16 %v2959
    %v3647 = vunpack.c.h.b16 %v2959
    %v3648 = vunpack.c.l.b16 %v2960
    %v3649 = vunpack.c.h.b16 %v2960
    %v3650 = vunpack.c.l.b16 %v2961
    %v3651 = vunpack.c.h.b16 %v2961
    %v3652 = vunpack.c.l.b16 %v2962
    %v3653 = vunpack.c.h.b16 %v2962
    %v3654 = vunpack.c.l.b16 %v2963
    %v3655 = vunpack.c.h.b16 %v2963
    %v3656 = vunpack.c.l.b16 %v2964
    %v3657 = vunpack.c.h.b16 %v2964
    %v3658 = vunpack.c.l.b16 %v2965
    %v3659 = vunpack.c.h.b16 %v2965
    %v3660 = vunpack.c.l.b16 %v2966
    %v3661 = vunpack.c.h.b16 %v2966
    %v3662 = vunpack.c.l.b16 %v2967
    %v3663 = vunpack.c.h.b16 %v2967
    %v3664 = vunpack.c.l.b16 %v2968
    %v3665 = vunpack.c.h.b16 %v2968
    %v3666 = vunpack.c.l.b16 %v2969
    %v3667 = vunpack.c.h.b16 %v2969
    %v3668 = vunpack.c.l.b16 %v2970
    %v3669 = vunpack.c.h.b16 %v2970
    %v3670 = vunpack.c.l.b16 %v2971
    %v3671 = vunpack.c.h.b16 %v2971
    %v3672 = vunpack.c.l.b16 %v2972
    %v3673 = vunpack.c.h.b16 %v2972
    %v3674 = vunpack.c.l.b16 %v2973
    %v3675 = vunpack.c.h.b16 %v2973
    %v3676 = vunpack.c.l.b16 %v2974
    %v3677 = vunpack.c.h.b16 %v2974
    %v3678 = vunpack.c.l.b16 %v2975
    %v3679 = vunpack.c.h.b16 %v2975
    %v3680 = vunpack.c.l.b16 %v2976
    %v3681 = vunpack.c.h.b16 %v2976
    %v3682 = vunpack.c.l.b16 %v2977
    %v3683 = vunpack.c.h.b16 %v2977
    %v3684 = vunpack.c.l.b16 %v2978
    %v3685 = vunpack.c.h.b16 %v2978
    %v3686 = vunpack.c.l.b16 %v2979
    %v3687 = vunpack.c.h.b16 %v2979
    %v3688 = vunpack.c.l.b16 %v2980
    %v3689 = vunpack.c.h.b16 %v2980
    %v3690 = vunpack.c.l.b16 %v2981
    %v3691 = vunpack.c.h.b16 %v2981
    %v3692 = vunpack.c.l.b16 %v2982
    %v3693 = vunpack.c.h.b16 %v2982
    %v3694 = vunpack.c.l.b16 %v2983
    %v3695 = vunpack.c.h.b16 %v2983
    %v3696 = vunpack.c.l.b16 %v2984
    %v3697 = vunpack.c.h.b16 %v2984
    %v3698 = vunpack.c.l.b16 %v2985
    %v3699 = vunpack.c.h.b16 %v2985
    %v3700 = vunpack.c.l.b16 %v2986
    %v3701 = vunpack.c.h.b16 %v2986
    %v3702 = vunpack.c.l.b16 %v2987
    %v3703 = vunpack.c.h.b16 %v2987
    %v3704 = vunpack.c.l.b16 %v2988
    %v3705 = vunpack.c.h.b16 %v2988
    %v3706 = vunpack.c.l.b16 %v2989
    %v3707 = vunpack.c.h.b16 %v2989
    %v3708 = vunpack.c.l.b16 %v2990
    %v3709 = vunpack.c.h.b16 %v2990
    %v3710 = vunpack.c.l.b16 %v2991
    %v3711 = vunpack.c.h.b16 %v2991
    %v3712 = vunpack.c.l.b16 %v2992
    %v3713 = vunpack.c.h.b16 %v2992
    %v3714 = vunpack.c.l.b16 %v2993
    %v3715 = vunpack.c.h.b16 %v2993
    %v3716 = vunpack.c.l.b16 %v2994
    %v3717 = vunpack.c.h.b16 %v2994
    %v3718 = vunpack.c.l.b16 %v2995
    %v3719 = vunpack.c.h.b16 %v2995
    %v3720 = vunpack.c.l.b16 %v2996
    %v3721 = vunpack.c.h.b16 %v2996
    %v3722 = vunpack.c.l.b16 %v2997
    %v3723 = vunpack.c.h.b16 %v2997
    %v3724 = vunpack.c.l.b16 %v2998
    %v3725 = vunpack.c.h.b16 %v2998
    %v3726 = vunpack.c.l.b16 %v2999
    %v3727 = vunpack.c.h.b16 %v2999
    %v3728 = vunpack.c.l.b16 %v3000
    %v3729 = vunpack.c.h.b16 %v3000
    %v3730 = vunpack.c.l.b16 %v3001
    %v3731 = vunpack.c.h.b16 %v3001
    %v3732 = vunpack.c.l.b16 %v3002
    %v3733 = vunpack.c.h.b16 %v3002
    %v3734 = vunpack.c.l.b16 %v3003
    %v3735 = vunpack.c.h.b16 %v3003
    %v3736 = vunpack.c.l.b16 %v3004
    %v3737 = vunpack.c.h.b16 %v3004
    %v3738 = vunpack.c.l.b16 %v3005
    %v3739 = vunpack.c.h.b16 %v3005
    %v3740 = vunpack.c.l.b16 %v3006
    %v3741 = vunpack.c.h.b16 %v3006
    %v3742 = vunpack.c.l.b16 %v3007
    %v3743 = vunpack.c.h.b16 %v3007
    %v3744 = vunpack.c.l.b16 %v3008
    %v3745 = vunpack.c.h.b16 %v3008
    %v3746 = vunpack.c.l.b16 %v3009
    %v3747 = vunpack.c.h.b16 %v3009
    %v3748 = vunpack.c.l.b16 %v3010
    %v3749 = vunpack.c.h.b16 %v3010
    %v3750 = vunpack.c.l.b16 %v3011
    %v3751 = vunpack.c.h.b16 %v3011
    %v3752 = vunpack.c.l.b16 %v3012
    %v3753 = vunpack.c.h.b16 %v3012
    %v3754 = vunpack.c.l.b16 %v3013
    %v3755 = vunpack.c.h.b16 %v3013
    %v3756 = vunpack.c.l.b16 %v3014
    %v3757 = vunpack.c.h.b16 %v3014
    %v3758 = vunpack.c.l.b16 %v3015
    %v3759 = vunpack.c.h.b16 %v3015
    %v3760 = vunpack.c.l.b16 %v3016
    %v3761 = vunpack.c.h.b16 %v3016
    %v3762 = vunpack.c.l.b16 %v3017
    %v3763 = vunpack.c.h.b16 %v3017
    %v3764 = vunpack.c.l.b16 %v3018
    %v3765 = vunpack.c.h.b16 %v3018
    %v3766 = vunpack.c.l.b16 %v3019
    %v3767 = vunpack.c.h.b16 %v3019
    %v3768 = vunpack.c.l.b16 %v3020
    %v3769 = vunpack.c.h.b16 %v3020
    %v3770 = vunpack.c.l.b16 %v3021
    %v3771 = vunpack.c.h.b16 %v3021
    %v3772 = vunpack.c.l.b16 %v3022
    %v3773 = vunpack.c.h.b16 %v3022
    %v3774 = vunpack.c.l.b16 %v3023
    %v3775 = vunpack.c.h.b16 %v3023
    %v3776 = vunpack.c.l.b16 %v3024
    %v3777 = vunpack.c.h.b16 %v3024
    %v3778 = vunpack.c.l.b16 %v3025
    %v3779 = vunpack.c.h.b16 %v3025
    %v3780 = vunpack.c.l.b16 %v3026
    %v3781 = vunpack.c.h.b16 %v3026
    %v3782 = vunpack.c.l.b16 %v3027
    %v3783 = vunpack.c.h.b16 %v3027
    %v3784 = vunpack.c.l.b16 %v3028
    %v3785 = vunpack.c.h.b16 %v3028
    %v3786 = vunpack.c.l.b16 %v3029
    %v3787 = vunpack.c.h.b16 %v3029
    %v3788 = vunpack.c.l.b16 %v3030
    %v3789 = vunpack.c.h.b16 %v3030
    %v3790 = vunpack.c.l.b16 %v3031
    %v3791 = vunpack.c.h.b16 %v3031
    %v3792 = vunpack.c.l.b16 %v3032
    %v3793 = vunpack.c.h.b16 %v3032
    %v3794 = vunpack.c.l.b16 %v3033
    %v3795 = vunpack.c.h.b16 %v3033
    %v3796 = vunpack.c.l.b16 %v3034
    %v3797 = vunpack.c.h.b16 %v3034
    %v3798 = vunpack.c.l.b16 %v3035
    %v3799 = vunpack.c.h.b16 %v3035
    %v3800 = vunpack.c.l.b16 %v3036
    %v3801 = vunpack.c.h.b16 %v3036
    %v3802 = vunpack.c.l.b16 %v3037
    %v3803 = vunpack.c.h.b16 %v3037
    %v3804 = vunpack.c.l.b16 %v3038
    %v3805 = vunpack.c.h.b16 %v3038
    %v3806 = vunpack.c.l.b16 %v3039
    %v3807 = vunpack.c.h.b16 %v3039
    %v3808 = vunpack.c.l.b16 %v3040
    %v3809 = vunpack.c.h.b16 %v3040
    %v3810 = vunpack.c.l.b16 %v3041
    %v3811 = vunpack.c.h.b16 %v3041
    %v3812 = vunpack.c.l.b16 %v3042
    %v3813 = vunpack.c.h.b16 %v3042
    %v3814 = vunpack.c.l.b16 %v3043
    %v3815 = vunpack.c.h.b16 %v3043
    %v3816 = vunpack.c.l.b16 %v3044
    %v3817 = vunpack.c.h.b16 %v3044
    %v3818 = vunpack.c.l.b16 %v3045
    %v3819 = vunpack.c.h.b16 %v3045
    %v3820 = vpack.c.b16 %v3330, %v3320
    %v3821 = vpack.c.b16 %v3331, %v3321
    %v3822 = vpack.c.b16 %v3332, %v3322
    %v3823 = vpack.c.b16 %v3333, %v3323
    %v3824 = vpack.c.b16 %v3334, %v3324
    %v3825 = vpack.c.b16 %v3335, %v3325
    %v3826 = vpack.c.b16 %v3336, %v3326
    %v3827 = vpack.c.b16 %v3337, %v3327
    %v3828 = vpack.c.b16 %v3338, %v3328
    %v3829 = vpack.c.b16 %v3339, %v3329
    %v3830 = vpack.c.b16 %v3350, %v3340
    %v3831 = vpack.c.b16 %v3351, %v3341
    %v3832 = vpack.c.b16 %v3352, %v3342
    %v3833 = vpack.c.b16 %v3353, %v3343
    %v3834 = vpack.c.b16 %v3354, %v3344
    %v3835 = vpack.c.b16 %v3355, %v3345
    %v3836 = vpack.c.b16 %v3356, %v3346
    %v3837 = vpack.c.b16 %v3357, %v3347
    %v3838 = vpack.c.b16 %v3358, %v3348
    %v3839 = vpack.c.b16 %v3359, %v3349
    %v3840 = vpack.c.b16 %v3370, %v3360
    %v3841 = vpack.c.b16 %v3371, %v3361
    %v3842 = vpack.c.b16 %v3372, %v3362
    %v3843 = vpack.c.b16 %v3373, %v3363
    %v3844 = vpack.c.b16 %v3374, %v3364
    %v3845 = vpack.c.b16 %v3375, %v3365
    %v3846 = vpack.c.b16 %v3376, %v3366
    %v3847 = vpack.c.b16 %v3377, %v3367
    %v3848 = vpack.c.b16 %v3378, %v3368
    %v3849 = vpack.c.b16 %v3379, %v3369
    %v3850 = vpack.c.b16 %v3390, %v3380
    %v3851 = vpack.c.b16 %v3391, %v3381
    %v3852 = vpack.c.b16 %v3392, %v3382
    %v3853 = vpack.c.b16 %v3393, %v3383
    %v3854 = vpack.c.b16 %v3394, %v3384
    %v3855 = vpack.c.b16 %v3395, %v3385
    %v3856 = vpack.c.b16 %v3396, %v3386
    %v3857 = vpack.c.b16 %v3397, %v3387
    %v3858 = vpack.c.b16 %v3398, %v3388
    %v3859 = vpack.c.b16 %v3399, %v3389
    %v3860 = vpack.c.b16 %v3410, %v3400
    %v3861 = vpack.c.b16 %v3411, %v3401
    %v3862 = vpack.c.b16 %v3412, %v3402
    %v3863 = vpack.c.b16 %v3413, %v3403
    %v3864 = vpack.c.b16 %v3414, %v3404
    %v3865 = vpack.c.b16 %v3415, %v3405
    %v3866 = vpack.c.b16 %v3416, %v3406
    %v3867 = vpack.c.b16 %v3417, %v3407
    %v3868 = vpack.c.b16 %v3418, %v3408
    %v3869 = vpack.c.b16 %v3419, %v3409
    %v3870 = vpack.c.b16 %v3430, %v3420
    %v3871 = vpack.c.b16 %v3431, %v3421
    %v3872 = vpack.c.b16 %v3432, %v3422
    %v3873 = vpack.c.b16 %v3433, %v3423
    %v3874 = vpack.c.b16 %v3434, %v3424
    %v3875 = vpack.c.b16 %v3435, %v3425
    %v3876 = vpack.c.b16 %v3436, %v3426
    %v3877 = vpack.c.b16 %v3437, %v3427
    %v3878 = vpack.c.b16 %v3438, %v3428
    %v3879 = vpack.c.b16 %v3439, %v3429
    %v3880 = vpack.c.b16 %v3450, %v3440
    %v3881 = vpack.c.b16 %v3451, %v3441
    %v3882 = vpack.c.b16 %v3452, %v3442
    %v3883 = vpack.c.b16 %v3453, %v3443
    %v3884 = vpack.c.b16 %v3454, %v3444
    %v3885 = vpack.c.b16 %v3455, %v3445
    %v3886 = vpack.c.b16 %v3456, %v3446
    %v3887 = vpack.c.b16 %v3457, %v3447
    %v3888 = vpack.c.b16 %v3458, %v3448
    %v3889 = vpack.c.b16 %v3459, %v3449
    %v3890 = vpack.c.b16 %v3470, %v3460
    %v3891 = vpack.c.b16 %v3471, %v3461
    %v3892 = vpack.c.b16 %v3472, %v3462
    %v3893 = vpack.c.b16 %v3473, %v3463
    %v3894 = vpack.c.b16 %v3474, %v3464
    %v3895 = vpack.c.b16 %v3475, %v3465
    %v3896 = vpack.c.b16 %v3476, %v3466
    %v3897 = vpack.c.b16 %v3477, %v3467
    %v3898 = vpack.c.b16 %v3478, %v3468
    %v3899 = vpack.c.b16 %v3479, %v3469
    %v3900 = vpack.c.b16 %v3490, %v3480
    %v3901 = vpack.c.b16 %v3491, %v3481
    %v3902 = vpack.c.b16 %v3492, %v3482
    %v3903 = vpack.c.b16 %v3493, %v3483
    %v3904 = vpack.c.b16 %v3494, %v3484
    %v3905 = vpack.c.b16 %v3495, %v3485
    %v3906 = vpack.c.b16 %v3496, %v3486
    %v3907 = vpack.c.b16 %v3497, %v3487
    %v3908 = vpack.c.b16 %v3498, %v3488
    %v3909 = vpack.c.b16 %v3499, %v3489
    %v3910 = vpack.c.b16 %v3510, %v3500
    %v3911 = vpack.c.b16 %v3511, %v3501
    %v3912 = vpack.c.b16 %v3512, %v3502
    %v3913 = vpack.c.b16 %v3513, %v3503
    %v3914 = vpack.c.b16 %v3514, %v3504
    %v3915 = vpack.c.b16 %v3515, %v3505
    %v3916 = vpack.c.b16 %v3516, %v3506
    %v3917 = vpack.c.b16 %v3517, %v3507
    %v3918 = vpack.c.b16 %v3518, %v3508
    %v3919 = vpack.c.b16 %v3519, %v3509
    %v3920 = vpack.c.b16 %v3530, %v3520
    %v3921 = vpack.c.b16 %v3531, %v3521
    %v3922 = vpack.c.b16 %v3532, %v3522
    %v3923 = vpack.c.b16 %v3533, %v3523
    %v3924 = vpack.c.b16 %v3534, %v3524
    %v3925 = vpack.c.b16 %v3535, %v3525
    %v3926 = vpack.c.b16 %v3536, %v3526
    %v3927 = vpack.c.b16 %v3537, %v3527
    %v3928 = vpack.c.b16 %v3538, %v3528
    %v3929 = vpack.c.b16 %v3539, %v3529
    %v3930 = vpack.c.b16 %v3550, %v3540
    %v3931 = vpack.c.b16 %v3551, %v3541
    %v3932 = vpack.c.b16 %v3552, %v3542
    %v3933 = vpack.c.b16 %v3553, %v3543
    %v3934 = vpack.c.b16 %v3554, %v3544
    %v3935 = vpack.c.b16 %v3555, %v3545
    %v3936 = vpack.c.b16 %v3556, %v3546
    %v3937 = vpack.c.b16 %v3557, %v3547
    %v3938 = vpack.c.b16 %v3558, %v3548
    %v3939 = vpack.c.b16 %v3559, %v3549
    %v3940 = vpack.c.b16 %v3570, %v3560
    %v3941 = vpack.c.b16 %v3571, %v3561
    %v3942 = vpack.c.b16 %v3572, %v3562
    %v3943 = vpack.c.b16 %v3573, %v3563
    %v3944 = vpack.c.b16 %v3574, %v3564
    %v3945 = vpack.c.b16 %v3575, %v3565
    %v3946 = vpack.c.b16 %v3576, %v3566
    %v3947 = vpack.c.b16 %v3577, %v3567
    %v3948 = vpack.c.b16 %v3578, %v3568
    %v3949 = vpack.c.b16 %v3579, %v3569
    %v3950 = vpack.c.b16 %v3590, %v3580
    %v3951 = vpack.c.b16 %v3591, %v3581
    %v3952 = vpack.c.b16 %v3592, %v3582
    %v3953 = vpack.c.b16 %v3593, %v3583
    %v3954 = vpack.c.b16 %v3594, %v3584
    %v3955 = vpack.c.b16 %v3595, %v3585
    %v3956 = vpack.c.b16 %v3596, %v3586
    %v3957 = vpack.c.b16 %v3597, %v3587
    %v3958 = vpack.c.b16 %v3598, %v3588
    %v3959 = vpack.c.b16 %v3599, %v3589
    %v3960 = vpack.c.b16 %v3610, %v3600
    %v3961 = vpack.c.b16 %v3611, %v3601
    %v3962 = vpack.c.b16 %v3612, %v3602
    %v3963 = vpack.c.b16 %v3613, %v3603
    %v3964 = vpack.c.b16 %v3614, %v3604
    %v3965 = vpack.c.b16 %v3615, %v3605
    %v3966 = vpack.c.b16 %v3616, %v3606
    %v3967 = vpack.c.b16 %v3617, %v3607
    %v3968 = vpack.c.b16 %v3618, %v3608
    %v3969 = vpack.c.b16 %v3619, %v3609
    %v3970 = vpack.c.b16 %v3630, %v3620
    %v3971 = vpack.c.b16 %v3631, %v3621
    %v3972 = vpack.c.b16 %v3632, %v3622
    %v3973 = vpack.c.b16 %v3633, %v3623
    %v3974 = vpack.c.b16 %v3634, %v3624
    %v3975 = vpack.c.b16 %v3635, %v3625
    %v3976 = vpack.c.b16 %v3636, %v3626
    %v3977 = vpack.c.b16 %v3637, %v3627
    %v3978 = vpack.c.b16 %v3638, %v3628
    %v3979 = vpack.c.b16 %v3639, %v3629
    %v3980 = vpack.c.b16 %v3650, %v3640
    %v3981 = vpack.c.b16 %v3651, %v3641
    %v3982 = vpack.c.b16 %v3652, %v3642
    %v3983 = vpack.c.b16 %v3653, %v3643
    %v3984 = vpack.c.b16 %v3654, %v3644
    %v3985 = vpack.c.b16 %v3655, %v3645
    %v3986 = vpack.c.b16 %v3656, %v3646
    %v3987 = vpack.c.b16 %v3657, %v3647
    %v3988 = vpack.c.b16 %v3658, %v3648
    %v3989 = vpack.c.b16 %v3659, %v3649
    %v3990 = vpack.c.b16 %v3670, %v3660
    %v3991 = vpack.c.b16 %v3671, %v3661
    %v3992 = vpack.c.b16 %v3672, %v3662
    %v3993 = vpack.c.b16 %v3673, %v3663
    %v3994 = vpack.c.b16 %v3674, %v3664
    %v3995 = vpack.c.b16 %v3675, %v3665
    %v3996 = vpack.c.b16 %v3676, %v3666
    %v3997 = vpack.c.b16 %v3677, %v3667
    %v3998 = vpack.c.b16 %v3678, %v3668
    %v3999 = vpack.c.b16 %v3679, %v3669
    %v4000 = vpack.c.b16 %v3690, %v3680
    %v4001 = vpack.c.b16 %v3691, %v3681
    %v4002 = vpack.c.b16 %v3692, %v3682
    %v4003 = vpack.c.b16 %v3693, %v3683
    %v4004 = vpack.c.b16 %v3694, %v3684
    %v4005 = vpack.c.b16 %v3695, %v3685
    %v4006 = vpack.c.b16 %v3696, %v3686
    %v4007 = vpack.c.b16 %v3697, %v3687
    %v4008 = vpack.c.b16 %v3698, %v3688
    %v4009 = vpack.c.b16 %v3699, %v3689
    %v4010 = vpack.c.b16 %v3710, %v3700
    %v4011 = vpack.c.b16 %v3711, %v3701
    %v4012 = vpack.c.b16 %v3712, %v3702
    %v4013 = vpack.c.b16 %v3713, %v3703
    %v4014 = vpack.c.b16 %v3714, %v3704
    %v4015 = vpack.c.b16 %v3715, %v3705
    %v4016 = vpack.c.b16 %v3716, %v3706
    %v4017 = vpack.c.b16 %v3717, %v3707
    %v4018 = vpack.c.b16 %v3718, %v3708
    %v4019 = vpack.c.b16 %v3719, %v3709
    %v4020 = vpack.c.b16 %v3730, %v3720
    %v4021 = vpack.c.b16 %v3731, %v3721
    %v4022 = vpack.c.b16 %v3732, %v3722
    %v4023 = vpack.c.b16 %v3733, %v3723
    %v4024 = vpack.c.b16 %v3734, %v3724
    %v4025 = vpack.c.b16 %v3735, %v3725
    %v4026 = vpack.c.b16 %v3736, %v3726
    %v4027 = vpack.c.b16 %v3737, %v3727
    %v4028 = vpack.c.b16 %v3738, %v3728
    %v4029 = vpack.c.b16 %v3739, %v3729
    %v4030 = vpack.c.b16 %v3750, %v3740
    %v4031 = vpack.c.b16 %v3751, %v3741
    %v4032 = vpack.c.b16 %v3752, %v3742
    %v4033 = vpack.c.b16 %v3753, %v3743
    %v4034 = vpack.c.b16 %v3754, %v3744
    %v4035 = vpack.c.b16 %v3755, %v3745
    %v4036 = vpack.c.b16 %v3756, %v3746
    %v4037 = vpack.c.b16 %v3757, %v3747
    %v4038 = vpack.c.b16 %v3758, %v3748
    %v4039 = vpack.c.b16 %v3759, %v3749
    %v4040 = vpack.c.b16 %v3770, %v3760
    %v4041 = vpack.c.b16 %v3771, %v3761
    %v4042 = vpack.c.b16 %v3772, %v3762
    %v4043 = vpack.c.b16 %v3773, %v3763
    %v4044 = vpack.c.b16 %v3774, %v3764
    %v4045 = vpack.c.b16 %v3775, %v3765
    %v4046 = vpack.c.b16 %v3776, %v3766
    %v4047 = vpack.c.b16 %v3777, %v3767
    %v4048 = vpack.c.b16 %v3778, %v3768
    %v4049 = vpack.c.b16 %v3779, %v3769
    %v4050 = vpack.c.b16 %v3790, %v3780
    %v4051 = vpack.c.b16 %v3791, %v3781
    %v4052 = vpack.c.b16 %v3792, %v3782
    %v4053 = vpack.c.b16 %v3793, %v3783
    %v4054 = vpack.c.b16 %v3794, %v3784
    %v4055 = vpack.c.b16 %v3795, %v3785
    %v4056 = vpack.c.b16 %v3796, %v3786
    %v4057 = vpack.c.b16 %v3797, %v3787
    %v4058 = vpack.c.b16 %v3798, %v3788
    %v4059 = vpack.c.b16 %v3799, %v3789
    %v4060 = vpack.c.b16 %v3810, %v3800
    %v4061 = vpack.c.b16 %v3811, %v3801
    %v4062 = vpack.c.b16 %v3812, %v3802
    %v4063 = vpack.c.b16 %v3813, %v3803
    %v4064 = vpack.c.b16 %v3814, %v3804
    %v4065 = vpack.c.b16 %v3815, %v3805
    %v4066 = vpack.c.b16 %v3816, %v3806
    %v4067 = vpack.c.b16 %v3817, %v3807
    %v4068 = vpack.c.b16 %v3818, %v3808
    %v4069 = vpack.c.b16 %v3819, %v3809
    %v4321 = vsel %vm2606, %v2795, 0
    %4323 = vmatpush.bf16.msra.mxu0 %v3890
    %4324 = vmatpush.bf16.msra.mxu0 %v3880
    %4325 = vmatpush.bf16.msra.mxu0 %v3870
    %4326 = vmatpush.bf16.msra.mxu0 %v3860
    %4327 = vmatpush.bf16.msra.mxu0 %v3850
    %4328 = vmatpush.bf16.msra.mxu0 %v3840
    %4329 = vmatpush.bf16.msra.mxu0 %v3830
    %4330 = vmatpush.bf16.msra.mxu0 %v3820
    %4331 = vmatmul.bf16.gmra.mxu0 %v2792
    %v4332 = vpop.f32.mrf.mxu0
    %v4333 = vadd.f32 %v3050, %v4332
    %v4334 = vpop.f32.mrf.mxu0
    %4335 = vdwg.mxu0
    %4336 = vmatpush.bf16.msra.mxu0 %v3970
    %4337 = vmatpush.bf16.msra.mxu0 %v3960
    %4338 = vmatpush.bf16.msra.mxu0 %v3950
    %4339 = vmatpush.bf16.msra.mxu0 %v3940
    %4340 = vmatpush.bf16.msra.mxu0 %v3930
    %4341 = vmatpush.bf16.msra.mxu0 %v3920
    %4342 = vmatpush.bf16.msra.mxu0 %v3910
    %4343 = vmatpush.bf16.msra.mxu0 %v3900
    %4344 = vmatmul.bf16.gmra.mxu0 %v2793
    %v4345 = vpop.f32.mrf.mxu0
    %v4346 = vadd.f32 %v4333, %v4345
    %v4347 = vpop.f32.mrf.mxu0
    %4348 = vdwg.mxu0
    %4349 = vmatpush.bf16.msra.mxu0 %v4050
    %4350 = vmatpush.bf16.msra.mxu0 %v4040
    %4351 = vmatpush.bf16.msra.mxu0 %v4030
    %4352 = vmatpush.bf16.msra.mxu0 %v4020
    %4353 = vmatpush.bf16.msra.mxu0 %v4010
    %4354 = vmatpush.bf16.msra.mxu0 %v4000
    %4355 = vmatpush.bf16.msra.mxu0 %v3990
    %4356 = vmatpush.bf16.msra.mxu0 %v3980
    %4357 = vmatmul.bf16.gmra.mxu0 %v2794
    %v4358 = vpop.f32.mrf.mxu0
    %v4359 = vadd.f32 %v4346, %v4358
    %v4360 = vpop.f32.mrf.mxu0
    %4361 = vdwg.mxu0
    %4362 = vmatpush.bf16.msra.mxu0 0
    %4363 = vmatpush.bf16.msra.mxu0 0
    %4364 = vmatpush.bf16.msra.mxu0 0
    %4365 = vmatpush.bf16.msra.mxu0 0
    %4366 = vmatpush.bf16.msra.mxu0 0
    %4367 = vmatpush.bf16.msra.mxu0 0
    %4368 = vmatpush.bf16.msra.mxu0 0
    %4369 = vmatpush.bf16.msra.mxu0 %v4060
    %4370 = vmatmul.bf16.gmra.mxu0 %v4321
    %v4371 = vpop.f32.mrf.mxu0
    %v4372 = vadd.f32 %v4359, %v4371
    %v4373 = vpop.f32.mrf.mxu0
    %4374 = vdwg.mxu0
    %4375 = vmatpush.bf16.msra.mxu0 %v3891
    %4376 = vmatpush.bf16.msra.mxu0 %v3881
    %4377 = vmatpush.bf16.msra.mxu0 %v3871
    %4378 = vmatpush.bf16.msra.mxu0 %v3861
    %4379 = vmatpush.bf16.msra.mxu0 %v3851
    %4380 = vmatpush.bf16.msra.mxu0 %v3841
    %4381 = vmatpush.bf16.msra.mxu0 %v3831
    %4382 = vmatpush.bf16.msra.mxu0 %v3821
    %4383 = vmatmul.bf16.gmra.mxu0 %v2792
    %v4384 = vpop.f32.mrf.mxu0
    %v4385 = vadd.f32 %v3051, %v4384
    %v4386 = vpop.f32.mrf.mxu0
    %4387 = vdwg.mxu0
    %4388 = vmatpush.bf16.msra.mxu0 %v3971
    %4389 = vmatpush.bf16.msra.mxu0 %v3961
    %4390 = vmatpush.bf16.msra.mxu0 %v3951
    %4391 = vmatpush.bf16.msra.mxu0 %v3941
    %4392 = vmatpush.bf16.msra.mxu0 %v3931
    %4393 = vmatpush.bf16.msra.mxu0 %v3921
    %4394 = vmatpush.bf16.msra.mxu0 %v3911
    %4395 = vmatpush.bf16.msra.mxu0 %v3901
    %4396 = vmatmul.bf16.gmra.mxu0 %v2793
    %v4397 = vpop.f32.mrf.mxu0
    %v4398 = vadd.f32 %v4385, %v4397
    %v4399 = vpop.f32.mrf.mxu0
    %4400 = vdwg.mxu0
    %4401 = vmatpush.bf16.msra.mxu0 %v4051
    %4402 = vmatpush.bf16.msra.mxu0 %v4041
    %4403 = vmatpush.bf16.msra.mxu0 %v4031
    %4404 = vmatpush.bf16.msra.mxu0 %v4021
    %4405 = vmatpush.bf16.msra.mxu0 %v4011
    %4406 = vmatpush.bf16.msra.mxu0 %v4001
    %4407 = vmatpush.bf16.msra.mxu0 %v3991
    %4408 = vmatpush.bf16.msra.mxu0 %v3981
    %4409 = vmatmul.bf16.gmra.mxu0 %v2794
    %v4410 = vpop.f32.mrf.mxu0
    %v4411 = vadd.f32 %v4398, %v4410
    %v4412 = vpop.f32.mrf.mxu0
    %4413 = vdwg.mxu0
    %4414 = vmatpush.bf16.msra.mxu0 0
    %4415 = vmatpush.bf16.msra.mxu0 0
    %4416 = vmatpush.bf16.msra.mxu0 0
    %4417 = vmatpush.bf16.msra.mxu0 0
    %4418 = vmatpush.bf16.msra.mxu0 0
    %4419 = vmatpush.bf16.msra.mxu0 0
    %4420 = vmatpush.bf16.msra.mxu0 0
    %4421 = vmatpush.bf16.msra.mxu0 %v4061
    %4422 = vmatmul.bf16.gmra.mxu0 %v4321
    %v4423 = vpop.f32.mrf.mxu0
    %v4424 = vadd.f32 %v4411, %v4423
    %v4425 = vpop.f32.mrf.mxu0
    %4426 = vdwg.mxu0
    %4427 = vmatpush.bf16.msra.mxu0 %v3892
    %4428 = vmatpush.bf16.msra.mxu0 %v3882
    %4429 = vmatpush.bf16.msra.mxu0 %v3872
    %4430 = vmatpush.bf16.msra.mxu0 %v3862
    %4431 = vmatpush.bf16.msra.mxu0 %v3852
    %4432 = vmatpush.bf16.msra.mxu0 %v3842
    %4433 = vmatpush.bf16.msra.mxu0 %v3832
    %4434 = vmatpush.bf16.msra.mxu0 %v3822
    %4435 = vmatmul.bf16.gmra.mxu0 %v2792
    %v4436 = vpop.f32.mrf.mxu0
    %v4437 = vadd.f32 %v3052, %v4436
    %v4438 = vpop.f32.mrf.mxu0
    %4439 = vdwg.mxu0
    %4440 = vmatpush.bf16.msra.mxu0 %v3972
    %4441 = vmatpush.bf16.msra.mxu0 %v3962
    %4442 = vmatpush.bf16.msra.mxu0 %v3952
    %4443 = vmatpush.bf16.msra.mxu0 %v3942
    %4444 = vmatpush.bf16.msra.mxu0 %v3932
    %4445 = vmatpush.bf16.msra.mxu0 %v3922
    %4446 = vmatpush.bf16.msra.mxu0 %v3912
    %4447 = vmatpush.bf16.msra.mxu0 %v3902
    %4448 = vmatmul.bf16.gmra.mxu0 %v2793
    %v4449 = vpop.f32.mrf.mxu0
    %v4450 = vadd.f32 %v4437, %v4449
    %v4451 = vpop.f32.mrf.mxu0
    %4452 = vdwg.mxu0
    %4453 = vmatpush.bf16.msra.mxu0 %v4052
    %4454 = vmatpush.bf16.msra.mxu0 %v4042
    %4455 = vmatpush.bf16.msra.mxu0 %v4032
    %4456 = vmatpush.bf16.msra.mxu0 %v4022
    %4457 = vmatpush.bf16.msra.mxu0 %v4012
    %4458 = vmatpush.bf16.msra.mxu0 %v4002
    %4459 = vmatpush.bf16.msra.mxu0 %v3992
    %4460 = vmatpush.bf16.msra.mxu0 %v3982
    %4461 = vmatmul.bf16.gmra.mxu0 %v2794
    %v4462 = vpop.f32.mrf.mxu0
    %v4463 = vadd.f32 %v4450, %v4462
    %v4464 = vpop.f32.mrf.mxu0
    %4465 = vdwg.mxu0
    %4466 = vmatpush.bf16.msra.mxu0 0
    %4467 = vmatpush.bf16.msra.mxu0 0
    %4468 = vmatpush.bf16.msra.mxu0 0
    %4469 = vmatpush.bf16.msra.mxu0 0
    %4470 = vmatpush.bf16.msra.mxu0 0
    %4471 = vmatpush.bf16.msra.mxu0 0
    %4472 = vmatpush.bf16.msra.mxu0 0
    %4473 = vmatpush.bf16.msra.mxu0 %v4062
    %4474 = vmatmul.bf16.gmra.mxu0 %v4321
    %v4475 = vpop.f32.mrf.mxu0
    %v4476 = vadd.f32 %v4463, %v4475
    %v4477 = vpop.f32.mrf.mxu0
    %4478 = vdwg.mxu0
    %4479 = vmatpush.bf16.msra.mxu0 %v3893
    %4480 = vmatpush.bf16.msra.mxu0 %v3883
    %4481 = vmatpush.bf16.msra.mxu0 %v3873
    %4482 = vmatpush.bf16.msra.mxu0 %v3863
    %4483 = vmatpush.bf16.msra.mxu0 %v3853
    %4484 = vmatpush.bf16.msra.mxu0 %v3843
    %4485 = vmatpush.bf16.msra.mxu0 %v3833
    %4486 = vmatpush.bf16.msra.mxu0 %v3823
    %4487 = vmatmul.bf16.gmra.mxu0 %v2792
    %v4488 = vpop.f32.mrf.mxu0
    %v4489 = vadd.f32 %v3053, %v4488
    %v4490 = vpop.f32.mrf.mxu0
    %4491 = vdwg.mxu0
    %4492 = vmatpush.bf16.msra.mxu0 %v3973
    %4493 = vmatpush.bf16.msra.mxu0 %v3963
    %4494 = vmatpush.bf16.msra.mxu0 %v3953
    %4495 = vmatpush.bf16.msra.mxu0 %v3943
    %4496 = vmatpush.bf16.msra.mxu0 %v3933
    %4497 = vmatpush.bf16.msra.mxu0 %v3923
    %4498 = vmatpush.bf16.msra.mxu0 %v3913
    %4499 = vmatpush.bf16.msra.mxu0 %v3903
    %4500 = vmatmul.bf16.gmra.mxu0 %v2793
    %v4501 = vpop.f32.mrf.mxu0
    %v4502 = vadd.f32 %v4489, %v4501
    %v4503 = vpop.f32.mrf.mxu0
    %4504 = vdwg.mxu0
    %4505 = vmatpush.bf16.msra.mxu0 %v4053
    %4506 = vmatpush.bf16.msra.mxu0 %v4043
    %4507 = vmatpush.bf16.msra.mxu0 %v4033
    %4508 = vmatpush.bf16.msra.mxu0 %v4023
    %4509 = vmatpush.bf16.msra.mxu0 %v4013
    %4510 = vmatpush.bf16.msra.mxu0 %v4003
    %4511 = vmatpush.bf16.msra.mxu0 %v3993
    %4512 = vmatpush.bf16.msra.mxu0 %v3983
    %4513 = vmatmul.bf16.gmra.mxu0 %v2794
    %v4514 = vpop.f32.mrf.mxu0
    %v4515 = vadd.f32 %v4502, %v4514
    %v4516 = vpop.f32.mrf.mxu0
    %4517 = vdwg.mxu0
    %4518 = vmatpush.bf16.msra.mxu0 0
    %4519 = vmatpush.bf16.msra.mxu0 0
    %4520 = vmatpush.bf16.msra.mxu0 0
    %4521 = vmatpush.bf16.msra.mxu0 0
    %4522 = vmatpush.bf16.msra.mxu0 0
    %4523 = vmatpush.bf16.msra.mxu0 0
    %4524 = vmatpush.bf16.msra.mxu0 0
    %4525 = vmatpush.bf16.msra.mxu0 %v4063
    %4526 = vmatmul.bf16.gmra.mxu0 %v4321
    %v4527 = vpop.f32.mrf.mxu0
    %v4528 = vadd.f32 %v4515, %v4527
    %v4529 = vpop.f32.mrf.mxu0
    %4530 = vdwg.mxu0
    %4531 = vmatpush.bf16.msra.mxu0 %v3894
    %4532 = vmatpush.bf16.msra.mxu0 %v3884
    %4533 = vmatpush.bf16.msra.mxu0 %v3874
    %4534 = vmatpush.bf16.msra.mxu0 %v3864
    %4535 = vmatpush.bf16.msra.mxu0 %v3854
    %4536 = vmatpush.bf16.msra.mxu0 %v3844
    %4537 = vmatpush.bf16.msra.mxu0 %v3834
    %4538 = vmatpush.bf16.msra.mxu0 %v3824
    %4539 = vmatmul.bf16.gmra.mxu0 %v2792
    %v4540 = vpop.f32.mrf.mxu0
    %v4541 = vadd.f32 %v3054, %v4540
    %v4542 = vpop.f32.mrf.mxu0
    %4543 = vdwg.mxu0
    %4544 = vmatpush.bf16.msra.mxu0 %v3974
    %4545 = vmatpush.bf16.msra.mxu0 %v3964
    %4546 = vmatpush.bf16.msra.mxu0 %v3954
    %4547 = vmatpush.bf16.msra.mxu0 %v3944
    %4548 = vmatpush.bf16.msra.mxu0 %v3934
    %4549 = vmatpush.bf16.msra.mxu0 %v3924
    %4550 = vmatpush.bf16.msra.mxu0 %v3914
    %4551 = vmatpush.bf16.msra.mxu0 %v3904
    %4552 = vmatmul.bf16.gmra.mxu0 %v2793
    %v4553 = vpop.f32.mrf.mxu0
    %v4554 = vadd.f32 %v4541, %v4553
    %v4555 = vpop.f32.mrf.mxu0
    %4556 = vdwg.mxu0
    %4557 = vmatpush.bf16.msra.mxu0 %v4054
    %4558 = vmatpush.bf16.msra.mxu0 %v4044
    %4559 = vmatpush.bf16.msra.mxu0 %v4034
    %4560 = vmatpush.bf16.msra.mxu0 %v4024
    %4561 = vmatpush.bf16.msra.mxu0 %v4014
    %4562 = vmatpush.bf16.msra.mxu0 %v4004
    %4563 = vmatpush.bf16.msra.mxu0 %v3994
    %4564 = vmatpush.bf16.msra.mxu0 %v3984
    %4565 = vmatmul.bf16.gmra.mxu0 %v2794
    %v4566 = vpop.f32.mrf.mxu0
    %v4567 = vadd.f32 %v4554, %v4566
    %v4568 = vpop.f32.mrf.mxu0
    %4569 = vdwg.mxu0
    %4570 = vmatpush.bf16.msra.mxu0 0
    %4571 = vmatpush.bf16.msra.mxu0 0
    %4572 = vmatpush.bf16.msra.mxu0 0
    %4573 = vmatpush.bf16.msra.mxu0 0
    %4574 = vmatpush.bf16.msra.mxu0 0
    %4575 = vmatpush.bf16.msra.mxu0 0
    %4576 = vmatpush.bf16.msra.mxu0 0
    %4577 = vmatpush.bf16.msra.mxu0 %v4064
    %4578 = vmatmul.bf16.gmra.mxu0 %v4321
    %v4579 = vpop.f32.mrf.mxu0
    %v4580 = vadd.f32 %v4567, %v4579
    %v4581 = vpop.f32.mrf.mxu0
    %4582 = vdwg.mxu0
    %4583 = vmatpush.bf16.msra.mxu0 %v3895
    %4584 = vmatpush.bf16.msra.mxu0 %v3885
    %4585 = vmatpush.bf16.msra.mxu0 %v3875
    %4586 = vmatpush.bf16.msra.mxu0 %v3865
    %4587 = vmatpush.bf16.msra.mxu0 %v3855
    %4588 = vmatpush.bf16.msra.mxu0 %v3845
    %4589 = vmatpush.bf16.msra.mxu0 %v3835
    %4590 = vmatpush.bf16.msra.mxu0 %v3825
    %4591 = vmatmul.bf16.gmra.mxu0 %v2792
    %v4592 = vpop.f32.mrf.mxu0
    %v4593 = vadd.f32 %v3055, %v4592
    %v4594 = vpop.f32.mrf.mxu0
    %4595 = vdwg.mxu0
    %4596 = vmatpush.bf16.msra.mxu0 %v3975
    %4597 = vmatpush.bf16.msra.mxu0 %v3965
    %4598 = vmatpush.bf16.msra.mxu0 %v3955
    %4599 = vmatpush.bf16.msra.mxu0 %v3945
    %4600 = vmatpush.bf16.msra.mxu0 %v3935
    %4601 = vmatpush.bf16.msra.mxu0 %v3925
    %4602 = vmatpush.bf16.msra.mxu0 %v3915
    %4603 = vmatpush.bf16.msra.mxu0 %v3905
    %4604 = vmatmul.bf16.gmra.mxu0 %v2793
    %v4605 = vpop.f32.mrf.mxu0
    %v4606 = vadd.f32 %v4593, %v4605
    %v4607 = vpop.f32.mrf.mxu0
    %4608 = vdwg.mxu0
    %4609 = vmatpush.bf16.msra.mxu0 %v4055
    %4610 = vmatpush.bf16.msra.mxu0 %v4045
    %4611 = vmatpush.bf16.msra.mxu0 %v4035
    %4612 = vmatpush.bf16.msra.mxu0 %v4025
    %4613 = vmatpush.bf16.msra.mxu0 %v4015
    %4614 = vmatpush.bf16.msra.mxu0 %v4005
    %4615 = vmatpush.bf16.msra.mxu0 %v3995
    %4616 = vmatpush.bf16.msra.mxu0 %v3985
    %4617 = vmatmul.bf16.gmra.mxu0 %v2794
    %v4618 = vpop.f32.mrf.mxu0
    %v4619 = vadd.f32 %v4606, %v4618
    %v4620 = vpop.f32.mrf.mxu0
    %4621 = vdwg.mxu0
    %4622 = vmatpush.bf16.msra.mxu0 0
    %4623 = vmatpush.bf16.msra.mxu0 0
    %4624 = vmatpush.bf16.msra.mxu0 0
    %4625 = vmatpush.bf16.msra.mxu0 0
    %4626 = vmatpush.bf16.msra.mxu0 0
    %4627 = vmatpush.bf16.msra.mxu0 0
    %4628 = vmatpush.bf16.msra.mxu0 0
    %4629 = vmatpush.bf16.msra.mxu0 %v4065
    %4630 = vmatmul.bf16.gmra.mxu0 %v4321
    %v4631 = vpop.f32.mrf.mxu0
    %v4632 = vadd.f32 %v4619, %v4631
    %v4633 = vpop.f32.mrf.mxu0
    %4634 = vdwg.mxu0
    %4635 = vmatpush.bf16.msra.mxu0 %v3896
    %4636 = vmatpush.bf16.msra.mxu0 %v3886
    %4637 = vmatpush.bf16.msra.mxu0 %v3876
    %4638 = vmatpush.bf16.msra.mxu0 %v3866
    %4639 = vmatpush.bf16.msra.mxu0 %v3856
    %4640 = vmatpush.bf16.msra.mxu0 %v3846
    %4641 = vmatpush.bf16.msra.mxu0 %v3836
    %4642 = vmatpush.bf16.msra.mxu0 %v3826
    %4643 = vmatmul.bf16.gmra.mxu0 %v2792
    %v4644 = vpop.f32.mrf.mxu0
    %v4645 = vadd.f32 %v3056, %v4644
    %v4646 = vpop.f32.mrf.mxu0
    %4647 = vdwg.mxu0
    %4648 = vmatpush.bf16.msra.mxu0 %v3976
    %4649 = vmatpush.bf16.msra.mxu0 %v3966
    %4650 = vmatpush.bf16.msra.mxu0 %v3956
    %4651 = vmatpush.bf16.msra.mxu0 %v3946
    %4652 = vmatpush.bf16.msra.mxu0 %v3936
    %4653 = vmatpush.bf16.msra.mxu0 %v3926
    %4654 = vmatpush.bf16.msra.mxu0 %v3916
    %4655 = vmatpush.bf16.msra.mxu0 %v3906
    %4656 = vmatmul.bf16.gmra.mxu0 %v2793
    %v4657 = vpop.f32.mrf.mxu0
    %v4658 = vadd.f32 %v4645, %v4657
    %v4659 = vpop.f32.mrf.mxu0
    %4660 = vdwg.mxu0
    %4661 = vmatpush.bf16.msra.mxu0 %v4056
    %4662 = vmatpush.bf16.msra.mxu0 %v4046
    %4663 = vmatpush.bf16.msra.mxu0 %v4036
    %4664 = vmatpush.bf16.msra.mxu0 %v4026
    %4665 = vmatpush.bf16.msra.mxu0 %v4016
    %4666 = vmatpush.bf16.msra.mxu0 %v4006
    %4667 = vmatpush.bf16.msra.mxu0 %v3996
    %4668 = vmatpush.bf16.msra.mxu0 %v3986
    %4669 = vmatmul.bf16.gmra.mxu0 %v2794
    %v4670 = vpop.f32.mrf.mxu0
    %v4671 = vadd.f32 %v4658, %v4670
    %v4672 = vpop.f32.mrf.mxu0
    %4673 = vdwg.mxu0
    %4674 = vmatpush.bf16.msra.mxu0 0
    %4675 = vmatpush.bf16.msra.mxu0 0
    %4676 = vmatpush.bf16.msra.mxu0 0
    %4677 = vmatpush.bf16.msra.mxu0 0
    %4678 = vmatpush.bf16.msra.mxu0 0
    %4679 = vmatpush.bf16.msra.mxu0 0
    %4680 = vmatpush.bf16.msra.mxu0 0
    %4681 = vmatpush.bf16.msra.mxu0 %v4066
    %4682 = vmatmul.bf16.gmra.mxu0 %v4321
    %v4683 = vpop.f32.mrf.mxu0
    %v4684 = vadd.f32 %v4671, %v4683
    %v4685 = vpop.f32.mrf.mxu0
    %4686 = vdwg.mxu0
    %4687 = vmatpush.bf16.msra.mxu0 %v3897
    %4688 = vmatpush.bf16.msra.mxu0 %v3887
    %4689 = vmatpush.bf16.msra.mxu0 %v3877
    %4690 = vmatpush.bf16.msra.mxu0 %v3867
    %4691 = vmatpush.bf16.msra.mxu0 %v3857
    %4692 = vmatpush.bf16.msra.mxu0 %v3847
    %4693 = vmatpush.bf16.msra.mxu0 %v3837
    %4694 = vmatpush.bf16.msra.mxu0 %v3827
    %4695 = vmatmul.bf16.gmra.mxu0 %v2792
    %v4696 = vpop.f32.mrf.mxu0
    %v4697 = vadd.f32 %v3057, %v4696
    %v4698 = vpop.f32.mrf.mxu0
    %4699 = vdwg.mxu0
    %4700 = vmatpush.bf16.msra.mxu0 %v3977
    %4701 = vmatpush.bf16.msra.mxu0 %v3967
    %4702 = vmatpush.bf16.msra.mxu0 %v3957
    %4703 = vmatpush.bf16.msra.mxu0 %v3947
    %4704 = vmatpush.bf16.msra.mxu0 %v3937
    %4705 = vmatpush.bf16.msra.mxu0 %v3927
    %4706 = vmatpush.bf16.msra.mxu0 %v3917
    %4707 = vmatpush.bf16.msra.mxu0 %v3907
    %4708 = vmatmul.bf16.gmra.mxu0 %v2793
    %v4709 = vpop.f32.mrf.mxu0
    %v4710 = vadd.f32 %v4697, %v4709
    %v4711 = vpop.f32.mrf.mxu0
    %4712 = vdwg.mxu0
    %4713 = vmatpush.bf16.msra.mxu0 %v4057
    %4714 = vmatpush.bf16.msra.mxu0 %v4047
    %4715 = vmatpush.bf16.msra.mxu0 %v4037
    %4716 = vmatpush.bf16.msra.mxu0 %v4027
    %4717 = vmatpush.bf16.msra.mxu0 %v4017
    %4718 = vmatpush.bf16.msra.mxu0 %v4007
    %4719 = vmatpush.bf16.msra.mxu0 %v3997
    %4720 = vmatpush.bf16.msra.mxu0 %v3987
    %4721 = vmatmul.bf16.gmra.mxu0 %v2794
    %v4722 = vpop.f32.mrf.mxu0
    %v4723 = vadd.f32 %v4710, %v4722
    %v4724 = vpop.f32.mrf.mxu0
    %4725 = vdwg.mxu0
    %4726 = vmatpush.bf16.msra.mxu0 0
    %4727 = vmatpush.bf16.msra.mxu0 0
    %4728 = vmatpush.bf16.msra.mxu0 0
    %4729 = vmatpush.bf16.msra.mxu0 0
    %4730 = vmatpush.bf16.msra.mxu0 0
    %4731 = vmatpush.bf16.msra.mxu0 0
    %4732 = vmatpush.bf16.msra.mxu0 0
    %4733 = vmatpush.bf16.msra.mxu0 %v4067
    %4734 = vmatmul.bf16.gmra.mxu0 %v4321
    %v4735 = vpop.f32.mrf.mxu0
    %v4736 = vadd.f32 %v4723, %v4735
    %v4737 = vpop.f32.mrf.mxu0
    %4738 = vdwg.mxu0
    %4739 = vmatpush.bf16.msra.mxu0 %v3898
    %4740 = vmatpush.bf16.msra.mxu0 %v3888
    %4741 = vmatpush.bf16.msra.mxu0 %v3878
    %4742 = vmatpush.bf16.msra.mxu0 %v3868
    %4743 = vmatpush.bf16.msra.mxu0 %v3858
    %4744 = vmatpush.bf16.msra.mxu0 %v3848
    %4745 = vmatpush.bf16.msra.mxu0 %v3838
    %4746 = vmatpush.bf16.msra.mxu0 %v3828
    %4747 = vmatmul.bf16.gmra.mxu0 %v2792
    %v4748 = vpop.f32.mrf.mxu0
    %v4749 = vadd.f32 %v3058, %v4748
    %v4750 = vpop.f32.mrf.mxu0
    %4751 = vdwg.mxu0
    %4752 = vmatpush.bf16.msra.mxu0 %v3978
    %4753 = vmatpush.bf16.msra.mxu0 %v3968
    %4754 = vmatpush.bf16.msra.mxu0 %v3958
    %4755 = vmatpush.bf16.msra.mxu0 %v3948
    %4756 = vmatpush.bf16.msra.mxu0 %v3938
    %4757 = vmatpush.bf16.msra.mxu0 %v3928
    %4758 = vmatpush.bf16.msra.mxu0 %v3918
    %4759 = vmatpush.bf16.msra.mxu0 %v3908
    %4760 = vmatmul.bf16.gmra.mxu0 %v2793
    %v4761 = vpop.f32.mrf.mxu0
    %v4762 = vadd.f32 %v4749, %v4761
    %v4763 = vpop.f32.mrf.mxu0
    %4764 = vdwg.mxu0
    %4765 = vmatpush.bf16.msra.mxu0 %v4058
    %4766 = vmatpush.bf16.msra.mxu0 %v4048
    %4767 = vmatpush.bf16.msra.mxu0 %v4038
    %4768 = vmatpush.bf16.msra.mxu0 %v4028
    %4769 = vmatpush.bf16.msra.mxu0 %v4018
    %4770 = vmatpush.bf16.msra.mxu0 %v4008
    %4771 = vmatpush.bf16.msra.mxu0 %v3998
    %4772 = vmatpush.bf16.msra.mxu0 %v3988
    %4773 = vmatmul.bf16.gmra.mxu0 %v2794
    %v4774 = vpop.f32.mrf.mxu0
    %v4775 = vadd.f32 %v4762, %v4774
    %v4776 = vpop.f32.mrf.mxu0
    %4777 = vdwg.mxu0
    %4778 = vmatpush.bf16.msra.mxu0 0
    %4779 = vmatpush.bf16.msra.mxu0 0
    %4780 = vmatpush.bf16.msra.mxu0 0
    %4781 = vmatpush.bf16.msra.mxu0 0
    %4782 = vmatpush.bf16.msra.mxu0 0
    %4783 = vmatpush.bf16.msra.mxu0 0
    %4784 = vmatpush.bf16.msra.mxu0 0
    %4785 = vmatpush.bf16.msra.mxu0 %v4068
    %4786 = vmatmul.bf16.gmra.mxu0 %v4321
    %v4787 = vpop.f32.mrf.mxu0
    %v4788 = vadd.f32 %v4775, %v4787
    %v4789 = vpop.f32.mrf.mxu0
    %4790 = vdwg.mxu0
    %4791 = vmatpush.bf16.msra.mxu0 %v3899
    %4792 = vmatpush.bf16.msra.mxu0 %v3889
    %4793 = vmatpush.bf16.msra.mxu0 %v3879
    %4794 = vmatpush.bf16.msra.mxu0 %v3869
    %4795 = vmatpush.bf16.msra.mxu0 %v3859
    %4796 = vmatpush.bf16.msra.mxu0 %v3849
    %4797 = vmatpush.bf16.msra.mxu0 %v3839
    %4798 = vmatpush.bf16.msra.mxu0 %v3829
    %4799 = vmatmul.bf16.gmra.mxu0 %v2792
    %v4800 = vpop.f32.mrf.mxu0
    %v4801 = vadd.f32 %v3059, %v4800
    %v4802 = vpop.f32.mrf.mxu0
    %4803 = vdwg.mxu0
    %4804 = vmatpush.bf16.msra.mxu0 %v3979
    %4805 = vmatpush.bf16.msra.mxu0 %v3969
    %4806 = vmatpush.bf16.msra.mxu0 %v3959
    %4807 = vmatpush.bf16.msra.mxu0 %v3949
    %4808 = vmatpush.bf16.msra.mxu0 %v3939
    %4809 = vmatpush.bf16.msra.mxu0 %v3929
    %4810 = vmatpush.bf16.msra.mxu0 %v3919
    %4811 = vmatpush.bf16.msra.mxu0 %v3909
    %4812 = vmatmul.bf16.gmra.mxu0 %v2793
    %v4813 = vpop.f32.mrf.mxu0
    %v4814 = vadd.f32 %v4801, %v4813
    %v4815 = vpop.f32.mrf.mxu0
    %4816 = vdwg.mxu0
    %4817 = vmatpush.bf16.msra.mxu0 %v4059
    %4818 = vmatpush.bf16.msra.mxu0 %v4049
    %4819 = vmatpush.bf16.msra.mxu0 %v4039
    %4820 = vmatpush.bf16.msra.mxu0 %v4029
    %4821 = vmatpush.bf16.msra.mxu0 %v4019
    %4822 = vmatpush.bf16.msra.mxu0 %v4009
    %4823 = vmatpush.bf16.msra.mxu0 %v3999
    %4824 = vmatpush.bf16.msra.mxu0 %v3989
    %4825 = vmatmul.bf16.gmra.mxu0 %v2794
    %v4826 = vpop.f32.mrf.mxu0
    %v4827 = vadd.f32 %v4814, %v4826
    %v4828 = vpop.f32.mrf.mxu0
    %4829 = vdwg.mxu0
    %4830 = vmatpush.bf16.msra.mxu0 0
    %4831 = vmatpush.bf16.msra.mxu0 0
    %4832 = vmatpush.bf16.msra.mxu0 0
    %4833 = vmatpush.bf16.msra.mxu0 0
    %4834 = vmatpush.bf16.msra.mxu0 0
    %4835 = vmatpush.bf16.msra.mxu0 0
    %4836 = vmatpush.bf16.msra.mxu0 0
    %4837 = vmatpush.bf16.msra.mxu0 %v4069
    %4838 = vmatmul.bf16.gmra.mxu0 %v4321
    %v4839 = vpop.f32.mrf.mxu0
    %v4840 = vadd.f32 %v4827, %v4839
    %v4841 = vpop.f32.mrf.mxu0
    %4842 = vdwg.mxu0
    %v4843 = vsub.f32 0.0, %v4372
    %v4844 = vsub.f32 0.0, %v4424
    %v4845 = vsub.f32 0.0, %v4476
    %v4846 = vsub.f32 0.0, %v4528
    %v4847 = vsub.f32 0.0, %v4580
    %v4848 = vsub.f32 0.0, %v4632
    %v4849 = vsub.f32 0.0, %v4684
    %v4850 = vsub.f32 0.0, %v4736
    %v4851 = vsub.f32 0.0, %v4788
    %v4852 = vsub.f32 0.0, %v4840
    %v4853 = vmul.f32 %v4843, 1.442695
    %v4854 = vpow.pop %v4853
    %v4855 = vmul.f32 %v4844, 1.442695
    %v4856 = vpow.pop %v4855
    %v4857 = vmul.f32 %v4845, 1.442695
    %v4858 = vpow.pop %v4857
    %v4859 = vmul.f32 %v4846, 1.442695
    %v4860 = vpow.pop %v4859
    %v4861 = vmul.f32 %v4847, 1.442695
    %v4862 = vpow.pop %v4861
    %v4863 = vmul.f32 %v4848, 1.442695
    %v4864 = vpow.pop %v4863
    %v4865 = vmul.f32 %v4849, 1.442695
    %v4866 = vpow.pop %v4865
    %v4867 = vmul.f32 %v4850, 1.442695
    %v4868 = vpow.pop %v4867
    %v4869 = vmul.f32 %v4851, 1.442695
    %v4870 = vpow.pop %v4869
    %v4871 = vmul.f32 %v4852, 1.442695
    %v4872 = vpow.pop %v4871
    %v4873 = vadd.f32 %v4854, 1.0
    %v4874 = vadd.f32 %v4856, 1.0
    %v4875 = vadd.f32 %v4858, 1.0
    %v4876 = vadd.f32 %v4860, 1.0
    %v4877 = vadd.f32 %v4862, 1.0
    %v4878 = vadd.f32 %v4864, 1.0
    %v4879 = vadd.f32 %v4866, 1.0
    %v4880 = vadd.f32 %v4868, 1.0
    %v4881 = vadd.f32 %v4870, 1.0
    %v4882 = vadd.f32 %v4872, 1.0
    %v4883 = vrcp.pop %v4873
    %v4884 = vrcp.pop %v4874
    %v4885 = vrcp.pop %v4875
    %v4886 = vrcp.pop %v4876
    %v4887 = vrcp.pop %v4877
    %v4888 = vrcp.pop %v4878
    %v4889 = vrcp.pop %v4879
    %v4890 = vrcp.pop %v4880
    %v4891 = vrcp.pop %v4881
    %v4892 = vrcp.pop %v4882
    %v4893 = vpack.c.bf16 %v4884, %v4883
    %v4894 = vpack.c.bf16 %v4886, %v4885
    %v4895 = vpack.c.bf16 %v4888, %v4887
    %v4896 = vpack.c.bf16 %v4890, %v4889
    %v4897 = vpack.c.bf16 %v4892, %v4891
    %4898 = vst [vmem:[#allocation2] sm:$0xff] %v4893
    %4899 = vst [vmem:[#allocation2 + $0x8] sm:$0xff] %v4894
    %4900 = vst [vmem:[#allocation2 + $0x10] sm:$0xff] %v4895
    %4901 = vst [vmem:[#allocation2 + $0x18] sm:$0xff] %v4896
    %vm4902 = vcmask 1043456
    %vm4903 = vcmask 392196
    %vm4904 = vmor %vm4903, %vm4902
    %4905 = vst.msk [vmem:[#allocation2 + $0x20] sm:$0xff] %vm4904, %v4897
    %vm4906 = vcmask 326656
    %4907 = vst.msk [vmem:[#allocation4] sm:$0xff] %vm4906, %v2659
    // Predicated region
    $region42: #{tpu_custom_call.1} parent=1 // pred_check
      _
    $region43: #{tpu_custom_call.1} parent=1 // pred_check_branch
      %4909 = sbr.rel (0) target = $region45
    $region44: #{tpu_custom_call.1} parent=1 // pred_region
      %4911 = vsyncadd [#allocation3], 0
      %s4913 = sshll.u32 [#allocation2], 4
      %s4914 = int_to_ptr.vmem [resolvable:$true] %s4913
      %s4915 = sshll.u32 %s10, 4
      %s4916 = int_to_ptr.hbm [resolvable:$true] %s4915
      %4918 = dma.vmem_to_hbm [thread:$0]  %s4914, 640, %s4916, [#allocation3]
    $region45: #{tpu_custom_call.1} parent=1 // pred_fallthru
      _
    // Predicated region
    $region46: #{tpu_custom_call.1} parent=1 // pred_check
      _
    $region47: #{tpu_custom_call.1} parent=1 // pred_check_branch
      %4920 = sbr.rel (0) target = $region49
    $region48: #{tpu_custom_call.1} parent=1 // pred_region
      %4922 = vsyncadd [#allocation5], 0
      %s4924 = sshll.u32 [#allocation4], 4
      %s4925 = int_to_ptr.vmem [resolvable:$true] %s4924
      %s4926 = sshll.u32 %s11, 4
      %s4927 = int_to_ptr.hbm [resolvable:$true] %s4926
      %4929 = dma.vmem_to_hbm [thread:$0]  %s4925, 128, %s4927, [#allocation5]
    $region49: #{tpu_custom_call.1} parent=1 // pred_fallthru
      _
    // Predicated region
    $region50: #{tpu_custom_call.1} parent=1 // pred_check
      _
    $region51: #{tpu_custom_call.1} parent=1 // pred_check_branch
      %4931 = sbr.rel (0) target = $region53
    $region52: #{tpu_custom_call.1} parent=1 // pred_region
      %4933 = dma.done [#allocation3], 640
    $region53: #{tpu_custom_call.1} parent=1 // pred_fallthru
      _
    // Predicated region
    $region54: #{tpu_custom_call.1} parent=1 // pred_check
      _
    $region55: #{tpu_custom_call.1} parent=1 // pred_check_branch
      %4935 = sbr.rel (0) target = $region57
    $region56: #{tpu_custom_call.1} parent=1 // pred_region
      %4937 = dma.done [#allocation5], 128
    $region57: #{tpu_custom_call.1} parent=1 // pred_fallthru
      _
    %4938 = vsyncpa [#allocation3], 1
    %4939 = vsyncpa [#allocation5], 1

</llo_original>
